<compile_context>
chip_gen: v7x
topology: tpu7x:2x2x1
jax: 0.10.0
libtpu: 0.0.40
codegen_flags: <defaults>
</compile_context>

<pallas_src>
import jax
import jax.numpy as jnp
from jax.experimental import pallas as pl
from jax.experimental.pallas import tpu as pltpu


# ---------------------------------------------------------------------------
# Fused Pallas kernel: 4 x (GEMM + bias + activation), VMEM-resident.
# ---------------------------------------------------------------------------
def _fused_dae_kernel(x_ref, op1_ref, b1_ref, op2_ref, b2_ref,
                      op3_ref, b3_ref, op4_ref, b4_ref, o_ref):
    h = x_ref[...]
    # encoder: Conv2d(1,16,3,s2,p1) + ReLU
    h = jnp.dot(h, op1_ref[...], preferred_element_type=jnp.float32) + b1_ref[...]
    h = jnp.maximum(h, 0.0)
    # encoder: Conv2d(16,32,3,s2,p1) + ReLU
    h = jnp.dot(h, op2_ref[...], preferred_element_type=jnp.float32) + b2_ref[...]
    h = jnp.maximum(h, 0.0)
    # decoder: ConvTranspose2d(32,16,3,s2,p1,op1) + ReLU
    h = jnp.dot(h, op3_ref[...], preferred_element_type=jnp.float32) + b3_ref[...]
    h = jnp.maximum(h, 0.0)
    # decoder: ConvTranspose2d(16,1,3,s2,p1,op1) + Tanh
    h = jnp.dot(h, op4_ref[...], preferred_element_type=jnp.float32) + b4_ref[...]
    o_ref[...] = jnp.tanh(h).astype(o_ref.dtype)


def _round_up(v, m):
    return ((v + m - 1) // m) * m


def fused_forward(x_flat, ops, biases):
    """x_flat: (N, D_in) f32 (HWC-flattened).  ops/biases: 4 matrices / (1,L) rows."""
    n, d_in = x_flat.shape
    d_out = ops[-1].shape[1]
    tile_b = min(128, _round_up(n, 8))          # batch tile, multiple of 8
    b_pad = _round_up(n, tile_b)
    if b_pad != n:
        x_flat = jnp.pad(x_flat, ((0, b_pad - n), (0, 0)))

    const = lambda i: (0, 0)                    # weights/biases: resident block
    in_specs = [pl.BlockSpec((tile_b, d_in), lambda i: (i, 0))]
    args = [x_flat]
    for op, b in zip(ops, biases):
        in_specs.append(pl.BlockSpec(op.shape, const))
        in_specs.append(pl.BlockSpec(b.shape, const))
        args.append(op)
        args.append(b)

    out = pl.pallas_call(
        _fused_dae_kernel,
        out_shape=jax.ShapeDtypeStruct((b_pad, d_out), jnp.float32),
        grid=(b_pad // tile_b,),
        in_specs=in_specs,
        out_specs=pl.BlockSpec((tile_b, d_out), lambda i: (i, 0)),
        compiler_params=pltpu.CompilerParams(
            dimension_semantics=("parallel",),
            vmem_limit_bytes=32 * 1024 * 1024,
        ),
    )(*args)
    return out[:n]


# ---------------------------------------------------------------------------
# Weight folding (done once): conv / conv-transpose -> dense GEMM operator
# acting on HWC-flattened per-sample activations.
# ---------------------------------------------------------------------------
def _conv2d_operator(w, hi, wi, stride, pad):
    """PyTorch Conv2d (no bias) as a dense matrix.  w: (Cout, Cin, k, k).

    Returns op of shape (hi*wi*Cin, ho*wo*Cout) with HWC (channel-fastest)
    flattening on both sides, plus (ho, wo)."""
    cout, cin, k, _ = w.shape
    ho = (hi + 2 * pad - k) // stride + 1
    wo = (wi + 2 * pad - k) // stride + 1
    rh = jnp.arange(ho)[:, None] * stride - pad + jnp.arange(k)[None, :]      # (ho, k)
    rw = jnp.arange(wo)[:, None] * stride - pad + jnp.arange(k)[None, :]      # (wo, k)
    sel_h = (rh[:, :, None] == jnp.arange(hi)[None, None, :]).astype(w.dtype)  # (ho,k,hi)
    sel_w = (rw[:, :, None] == jnp.arange(wi)[None, None, :]).astype(w.dtype)  # (wo,k,wi)
    # op[(a*wi+b)*cin+d, (o*wo+p)*cout+c] = sum_{i,j} sel_h[o,i,a]*sel_w[p,j,b]*w[c,d,i,j]
    op = jnp.einsum("oia,pjb,cdij->abdopc", sel_h, sel_w, w,
                    precision=jax.lax.Precision.HIGHEST)
    return op.reshape(hi * wi * cin, ho * wo * cout), ho, wo


def _conv_transpose2d_operator(w, hi, wi, stride, pad, out_pad):
    """PyTorch ConvTranspose2d (no bias) as a dense matrix.  w: (Cin, Cout, k, k)."""
    cin, cout, k, _ = w.shape
    ho = (hi - 1) * stride - 2 * pad + k + out_pad
    wo = (wi - 1) * stride - 2 * pad + k + out_pad
    # ConvTranspose2d == adjoint of Conv2d with the same weight tensor (viewed
    # as (out=Cin, in=Cout, k, k)) applied on the (ho, wo) grid.
    fwd, hi2, wi2 = _conv2d_operator(w, ho, wo, stride, pad)
    assert (hi2, wi2) == (hi, wi)
    return fwd.T, ho, wo


def prepare_operators(params, h=16, w=16):
    """Fold all conv weights into 4 dense GEMM operators + broadcast biases."""
    op1, h1, w1 = _conv2d_operator(params["enc1_w"], h, w, stride=2, pad=1)
    op2, h2, w2 = _conv2d_operator(params["enc2_w"], h1, w1, stride=2, pad=1)
    op3, h3, w3 = _conv_transpose2d_operator(params["dec1_w"], h2, w2, 2, 1, 1)
    op4, h4, w4 = _conv_transpose2d_operator(params["dec2_w"], h3, w3, 2, 1, 1)
    b1 = jnp.tile(params["enc1_b"], h1 * w1)[None, :]
    b2 = jnp.tile(params["enc2_b"], h2 * w2)[None, :]
    b3 = jnp.tile(params["dec1_b"], h3 * w3)[None, :]
    b4 = jnp.tile(params["dec2_b"], h4 * w4)[None, :]
    return (op1, op2, op3, op4), (b1, b2, b3, b4)


# ---------------------------------------------------------------------------
# Model
# ---------------------------------------------------------------------------
def init_params(key):
    ks = jax.random.split(key, 8)
    s = 0.1
    return {
        # encoder: Conv2d(1, 16, 3, s=2, p=1), Conv2d(16, 32, 3, s=2, p=1)
        "enc1_w": s * jax.random.normal(ks[0], (16, 1, 3, 3), jnp.float32),
        "enc1_b": s * jax.random.normal(ks[1], (16,), jnp.float32),
        "enc2_w": s * jax.random.normal(ks[2], (32, 16, 3, 3), jnp.float32),
        "enc2_b": s * jax.random.normal(ks[3], (32,), jnp.float32),
        # decoder: ConvT(32, 16, 3, s=2, p=1, op=1), ConvT(16, 1, 3, s=2, p=1, op=1)
        "dec1_w": s * jax.random.normal(ks[4], (32, 16, 3, 3), jnp.float32),
        "dec1_b": s * jax.random.normal(ks[5], (16,), jnp.float32),
        "dec2_w": s * jax.random.normal(ks[6], (16, 1, 3, 3), jnp.float32),
        "dec2_b": s * jax.random.normal(ks[7], (1,), jnp.float32),
    }


@jax.jit
def denoising_autoencoder(x, ops, biases):
    """x: (N, 1, H, W) float32 NCHW (like the PyTorch module)."""
    n, c, h, w = x.shape
    x_flat = jnp.transpose(x, (0, 2, 3, 1)).reshape(n, h * w * c)   # HWC flatten
    out_flat = fused_forward(x_flat, ops, biases)
    cout = out_flat.shape[1] // (h * w)     # output spatial == input spatial here
    return out_flat.reshape(n, h, w, cout).transpose(0, 3, 1, 2)


# ---------------------------------------------------------------------------
# Pure-JAX reference (PyTorch semantics) for correctness check.
# ---------------------------------------------------------------------------
def _ref_forward(x, params):
    def conv(x, w, b, s, p):
        y = jax.lax.conv_general_dilated(
            x, w, window_strides=(s, s), padding=((p, p), (p, p)),
            dimension_numbers=("NCHW", "OIHW", "NCHW"),
            precision=jax.lax.Precision.HIGHEST)
        return y + b[None, :, None, None]

    def convt(x, w, b, s, p, op):
        k = w.shape[-1]
        w_eq = jnp.flip(w, (-2, -1)).transpose(1, 0, 2, 3)
        y = jax.lax.conv_general_dilated(
            x, w_eq, window_strides=(1, 1),
            padding=((k - 1 - p, k - 1 - p + op),) * 2,
            lhs_dilation=(s, s),
            dimension_numbers=("NCHW", "OIHW", "NCHW"),
            precision=jax.lax.Precision.HIGHEST)
        return y + b[None, :, None, None]

    h = jnp.maximum(conv(x, params["enc1_w"], params["enc1_b"], 2, 1), 0.0)
    h = jnp.maximum(conv(h, params["enc2_w"], params["enc2_b"], 2, 1), 0.0)
    h = jnp.maximum(convt(h, params["dec1_w"], params["dec1_b"], 2, 1, 1), 0.0)
    return jnp.tanh(convt(h, params["dec2_w"], params["dec2_b"], 2, 1, 1))


if __name__ == "__main__":
    key = jax.random.PRNGKey(0)
    pkey, xkey = jax.random.split(key)
    params = init_params(pkey)
    x = jax.random.normal(xkey, (2, 1, 16, 16), jnp.float32)   # NCHW, like PyTorch

    ops, biases = prepare_operators(params)      # weight folding: done once
    out = denoising_autoencoder(x, ops, biases)
    out = jax.block_until_ready(out)

    assert out.shape == (2, 1, 16, 16), out.shape
    assert out.dtype == jnp.float32
    assert bool(jnp.all(jnp.isfinite(out)))

    ref = _ref_forward(x, params)
    max_err = float(jnp.max(jnp.abs(out - ref)))
    assert bool(jnp.allclose(out, ref, atol=1e-3, rtol=1e-3)), max_err

    print("KERNEL_OK")
</pallas_src>

<mosaic_0001>
module attributes {stable_mosaic.version = 11 : i64} {
  func.func @_fused_dae_kernel(%arg0: i32, %arg1: memref<8x256xf32, #tpu.memory_space<vmem>>, %arg2: memref<256x1024xf32, #tpu.memory_space<vmem>>, %arg3: memref<1x1024xf32, #tpu.memory_space<vmem>>, %arg4: memref<1024x512xf32, #tpu.memory_space<vmem>>, %arg5: memref<1x512xf32, #tpu.memory_space<vmem>>, %arg6: memref<512x1024xf32, #tpu.memory_space<vmem>>, %arg7: memref<1x1024xf32, #tpu.memory_space<vmem>>, %arg8: memref<1024x256xf32, #tpu.memory_space<vmem>>, %arg9: memref<1x256xf32, #tpu.memory_space<vmem>>, %arg10: memref<8x256xf32, #tpu.memory_space<vmem>>) attributes {dimension_semantics = [#tpu.dimension_semantics<parallel>], iteration_bounds = array<i64: 1>, scalar_prefetch = 0 : i64, scratch_operands = 0 : i64, tpu.core_type = #tpu.core_type<tc>, window_params = [{transform_indices = @transform_0, window_bounds = array<i64: 8, 256>}, {pipeline_mode = #tpu.pipeline_mode<synchronous>, transform_indices = @transform_1, window_bounds = array<i64: 256, 1024>}, {pipeline_mode = #tpu.pipeline_mode<synchronous>, transform_indices = @transform_2, window_bounds = array<i64: 1, 1024>}, {pipeline_mode = #tpu.pipeline_mode<synchronous>, transform_indices = @transform_3, window_bounds = array<i64: 1024, 512>}, {pipeline_mode = #tpu.pipeline_mode<synchronous>, transform_indices = @transform_4, window_bounds = array<i64: 1, 512>}, {pipeline_mode = #tpu.pipeline_mode<synchronous>, transform_indices = @transform_5, window_bounds = array<i64: 512, 1024>}, {pipeline_mode = #tpu.pipeline_mode<synchronous>, transform_indices = @transform_6, window_bounds = array<i64: 1, 1024>}, {pipeline_mode = #tpu.pipeline_mode<synchronous>, transform_indices = @transform_7, window_bounds = array<i64: 1024, 256>}, {pipeline_mode = #tpu.pipeline_mode<synchronous>, transform_indices = @transform_8, window_bounds = array<i64: 1, 256>}, {transform_indices = @transform_9, window_bounds = array<i64: 8, 256>}]} {
    %c0 = arith.constant 0 : index
    %c0_0 = arith.constant 0 : index
    %0 = vector.load %arg1[%c0, %c0_0] : memref<8x256xf32, #tpu.memory_space<vmem>>, vector<8x256xf32>
    %c0_1 = arith.constant 0 : index
    %c0_2 = arith.constant 0 : index
    %1 = vector.load %arg2[%c0_1, %c0_2] : memref<256x1024xf32, #tpu.memory_space<vmem>>, vector<256x1024xf32>
    %cst = arith.constant dense<0.000000e+00> : vector<8x1024xf32>
    %2 = tpu.matmul %0, %1, %cst {dimension_numbers = #tpu.dot_dimension_numbers<[1], [0], [0], [1], [0, 0, 1, 1], [], []>} : vector<8x256xf32>, vector<256x1024xf32>, vector<8x1024xf32> -> vector<8x1024xf32>
    %c0_3 = arith.constant 0 : index
    %c0_4 = arith.constant 0 : index
    %3 = vector.load %arg3[%c0_3, %c0_4] : memref<1x1024xf32, #tpu.memory_space<vmem>>, vector<1x1024xf32>
    %4 = vector.broadcast %3 : vector<1x1024xf32> to vector<8x1024xf32>
    %5 = arith.addf %2, %4 : vector<8x1024xf32>
    %cst_5 = arith.constant 0.000000e+00 : f32
    %6 = vector.broadcast %cst_5 : f32 to vector<8x1024xf32>
    %7 = arith.maximumf %5, %6 : vector<8x1024xf32>
    %c0_6 = arith.constant 0 : index
    %c0_7 = arith.constant 0 : index
    %8 = vector.load %arg4[%c0_6, %c0_7] : memref<1024x512xf32, #tpu.memory_space<vmem>>, vector<1024x512xf32>
    %cst_8 = arith.constant dense<0.000000e+00> : vector<8x512xf32>
    %9 = tpu.matmul %7, %8, %cst_8 {dimension_numbers = #tpu.dot_dimension_numbers<[1], [0], [0], [1], [0, 0, 1, 1], [], []>} : vector<8x1024xf32>, vector<1024x512xf32>, vector<8x512xf32> -> vector<8x512xf32>
    %c0_9 = arith.constant 0 : index
    %c0_10 = arith.constant 0 : index
    %10 = vector.load %arg5[%c0_9, %c0_10] : memref<1x512xf32, #tpu.memory_space<vmem>>, vector<1x512xf32>
    %11 = vector.broadcast %10 : vector<1x512xf32> to vector<8x512xf32>
    %12 = arith.addf %9, %11 : vector<8x512xf32>
    %cst_11 = arith.constant 0.000000e+00 : f32
    %13 = vector.broadcast %cst_11 : f32 to vector<8x512xf32>
    %14 = arith.maximumf %12, %13 : vector<8x512xf32>
    %c0_12 = arith.constant 0 : index
    %c0_13 = arith.constant 0 : index
    %15 = vector.load %arg6[%c0_12, %c0_13] : memref<512x1024xf32, #tpu.memory_space<vmem>>, vector<512x1024xf32>
    %cst_14 = arith.constant dense<0.000000e+00> : vector<8x1024xf32>
    %16 = tpu.matmul %14, %15, %cst_14 {dimension_numbers = #tpu.dot_dimension_numbers<[1], [0], [0], [1], [0, 0, 1, 1], [], []>} : vector<8x512xf32>, vector<512x1024xf32>, vector<8x1024xf32> -> vector<8x1024xf32>
    %c0_15 = arith.constant 0 : index
    %c0_16 = arith.constant 0 : index
    %17 = vector.load %arg7[%c0_15, %c0_16] : memref<1x1024xf32, #tpu.memory_space<vmem>>, vector<1x1024xf32>
    %18 = vector.broadcast %17 : vector<1x1024xf32> to vector<8x1024xf32>
    %19 = arith.addf %16, %18 : vector<8x1024xf32>
    %cst_17 = arith.constant 0.000000e+00 : f32
    %20 = vector.broadcast %cst_17 : f32 to vector<8x1024xf32>
    %21 = arith.maximumf %19, %20 : vector<8x1024xf32>
    %c0_18 = arith.constant 0 : index
    %c0_19 = arith.constant 0 : index
    %22 = vector.load %arg8[%c0_18, %c0_19] : memref<1024x256xf32, #tpu.memory_space<vmem>>, vector<1024x256xf32>
    %cst_20 = arith.constant dense<0.000000e+00> : vector<8x256xf32>
    %23 = tpu.matmul %21, %22, %cst_20 {dimension_numbers = #tpu.dot_dimension_numbers<[1], [0], [0], [1], [0, 0, 1, 1], [], []>} : vector<8x1024xf32>, vector<1024x256xf32>, vector<8x256xf32> -> vector<8x256xf32>
    %c0_21 = arith.constant 0 : index
    %c0_22 = arith.constant 0 : index
    %24 = vector.load %arg9[%c0_21, %c0_22] : memref<1x256xf32, #tpu.memory_space<vmem>>, vector<1x256xf32>
    %25 = vector.broadcast %24 : vector<1x256xf32> to vector<8x256xf32>
    %26 = arith.addf %23, %25 : vector<8x256xf32>
    %27 = math.tanh %26 : vector<8x256xf32>
    %c0_23 = arith.constant 0 : index
    %c0_24 = arith.constant 0 : index
    %28 = vector.load %arg10[%c0_23, %c0_24] : memref<8x256xf32, #tpu.memory_space<vmem>>, vector<8x256xf32>
    tpu.vector_store %arg10[%c0_23, %c0_24], %27 {strides = array<i32>} : memref<8x256xf32, #tpu.memory_space<vmem>>, vector<8x256xf32>,
    return
  }
  func.func @transform_0(%arg0: i32) -> (i32, i32) {
    %c0_i32 = arith.constant 0 : i32
    %c0_i32_0 = arith.constant 0 : i32
    return %arg0, %c0_i32 : i32, i32
  }
  func.func @transform_1(%arg0: i32) -> (i32, i32) {
    %c0_i32 = arith.constant 0 : i32
    %c0_i32_0 = arith.constant 0 : i32
    %c0_i32_1 = arith.constant 0 : i32
    return %c0_i32, %c0_i32_0 : i32, i32
  }
  func.func @transform_2(%arg0: i32) -> (i32, i32) {
    %c0_i32 = arith.constant 0 : i32
    %c0_i32_0 = arith.constant 0 : i32
    %c0_i32_1 = arith.constant 0 : i32
    return %c0_i32, %c0_i32_0 : i32, i32
  }
  func.func @transform_3(%arg0: i32) -> (i32, i32) {
    %c0_i32 = arith.constant 0 : i32
    %c0_i32_0 = arith.constant 0 : i32
    %c0_i32_1 = arith.constant 0 : i32
    return %c0_i32, %c0_i32_0 : i32, i32
  }
  func.func @transform_4(%arg0: i32) -> (i32, i32) {
    %c0_i32 = arith.constant 0 : i32
    %c0_i32_0 = arith.constant 0 : i32
    %c0_i32_1 = arith.constant 0 : i32
    return %c0_i32, %c0_i32_0 : i32, i32
  }
  func.func @transform_5(%arg0: i32) -> (i32, i32) {
    %c0_i32 = arith.constant 0 : i32
    %c0_i32_0 = arith.constant 0 : i32
    %c0_i32_1 = arith.constant 0 : i32
    return %c0_i32, %c0_i32_0 : i32, i32
  }
  func.func @transform_6(%arg0: i32) -> (i32, i32) {
    %c0_i32 = arith.constant 0 : i32
    %c0_i32_0 = arith.constant 0 : i32
    %c0_i32_1 = arith.constant 0 : i32
    return %c0_i32, %c0_i32_0 : i32, i32
  }
  func.func @transform_7(%arg0: i32) -> (i32, i32) {
    %c0_i32 = arith.constant 0 : i32
    %c0_i32_0 = arith.constant 0 : i32
    %c0_i32_1 = arith.constant 0 : i32
    return %c0_i32, %c0_i32_0 : i32, i32
  }
  func.func @transform_8(%arg0: i32) -> (i32, i32) {
    %c0_i32 = arith.constant 0 : i32
    %c0_i32_0 = arith.constant 0 : i32
    %c0_i32_1 = arith.constant 0 : i32
    return %c0_i32, %c0_i32_0 : i32, i32
  }
  func.func @transform_9(%arg0: i32) -> (i32, i32) {
    %c0_i32 = arith.constant 0 : i32
    %c0_i32_0 = arith.constant 0 : i32
    return %arg0, %c0_i32 : i32, i32
  }
}

</mosaic_0001>

<llo_original>
// kernel: denoising_autoencoder.1
$region0: #{denoising_autoencoder.1}
  #allocation0 [shape = 'u32[]', space=smem, size = 0x4, offset = 0x4, fixed_abs, tag = 'smem constant byte address 0x4 - core index']
  #allocation1 [shape = 'u32[144,128]{1,0:T(1,128)}', space=vmem, size = 0x12000, scoped, tag = 'internal scratch']
  %s0 = inlined_call_operand.vmem [shape: f32[8,256], index: 0, kind: input, shape index: {}]
  %s1 = inlined_call_operand.hbm [shape: f32[256,1024], index: 1, kind: input, shape index: {}]
  %s2 = inlined_call_operand.hbm [shape: f32[1,1024], index: 2, kind: input, shape index: {}]
  %s3 = inlined_call_operand.hbm [shape: f32[1024,512], index: 3, kind: input, shape index: {}]
  %s4 = inlined_call_operand.hbm [shape: f32[1,512], index: 4, kind: input, shape index: {}]
  %s5 = inlined_call_operand.hbm [shape: f32[512,1024], index: 5, kind: input, shape index: {}]
  %s6 = inlined_call_operand.hbm [shape: f32[1,1024], index: 6, kind: input, shape index: {}]
  %s7 = inlined_call_operand.hbm [shape: f32[1024,256], index: 7, kind: input, shape index: {}]
  %s8 = inlined_call_operand.hbm [shape: f32[1,256], index: 8, kind: input, shape index: {}]
  %s9 = inlined_call_operand.vmem [shape: f32[8,256], index: 9, kind: output, shape index: {}]
  %s10 = sld [smem:[#allocation0]]
  $region78: #{denoising_autoencoder.1} parent=0
    _
  %s12 = ssub.s32 1, %s10
  %s13 = scalar_select 0, %s12, %s10
  $region1: #{denoising_autoencoder.1} parent=0
    #allocation2 [shape = 'u8[1048576]{0}', space=vmem, size = 0x100000, scoped, tag = 'input window, operand 1, single buffered']
    #allocation3 [shape = 's32[1]{0}', space=sflag, size = 0x4, scoped, tag = 'scoped memory for denoising_autoencoder.1']
    #allocation4 [shape = 'u8[4096]{0}', space=vmem, size = 0x1000, scoped, tag = 'input window, operand 2, single buffered']
    #allocation5 [shape = 's32[1]{0}', space=sflag, size = 0x4, scoped, tag = 'scoped memory for denoising_autoencoder.1']
    #allocation6 [shape = 'u8[2097152]{0}', space=vmem, size = 0x200000, scoped, tag = 'input window, operand 3, single buffered']
    #allocation7 [shape = 'u8[2048]{0}', space=vmem, size = 0x800, scoped, tag = 'input window, operand 4, single buffered']
    #allocation8 [shape = 's32[1]{0}', space=sflag, size = 0x4, scoped, tag = 'scoped memory for denoising_autoencoder.1']
    #allocation9 [shape = 'u8[2097152]{0}', space=vmem, size = 0x200000, scoped, tag = 'input window, operand 5, single buffered']
    #allocation10 [shape = 'u8[4096]{0}', space=vmem, size = 0x1000, scoped, tag = 'input window, operand 6, single buffered']
    #allocation11 [shape = 's32[1]{0}', space=sflag, size = 0x4, scoped, tag = 'scoped memory for denoising_autoencoder.1']
    #allocation12 [shape = 'u8[1048576]{0}', space=vmem, size = 0x100000, scoped, tag = 'input window, operand 7, single buffered']
    #allocation13 [shape = 'u8[1024]{0}', space=vmem, size = 0x400, scoped, tag = 'input window, operand 8, single buffered']
    #allocation14 [shape = 's32[1]{0}', space=sflag, size = 0x4, scoped, tag = 'scoped memory for denoising_autoencoder.1']
    %14 = vsyncpa [#allocation3], 0
    %15 = vsyncpa [#allocation5], 0
    %16 = vsyncpa [#allocation8], 0
    %17 = vsyncpa [#allocation11], 0
    %18 = vsyncpa [#allocation14], 0
    // Predicated region
    $region2: #{denoising_autoencoder.1} parent=1 // pred_check
      _
    $region3: #{denoising_autoencoder.1} parent=1 // pred_check_branch
      %20 = sbr.rel (0) target = $region5
    $region4: #{denoising_autoencoder.1} parent=1 // pred_region
      _
    $region5: #{denoising_autoencoder.1} parent=1 // pred_fallthru
      _
    // Predicated region
    $region6: #{denoising_autoencoder.1} parent=1 // pred_check
      _
    $region7: #{denoising_autoencoder.1} parent=1 // pred_check_branch
      %22 = sbr.rel (0) target = $region9
    $region8: #{denoising_autoencoder.1} parent=1 // pred_region
      %s24 = ssub.s32 32768, 32768
      %25 = vsyncadd [#allocation3], %s24
      %s26 = sshll.u32 [#allocation2], 4
      %s27 = int_to_ptr.vmem [resolvable:$true] %s26
      %32 = dma.hbm_to_vmem [thread:$0]  %s1, 32768, %s27, [#allocation3], 1024, 1024, 64
    $region9: #{denoising_autoencoder.1} parent=1 // pred_fallthru
      _
    // Predicated region
    $region10: #{denoising_autoencoder.1} parent=1 // pred_check
      _
    $region11: #{denoising_autoencoder.1} parent=1 // pred_check_branch
      %34 = sbr.rel (0) target = $region13
    $region12: #{denoising_autoencoder.1} parent=1 // pred_region
      %s36 = ssub.s32 128, 128
      %37 = vsyncadd [#allocation5], %s36
      %s39 = sshll.u32 [#allocation4], 4
      %s40 = int_to_ptr.vmem [resolvable:$true] %s39
      %42 = dma.hbm_to_vmem [thread:$0]  %s2, 128, %s40, [#allocation5]
    $region13: #{denoising_autoencoder.1} parent=1 // pred_fallthru
      _
    // Predicated region
    $region14: #{denoising_autoencoder.1} parent=1 // pred_check
      _
    $region15: #{denoising_autoencoder.1} parent=1 // pred_check_branch
      %44 = sbr.rel (0) target = $region17
    $region16: #{denoising_autoencoder.1} parent=1 // pred_region
      %s46 = ssub.s32 65536, 65536
      %47 = vsyncadd [#allocation5], %s46
      %s48 = sshll.u32 [#allocation6], 4
      %s49 = int_to_ptr.vmem [resolvable:$true] %s48
      %54 = dma.hbm_to_vmem [thread:$0]  %s3, 65536, %s49, [#allocation5], 512, 512, 32
    $region17: #{denoising_autoencoder.1} parent=1 // pred_fallthru
      _
    // Predicated region
    $region18: #{denoising_autoencoder.1} parent=1 // pred_check
      _
    $region19: #{denoising_autoencoder.1} parent=1 // pred_check_branch
      %56 = sbr.rel (0) target = $region21
    $region20: #{denoising_autoencoder.1} parent=1 // pred_region
      %s58 = ssub.s32 64, 64
      %59 = vsyncadd [#allocation8], %s58
      %s61 = sshll.u32 [#allocation7], 4
      %s62 = int_to_ptr.vmem [resolvable:$true] %s61
      %64 = dma.hbm_to_vmem [thread:$0]  %s4, 64, %s62, [#allocation8]
    $region21: #{denoising_autoencoder.1} parent=1 // pred_fallthru
      _
    // Predicated region
    $region22: #{denoising_autoencoder.1} parent=1 // pred_check
      _
    $region23: #{denoising_autoencoder.1} parent=1 // pred_check_branch
      %66 = sbr.rel (0) target = $region25
    $region24: #{denoising_autoencoder.1} parent=1 // pred_region
      %s68 = ssub.s32 65536, 65536
      %69 = vsyncadd [#allocation8], %s68
      %s70 = sshll.u32 [#allocation9], 4
      %s71 = int_to_ptr.vmem [resolvable:$true] %s70
      %76 = dma.hbm_to_vmem [thread:$0]  %s5, 65536, %s71, [#allocation8], 1024, 1024, 64
    $region25: #{denoising_autoencoder.1} parent=1 // pred_fallthru
      _
    // Predicated region
    $region26: #{denoising_autoencoder.1} parent=1 // pred_check
      _
    $region27: #{denoising_autoencoder.1} parent=1 // pred_check_branch
      %78 = sbr.rel (0) target = $region29
    $region28: #{denoising_autoencoder.1} parent=1 // pred_region
      %s80 = ssub.s32 128, 128
      %81 = vsyncadd [#allocation11], %s80
      %s83 = sshll.u32 [#allocation10], 4
      %s84 = int_to_ptr.vmem [resolvable:$true] %s83
      %86 = dma.hbm_to_vmem [thread:$0]  %s6, 128, %s84, [#allocation11]
    $region29: #{denoising_autoencoder.1} parent=1 // pred_fallthru
      _
    // Predicated region
    $region30: #{denoising_autoencoder.1} parent=1 // pred_check
      _
    $region31: #{denoising_autoencoder.1} parent=1 // pred_check_branch
      %88 = sbr.rel (0) target = $region33
    $region32: #{denoising_autoencoder.1} parent=1 // pred_region
      %s90 = ssub.s32 32768, 32768
      %91 = vsyncadd [#allocation11], %s90
      %s92 = sshll.u32 [#allocation12], 4
      %s93 = int_to_ptr.vmem [resolvable:$true] %s92
      %98 = dma.hbm_to_vmem [thread:$0]  %s7, 32768, %s93, [#allocation11], 256, 256, 16
    $region33: #{denoising_autoencoder.1} parent=1 // pred_fallthru
      _
    // Predicated region
    $region34: #{denoising_autoencoder.1} parent=1 // pred_check
      _
    $region35: #{denoising_autoencoder.1} parent=1 // pred_check_branch
      %100 = sbr.rel (0) target = $region37
    $region36: #{denoising_autoencoder.1} parent=1 // pred_region
      %s102 = ssub.s32 32, 32
      %103 = vsyncadd [#allocation14], %s102
      %s105 = sshll.u32 [#allocation13], 4
      %s106 = int_to_ptr.vmem [resolvable:$true] %s105
      %108 = dma.hbm_to_vmem [thread:$0]  %s8, 32, %s106, [#allocation14]
    $region37: #{denoising_autoencoder.1} parent=1 // pred_fallthru
      _
    // Predicated region
    $region38: #{denoising_autoencoder.1} parent=1 // pred_check
      _
    $region39: #{denoising_autoencoder.1} parent=1 // pred_check_branch
      %110 = sbr.rel (0) target = $region41
    $region40: #{denoising_autoencoder.1} parent=1 // pred_region
      %111 = dma.done [#allocation3], 32768
    $region41: #{denoising_autoencoder.1} parent=1 // pred_fallthru
      _
    // Predicated region
    $region42: #{denoising_autoencoder.1} parent=1 // pred_check
      _
    $region43: #{denoising_autoencoder.1} parent=1 // pred_check_branch
      %113 = sbr.rel (0) target = $region45
    $region44: #{denoising_autoencoder.1} parent=1 // pred_region
      %114 = dma.done [#allocation5], 128
    $region45: #{denoising_autoencoder.1} parent=1 // pred_fallthru
      _
    // Predicated region
    $region46: #{denoising_autoencoder.1} parent=1 // pred_check
      _
    $region47: #{denoising_autoencoder.1} parent=1 // pred_check_branch
      %116 = sbr.rel (0) target = $region49
    $region48: #{denoising_autoencoder.1} parent=1 // pred_region
      %117 = dma.done [#allocation5], 65536
    $region49: #{denoising_autoencoder.1} parent=1 // pred_fallthru
      _
    // Predicated region
    $region50: #{denoising_autoencoder.1} parent=1 // pred_check
      _
    $region51: #{denoising_autoencoder.1} parent=1 // pred_check_branch
      %119 = sbr.rel (0) target = $region53
    $region52: #{denoising_autoencoder.1} parent=1 // pred_region
      %120 = dma.done [#allocation8], 64
    $region53: #{denoising_autoencoder.1} parent=1 // pred_fallthru
      _
    // Predicated region
    $region54: #{denoising_autoencoder.1} parent=1 // pred_check
      _
    $region55: #{denoising_autoencoder.1} parent=1 // pred_check_branch
      %122 = sbr.rel (0) target = $region57
    $region56: #{denoising_autoencoder.1} parent=1 // pred_region
      %123 = dma.done [#allocation8], 65536
    $region57: #{denoising_autoencoder.1} parent=1 // pred_fallthru
      _
    // Predicated region
    $region58: #{denoising_autoencoder.1} parent=1 // pred_check
      _
    $region59: #{denoising_autoencoder.1} parent=1 // pred_check_branch
      %125 = sbr.rel (0) target = $region61
    $region60: #{denoising_autoencoder.1} parent=1 // pred_region
      %126 = dma.done [#allocation11], 128
    $region61: #{denoising_autoencoder.1} parent=1 // pred_fallthru
      _
    // Predicated region
    $region62: #{denoising_autoencoder.1} parent=1 // pred_check
      _
    $region63: #{denoising_autoencoder.1} parent=1 // pred_check_branch
      %128 = sbr.rel (0) target = $region65
    $region64: #{denoising_autoencoder.1} parent=1 // pred_region
      %129 = dma.done [#allocation11], 32768
    $region65: #{denoising_autoencoder.1} parent=1 // pred_fallthru
      _
    // Predicated region
    $region66: #{denoising_autoencoder.1} parent=1 // pred_check
      _
    $region67: #{denoising_autoencoder.1} parent=1 // pred_check_branch
      %131 = sbr.rel (0) target = $region69
    $region68: #{denoising_autoencoder.1} parent=1 // pred_region
      %132 = dma.done [#allocation14], 32
    $region69: #{denoising_autoencoder.1} parent=1 // pred_fallthru
      _
    %v133 = vld [vmem:[%s0] sm:$0xff]
    %v134 = vld [vmem:[%s0 + $0x8] sm:$0xff]
    %v135 = vld [vmem:[#allocation2] sm:$0xff]
    %v136 = vld [vmem:[#allocation2 + $0x8] sm:$0xff]
    %v137 = vld [vmem:[#allocation2 + $0x10] sm:$0xff]
    %v138 = vld [vmem:[#allocation2 + $0x18] sm:$0xff]
    %v139 = vld [vmem:[#allocation2 + $0x20] sm:$0xff]
    %v140 = vld [vmem:[#allocation2 + $0x28] sm:$0xff]
    %v141 = vld [vmem:[#allocation2 + $0x30] sm:$0xff]
    %v142 = vld [vmem:[#allocation2 + $0x38] sm:$0xff]
    %v143 = vld [vmem:[#allocation2 + $0x40] sm:$0xff]
    %v144 = vld [vmem:[#allocation2 + $0x48] sm:$0xff]
    %v145 = vld [vmem:[#allocation2 + $0x50] sm:$0xff]
    %v146 = vld [vmem:[#allocation2 + $0x58] sm:$0xff]
    %v147 = vld [vmem:[#allocation2 + $0x60] sm:$0xff]
    %v148 = vld [vmem:[#allocation2 + $0x68] sm:$0xff]
    %v149 = vld [vmem:[#allocation2 + $0x70] sm:$0xff]
    %v150 = vld [vmem:[#allocation2 + $0x78] sm:$0xff]
    %v151 = vld [vmem:[#allocation2 + $0x80] sm:$0xff]
    %v152 = vld [vmem:[#allocation2 + $0x88] sm:$0xff]
    %v153 = vld [vmem:[#allocation2 + $0x90] sm:$0xff]
    %v154 = vld [vmem:[#allocation2 + $0x98] sm:$0xff]
    %v155 = vld [vmem:[#allocation2 + $0xa0] sm:$0xff]
    %v156 = vld [vmem:[#allocation2 + $0xa8] sm:$0xff]
    %v157 = vld [vmem:[#allocation2 + $0xb0] sm:$0xff]
    %v158 = vld [vmem:[#allocation2 + $0xb8] sm:$0xff]
    %v159 = vld [vmem:[#allocation2 + $0xc0] sm:$0xff]
    %v160 = vld [vmem:[#allocation2 + $0xc8] sm:$0xff]
    %v161 = vld [vmem:[#allocation2 + $0xd0] sm:$0xff]
    %v162 = vld [vmem:[#allocation2 + $0xd8] sm:$0xff]
    %v163 = vld [vmem:[#allocation2 + $0xe0] sm:$0xff]
    %v164 = vld [vmem:[#allocation2 + $0xe8] sm:$0xff]
    %v165 = vld [vmem:[#allocation2 + $0xf0] sm:$0xff]
    %v166 = vld [vmem:[#allocation2 + $0xf8] sm:$0xff]
    %v167 = vld [vmem:[#allocation2 + $0x100] sm:$0xff]
    %v168 = vld [vmem:[#allocation2 + $0x108] sm:$0xff]
    %v169 = vld [vmem:[#allocation2 + $0x110] sm:$0xff]
    %v170 = vld [vmem:[#allocation2 + $0x118] sm:$0xff]
    %v171 = vld [vmem:[#allocation2 + $0x120] sm:$0xff]
    %v172 = vld [vmem:[#allocation2 + $0x128] sm:$0xff]
    %v173 = vld [vmem:[#allocation2 + $0x130] sm:$0xff]
    %v174 = vld [vmem:[#allocation2 + $0x138] sm:$0xff]
    %v175 = vld [vmem:[#allocation2 + $0x140] sm:$0xff]
    %v176 = vld [vmem:[#allocation2 + $0x148] sm:$0xff]
    %v177 = vld [vmem:[#allocation2 + $0x150] sm:$0xff]
    %v178 = vld [vmem:[#allocation2 + $0x158] sm:$0xff]
    %v179 = vld [vmem:[#allocation2 + $0x160] sm:$0xff]
    %v180 = vld [vmem:[#allocation2 + $0x168] sm:$0xff]
    %v181 = vld [vmem:[#allocation2 + $0x170] sm:$0xff]
    %v182 = vld [vmem:[#allocation2 + $0x178] sm:$0xff]
    %v183 = vld [vmem:[#allocation2 + $0x180] sm:$0xff]
    %v184 = vld [vmem:[#allocation2 + $0x188] sm:$0xff]
    %v185 = vld [vmem:[#allocation2 + $0x190] sm:$0xff]
    %v186 = vld [vmem:[#allocation2 + $0x198] sm:$0xff]
    %v187 = vld [vmem:[#allocation2 + $0x1a0] sm:$0xff]
    %v188 = vld [vmem:[#allocation2 + $0x1a8] sm:$0xff]
    %v189 = vld [vmem:[#allocation2 + $0x1b0] sm:$0xff]
    %v190 = vld [vmem:[#allocation2 + $0x1b8] sm:$0xff]
    %v191 = vld [vmem:[#allocation2 + $0x1c0] sm:$0xff]
    %v192 = vld [vmem:[#allocation2 + $0x1c8] sm:$0xff]
    %v193 = vld [vmem:[#allocation2 + $0x1d0] sm:$0xff]
    %v194 = vld [vmem:[#allocation2 + $0x1d8] sm:$0xff]
    %v195 = vld [vmem:[#allocation2 + $0x1e0] sm:$0xff]
    %v196 = vld [vmem:[#allocation2 + $0x1e8] sm:$0xff]
    %v197 = vld [vmem:[#allocation2 + $0x1f0] sm:$0xff]
    %v198 = vld [vmem:[#allocation2 + $0x1f8] sm:$0xff]
    %v199 = vld [vmem:[#allocation2 + $0x200] sm:$0xff]
    %v200 = vld [vmem:[#allocation2 + $0x208] sm:$0xff]
    %v201 = vld [vmem:[#allocation2 + $0x210] sm:$0xff]
    %v202 = vld [vmem:[#allocation2 + $0x218] sm:$0xff]
    %v203 = vld [vmem:[#allocation2 + $0x220] sm:$0xff]
    %v204 = vld [vmem:[#allocation2 + $0x228] sm:$0xff]
    %v205 = vld [vmem:[#allocation2 + $0x230] sm:$0xff]
    %v206 = vld [vmem:[#allocation2 + $0x238] sm:$0xff]
    %v207 = vld [vmem:[#allocation2 + $0x240] sm:$0xff]
    %v208 = vld [vmem:[#allocation2 + $0x248] sm:$0xff]
    %v209 = vld [vmem:[#allocation2 + $0x250] sm:$0xff]
    %v210 = vld [vmem:[#allocation2 + $0x258] sm:$0xff]
    %v211 = vld [vmem:[#allocation2 + $0x260] sm:$0xff]
    %v212 = vld [vmem:[#allocation2 + $0x268] sm:$0xff]
    %v213 = vld [vmem:[#allocation2 + $0x270] sm:$0xff]
    %v214 = vld [vmem:[#allocation2 + $0x278] sm:$0xff]
    %v215 = vld [vmem:[#allocation2 + $0x280] sm:$0xff]
    %v216 = vld [vmem:[#allocation2 + $0x288] sm:$0xff]
    %v217 = vld [vmem:[#allocation2 + $0x290] sm:$0xff]
    %v218 = vld [vmem:[#allocation2 + $0x298] sm:$0xff]
    %v219 = vld [vmem:[#allocation2 + $0x2a0] sm:$0xff]
    %v220 = vld [vmem:[#allocation2 + $0x2a8] sm:$0xff]
    %v221 = vld [vmem:[#allocation2 + $0x2b0] sm:$0xff]
    %v222 = vld [vmem:[#allocation2 + $0x2b8] sm:$0xff]
    %v223 = vld [vmem:[#allocation2 + $0x2c0] sm:$0xff]
    %v224 = vld [vmem:[#allocation2 + $0x2c8] sm:$0xff]
    %v225 = vld [vmem:[#allocation2 + $0x2d0] sm:$0xff]
    %v226 = vld [vmem:[#allocation2 + $0x2d8] sm:$0xff]
    %v227 = vld [vmem:[#allocation2 + $0x2e0] sm:$0xff]
    %v228 = vld [vmem:[#allocation2 + $0x2e8] sm:$0xff]
    %v229 = vld [vmem:[#allocation2 + $0x2f0] sm:$0xff]
    %v230 = vld [vmem:[#allocation2 + $0x2f8] sm:$0xff]
    %v231 = vld [vmem:[#allocation2 + $0x300] sm:$0xff]
    %v232 = vld [vmem:[#allocation2 + $0x308] sm:$0xff]
    %v233 = vld [vmem:[#allocation2 + $0x310] sm:$0xff]
    %v234 = vld [vmem:[#allocation2 + $0x318] sm:$0xff]
    %v235 = vld [vmem:[#allocation2 + $0x320] sm:$0xff]
    %v236 = vld [vmem:[#allocation2 + $0x328] sm:$0xff]
    %v237 = vld [vmem:[#allocation2 + $0x330] sm:$0xff]
    %v238 = vld [vmem:[#allocation2 + $0x338] sm:$0xff]
    %v239 = vld [vmem:[#allocation2 + $0x340] sm:$0xff]
    %v240 = vld [vmem:[#allocation2 + $0x348] sm:$0xff]
    %v241 = vld [vmem:[#allocation2 + $0x350] sm:$0xff]
    %v242 = vld [vmem:[#allocation2 + $0x358] sm:$0xff]
    %v243 = vld [vmem:[#allocation2 + $0x360] sm:$0xff]
    %v244 = vld [vmem:[#allocation2 + $0x368] sm:$0xff]
    %v245 = vld [vmem:[#allocation2 + $0x370] sm:$0xff]
    %v246 = vld [vmem:[#allocation2 + $0x378] sm:$0xff]
    %v247 = vld [vmem:[#allocation2 + $0x380] sm:$0xff]
    %v248 = vld [vmem:[#allocation2 + $0x388] sm:$0xff]
    %v249 = vld [vmem:[#allocation2 + $0x390] sm:$0xff]
    %v250 = vld [vmem:[#allocation2 + $0x398] sm:$0xff]
    %v251 = vld [vmem:[#allocation2 + $0x3a0] sm:$0xff]
    %v252 = vld [vmem:[#allocation2 + $0x3a8] sm:$0xff]
    %v253 = vld [vmem:[#allocation2 + $0x3b0] sm:$0xff]
    %v254 = vld [vmem:[#allocation2 + $0x3b8] sm:$0xff]
    %v255 = vld [vmem:[#allocation2 + $0x3c0] sm:$0xff]
    %v256 = vld [vmem:[#allocation2 + $0x3c8] sm:$0xff]
    %v257 = vld [vmem:[#allocation2 + $0x3d0] sm:$0xff]
    %v258 = vld [vmem:[#allocation2 + $0x3d8] sm:$0xff]
    %v259 = vld [vmem:[#allocation2 + $0x3e0] sm:$0xff]
    %v260 = vld [vmem:[#allocation2 + $0x3e8] sm:$0xff]
    %v261 = vld [vmem:[#allocation2 + $0x3f0] sm:$0xff]
    %v262 = vld [vmem:[#allocation2 + $0x3f8] sm:$0xff]
    %v263 = vld [vmem:[#allocation2 + $0x400] sm:$0xff]
    %v264 = vld [vmem:[#allocation2 + $0x408] sm:$0xff]
    %v265 = vld [vmem:[#allocation2 + $0x410] sm:$0xff]
    %v266 = vld [vmem:[#allocation2 + $0x418] sm:$0xff]
    %v267 = vld [vmem:[#allocation2 + $0x420] sm:$0xff]
    %v268 = vld [vmem:[#allocation2 + $0x428] sm:$0xff]
    %v269 = vld [vmem:[#allocation2 + $0x430] sm:$0xff]
    %v270 = vld [vmem:[#allocation2 + $0x438] sm:$0xff]
    %v271 = vld [vmem:[#allocation2 + $0x440] sm:$0xff]
    %v272 = vld [vmem:[#allocation2 + $0x448] sm:$0xff]
    %v273 = vld [vmem:[#allocation2 + $0x450] sm:$0xff]
    %v274 = vld [vmem:[#allocation2 + $0x458] sm:$0xff]
    %v275 = vld [vmem:[#allocation2 + $0x460] sm:$0xff]
    %v276 = vld [vmem:[#allocation2 + $0x468] sm:$0xff]
    %v277 = vld [vmem:[#allocation2 + $0x470] sm:$0xff]
    %v278 = vld [vmem:[#allocation2 + $0x478] sm:$0xff]
    %v279 = vld [vmem:[#allocation2 + $0x480] sm:$0xff]
    %v280 = vld [vmem:[#allocation2 + $0x488] sm:$0xff]
    %v281 = vld [vmem:[#allocation2 + $0x490] sm:$0xff]
    %v282 = vld [vmem:[#allocation2 + $0x498] sm:$0xff]
    %v283 = vld [vmem:[#allocation2 + $0x4a0] sm:$0xff]
    %v284 = vld [vmem:[#allocation2 + $0x4a8] sm:$0xff]
    %v285 = vld [vmem:[#allocation2 + $0x4b0] sm:$0xff]
    %v286 = vld [vmem:[#allocation2 + $0x4b8] sm:$0xff]
    %v287 = vld [vmem:[#allocation2 + $0x4c0] sm:$0xff]
    %v288 = vld [vmem:[#allocation2 + $0x4c8] sm:$0xff]
    %v289 = vld [vmem:[#allocation2 + $0x4d0] sm:$0xff]
    %v290 = vld [vmem:[#allocation2 + $0x4d8] sm:$0xff]
    %v291 = vld [vmem:[#allocation2 + $0x4e0] sm:$0xff]
    %v292 = vld [vmem:[#allocation2 + $0x4e8] sm:$0xff]
    %v293 = vld [vmem:[#allocation2 + $0x4f0] sm:$0xff]
    %v294 = vld [vmem:[#allocation2 + $0x4f8] sm:$0xff]
    %v295 = vld [vmem:[#allocation2 + $0x500] sm:$0xff]
    %v296 = vld [vmem:[#allocation2 + $0x508] sm:$0xff]
    %v297 = vld [vmem:[#allocation2 + $0x510] sm:$0xff]
    %v298 = vld [vmem:[#allocation2 + $0x518] sm:$0xff]
    %v299 = vld [vmem:[#allocation2 + $0x520] sm:$0xff]
    %v300 = vld [vmem:[#allocation2 + $0x528] sm:$0xff]
    %v301 = vld [vmem:[#allocation2 + $0x530] sm:$0xff]
    %v302 = vld [vmem:[#allocation2 + $0x538] sm:$0xff]
    %v303 = vld [vmem:[#allocation2 + $0x540] sm:$0xff]
    %v304 = vld [vmem:[#allocation2 + $0x548] sm:$0xff]
    %v305 = vld [vmem:[#allocation2 + $0x550] sm:$0xff]
    %v306 = vld [vmem:[#allocation2 + $0x558] sm:$0xff]
    %v307 = vld [vmem:[#allocation2 + $0x560] sm:$0xff]
    %v308 = vld [vmem:[#allocation2 + $0x568] sm:$0xff]
    %v309 = vld [vmem:[#allocation2 + $0x570] sm:$0xff]
    %v310 = vld [vmem:[#allocation2 + $0x578] sm:$0xff]
    %v311 = vld [vmem:[#allocation2 + $0x580] sm:$0xff]
    %v312 = vld [vmem:[#allocation2 + $0x588] sm:$0xff]
    %v313 = vld [vmem:[#allocation2 + $0x590] sm:$0xff]
    %v314 = vld [vmem:[#allocation2 + $0x598] sm:$0xff]
    %v315 = vld [vmem:[#allocation2 + $0x5a0] sm:$0xff]
    %v316 = vld [vmem:[#allocation2 + $0x5a8] sm:$0xff]
    %v317 = vld [vmem:[#allocation2 + $0x5b0] sm:$0xff]
    %v318 = vld [vmem:[#allocation2 + $0x5b8] sm:$0xff]
    %v319 = vld [vmem:[#allocation2 + $0x5c0] sm:$0xff]
    %v320 = vld [vmem:[#allocation2 + $0x5c8] sm:$0xff]
    %v321 = vld [vmem:[#allocation2 + $0x5d0] sm:$0xff]
    %v322 = vld [vmem:[#allocation2 + $0x5d8] sm:$0xff]
    %v323 = vld [vmem:[#allocation2 + $0x5e0] sm:$0xff]
    %v324 = vld [vmem:[#allocation2 + $0x5e8] sm:$0xff]
    %v325 = vld [vmem:[#allocation2 + $0x5f0] sm:$0xff]
    %v326 = vld [vmem:[#allocation2 + $0x5f8] sm:$0xff]
    %v327 = vld [vmem:[#allocation2 + $0x600] sm:$0xff]
    %v328 = vld [vmem:[#allocation2 + $0x608] sm:$0xff]
    %v329 = vld [vmem:[#allocation2 + $0x610] sm:$0xff]
    %v330 = vld [vmem:[#allocation2 + $0x618] sm:$0xff]
    %v331 = vld [vmem:[#allocation2 + $0x620] sm:$0xff]
    %v332 = vld [vmem:[#allocation2 + $0x628] sm:$0xff]
    %v333 = vld [vmem:[#allocation2 + $0x630] sm:$0xff]
    %v334 = vld [vmem:[#allocation2 + $0x638] sm:$0xff]
    %v335 = vld [vmem:[#allocation2 + $0x640] sm:$0xff]
    %v336 = vld [vmem:[#allocation2 + $0x648] sm:$0xff]
    %v337 = vld [vmem:[#allocation2 + $0x650] sm:$0xff]
    %v338 = vld [vmem:[#allocation2 + $0x658] sm:$0xff]
    %v339 = vld [vmem:[#allocation2 + $0x660] sm:$0xff]
    %v340 = vld [vmem:[#allocation2 + $0x668] sm:$0xff]
    %v341 = vld [vmem:[#allocation2 + $0x670] sm:$0xff]
    %v342 = vld [vmem:[#allocation2 + $0x678] sm:$0xff]
    %v343 = vld [vmem:[#allocation2 + $0x680] sm:$0xff]
    %v344 = vld [vmem:[#allocation2 + $0x688] sm:$0xff]
    %v345 = vld [vmem:[#allocation2 + $0x690] sm:$0xff]
    %v346 = vld [vmem:[#allocation2 + $0x698] sm:$0xff]
    %v347 = vld [vmem:[#allocation2 + $0x6a0] sm:$0xff]
    %v348 = vld [vmem:[#allocation2 + $0x6a8] sm:$0xff]
    %v349 = vld [vmem:[#allocation2 + $0x6b0] sm:$0xff]
    %v350 = vld [vmem:[#allocation2 + $0x6b8] sm:$0xff]
    %v351 = vld [vmem:[#allocation2 + $0x6c0] sm:$0xff]
    %v352 = vld [vmem:[#allocation2 + $0x6c8] sm:$0xff]
    %v353 = vld [vmem:[#allocation2 + $0x6d0] sm:$0xff]
    %v354 = vld [vmem:[#allocation2 + $0x6d8] sm:$0xff]
    %v355 = vld [vmem:[#allocation2 + $0x6e0] sm:$0xff]
    %v356 = vld [vmem:[#allocation2 + $0x6e8] sm:$0xff]
    %v357 = vld [vmem:[#allocation2 + $0x6f0] sm:$0xff]
    %v358 = vld [vmem:[#allocation2 + $0x6f8] sm:$0xff]
    %v359 = vld [vmem:[#allocation2 + $0x700] sm:$0xff]
    %v360 = vld [vmem:[#allocation2 + $0x708] sm:$0xff]
    %v361 = vld [vmem:[#allocation2 + $0x710] sm:$0xff]
    %v362 = vld [vmem:[#allocation2 + $0x718] sm:$0xff]
    %v363 = vld [vmem:[#allocation2 + $0x720] sm:$0xff]
    %v364 = vld [vmem:[#allocation2 + $0x728] sm:$0xff]
    %v365 = vld [vmem:[#allocation2 + $0x730] sm:$0xff]
    %v366 = vld [vmem:[#allocation2 + $0x738] sm:$0xff]
    %v367 = vld [vmem:[#allocation2 + $0x740] sm:$0xff]
    %v368 = vld [vmem:[#allocation2 + $0x748] sm:$0xff]
    %v369 = vld [vmem:[#allocation2 + $0x750] sm:$0xff]
    %v370 = vld [vmem:[#allocation2 + $0x758] sm:$0xff]
    %v371 = vld [vmem:[#allocation2 + $0x760] sm:$0xff]
    %v372 = vld [vmem:[#allocation2 + $0x768] sm:$0xff]
    %v373 = vld [vmem:[#allocation2 + $0x770] sm:$0xff]
    %v374 = vld [vmem:[#allocation2 + $0x778] sm:$0xff]
    %v375 = vld [vmem:[#allocation2 + $0x780] sm:$0xff]
    %v376 = vld [vmem:[#allocation2 + $0x788] sm:$0xff]
    %v377 = vld [vmem:[#allocation2 + $0x790] sm:$0xff]
    %v378 = vld [vmem:[#allocation2 + $0x798] sm:$0xff]
    %v379 = vld [vmem:[#allocation2 + $0x7a0] sm:$0xff]
    %v380 = vld [vmem:[#allocation2 + $0x7a8] sm:$0xff]
    %v381 = vld [vmem:[#allocation2 + $0x7b0] sm:$0xff]
    %v382 = vld [vmem:[#allocation2 + $0x7b8] sm:$0xff]
    %v383 = vld [vmem:[#allocation2 + $0x7c0] sm:$0xff]
    %v384 = vld [vmem:[#allocation2 + $0x7c8] sm:$0xff]
    %v385 = vld [vmem:[#allocation2 + $0x7d0] sm:$0xff]
    %v386 = vld [vmem:[#allocation2 + $0x7d8] sm:$0xff]
    %v387 = vld [vmem:[#allocation2 + $0x7e0] sm:$0xff]
    %v388 = vld [vmem:[#allocation2 + $0x7e8] sm:$0xff]
    %v389 = vld [vmem:[#allocation2 + $0x7f0] sm:$0xff]
    %v390 = vld [vmem:[#allocation2 + $0x7f8] sm:$0xff]
    %v391 = vld [vmem:[#allocation4] sm:$0xff]
    %v393 = vlaneseq
    %v394 = vshrl.u32 %v393, 7
    %v395 = vsub.s32 0, %v394
    %v396 = vrot.slane %v391, %v395
    %v397 = vlaneseq
    %v398 = vshrl.u32 %v397, 7
    %v399 = vsub.s32 1, %v398
    %v400 = vrot.slane %v391, %v399
    %v401 = vlaneseq
    %v402 = vshrl.u32 %v401, 7
    %v403 = vsub.s32 2, %v402
    %v404 = vrot.slane %v391, %v403
    %v405 = vlaneseq
    %v406 = vshrl.u32 %v405, 7
    %v407 = vsub.s32 3, %v406
    %v408 = vrot.slane %v391, %v407
    %v409 = vlaneseq
    %v410 = vshrl.u32 %v409, 7
    %v411 = vsub.s32 4, %v410
    %v412 = vrot.slane %v391, %v411
    %v413 = vlaneseq
    %v414 = vshrl.u32 %v413, 7
    %v415 = vsub.s32 5, %v414
    %v416 = vrot.slane %v391, %v415
    %v417 = vlaneseq
    %v418 = vshrl.u32 %v417, 7
    %v419 = vsub.s32 6, %v418
    %v420 = vrot.slane %v391, %v419
    %v421 = vlaneseq
    %v422 = vshrl.u32 %v421, 7
    %v423 = vsub.s32 7, %v422
    %v424 = vrot.slane %v391, %v423
    %433 = vmatprep.subr.mxu0 %v136
    %434 = vmatpush1.msra.mxu0 %v135
    %435 = vmatprep.subr.mxu0 %v144
    %436 = vmatpush1.msra.mxu0 %v143
    %437 = vmatprep.subr.mxu0 %v152
    %438 = vmatpush1.msra.mxu0 %v151
    %439 = vmatprep.subr.mxu0 %v160
    %440 = vmatpush1.msra.mxu0 %v159
    %441 = vmatprep.subr.mxu0 %v168
    %442 = vmatpush1.msra.mxu0 %v167
    %443 = vmatprep.subr.mxu0 %v176
    %444 = vmatpush1.msra.mxu0 %v175
    %445 = vmatprep.subr.mxu0 %v184
    %446 = vmatpush1.msra.mxu0 %v183
    %447 = vmatprep.subr.mxu0 %v192
    %448 = vmatpush1.msra.mxu0 %v191
    %449 = vmatprep.subr.mxu0 %v200
    %450 = vmatpush1.msra.mxu0 %v199
    %451 = vmatprep.subr.mxu0 %v208
    %452 = vmatpush1.msra.mxu0 %v207
    %453 = vmatprep.subr.mxu0 %v216
    %454 = vmatpush1.msra.mxu0 %v215
    %455 = vmatprep.subr.mxu0 %v224
    %456 = vmatpush1.msra.mxu0 %v223
    %457 = vmatprep.subr.mxu0 %v232
    %458 = vmatpush1.msra.mxu0 %v231
    %459 = vmatprep.subr.mxu0 %v240
    %460 = vmatpush1.msra.mxu0 %v239
    %461 = vmatprep.subr.mxu0 %v248
    %462 = vmatpush1.msra.mxu0 %v247
    %463 = vmatprep.subr.mxu0 %v256
    %464 = vmatpush1.msra.mxu0 %v255
    %465 = vmatprep.subr.mxu0 %v264
    %466 = vmatpush1.msra.mxu0 %v263
    %467 = vmatprep.subr.mxu0 %v272
    %468 = vmatpush1.msra.mxu0 %v271
    %469 = vmatprep.subr.mxu0 %v280
    %470 = vmatpush1.msra.mxu0 %v279
    %471 = vmatprep.subr.mxu0 %v288
    %472 = vmatpush1.msra.mxu0 %v287
    %473 = vmatprep.subr.mxu0 %v296
    %474 = vmatpush1.msra.mxu0 %v295
    %475 = vmatprep.subr.mxu0 %v304
    %476 = vmatpush1.msra.mxu0 %v303
    %477 = vmatprep.subr.mxu0 %v312
    %478 = vmatpush1.msra.mxu0 %v311
    %479 = vmatprep.subr.mxu0 %v320
    %480 = vmatpush1.msra.mxu0 %v319
    %481 = vmatprep.subr.mxu0 %v328
    %482 = vmatpush1.msra.mxu0 %v327
    %483 = vmatprep.subr.mxu0 %v336
    %484 = vmatpush1.msra.mxu0 %v335
    %485 = vmatprep.subr.mxu0 %v344
    %486 = vmatpush1.msra.mxu0 %v343
    %487 = vmatprep.subr.mxu0 %v352
    %488 = vmatpush1.msra.mxu0 %v351
    %489 = vmatprep.subr.mxu0 %v360
    %490 = vmatpush1.msra.mxu0 %v359
    %491 = vmatprep.subr.mxu0 %v368
    %492 = vmatpush1.msra.mxu0 %v367
    %493 = vmatprep.subr.mxu0 %v376
    %494 = vmatpush1.msra.mxu0 %v375
    %495 = vmatprep.subr.mxu0 %v384
    %496 = vmatpush1.msra.mxu0 %v383
    %497 = vmatprep.mubr.f32.mxu0 %v134
    %498 = vmatmul.mubr.f32.gmra.mrb[0].mxu0 %v133
    %v499 = vpop.f32.mrb[0].mxu0
    %v500 = vadd.f32 %v396, %v499
    %v501 = vpop.f32.mrb[0].mxu0
    %v502 = vadd.f32 %v400, %v501
    %503 = vdwg.mxu0
    %504 = vmatprep.subr.mxu0 %v138
    %505 = vmatpush1.msra.mxu0 %v137
    %506 = vmatprep.subr.mxu0 %v146
    %507 = vmatpush1.msra.mxu0 %v145
    %508 = vmatprep.subr.mxu0 %v154
    %509 = vmatpush1.msra.mxu0 %v153
    %510 = vmatprep.subr.mxu0 %v162
    %511 = vmatpush1.msra.mxu0 %v161
    %512 = vmatprep.subr.mxu0 %v170
    %513 = vmatpush1.msra.mxu0 %v169
    %514 = vmatprep.subr.mxu0 %v178
    %515 = vmatpush1.msra.mxu0 %v177
    %516 = vmatprep.subr.mxu0 %v186
    %517 = vmatpush1.msra.mxu0 %v185
    %518 = vmatprep.subr.mxu0 %v194
    %519 = vmatpush1.msra.mxu0 %v193
    %520 = vmatprep.subr.mxu0 %v202
    %521 = vmatpush1.msra.mxu0 %v201
    %522 = vmatprep.subr.mxu0 %v210
    %523 = vmatpush1.msra.mxu0 %v209
    %524 = vmatprep.subr.mxu0 %v218
    %525 = vmatpush1.msra.mxu0 %v217
    %526 = vmatprep.subr.mxu0 %v226
    %527 = vmatpush1.msra.mxu0 %v225
    %528 = vmatprep.subr.mxu0 %v234
    %529 = vmatpush1.msra.mxu0 %v233
    %530 = vmatprep.subr.mxu0 %v242
    %531 = vmatpush1.msra.mxu0 %v241
    %532 = vmatprep.subr.mxu0 %v250
    %533 = vmatpush1.msra.mxu0 %v249
    %534 = vmatprep.subr.mxu0 %v258
    %535 = vmatpush1.msra.mxu0 %v257
    %536 = vmatprep.subr.mxu0 %v266
    %537 = vmatpush1.msra.mxu0 %v265
    %538 = vmatprep.subr.mxu0 %v274
    %539 = vmatpush1.msra.mxu0 %v273
    %540 = vmatprep.subr.mxu0 %v282
    %541 = vmatpush1.msra.mxu0 %v281
    %542 = vmatprep.subr.mxu0 %v290
    %543 = vmatpush1.msra.mxu0 %v289
    %544 = vmatprep.subr.mxu0 %v298
    %545 = vmatpush1.msra.mxu0 %v297
    %546 = vmatprep.subr.mxu0 %v306
    %547 = vmatpush1.msra.mxu0 %v305
    %548 = vmatprep.subr.mxu0 %v314
    %549 = vmatpush1.msra.mxu0 %v313
    %550 = vmatprep.subr.mxu0 %v322
    %551 = vmatpush1.msra.mxu0 %v321
    %552 = vmatprep.subr.mxu0 %v330
    %553 = vmatpush1.msra.mxu0 %v329
    %554 = vmatprep.subr.mxu0 %v338
    %555 = vmatpush1.msra.mxu0 %v337
    %556 = vmatprep.subr.mxu0 %v346
    %557 = vmatpush1.msra.mxu0 %v345
    %558 = vmatprep.subr.mxu0 %v354
    %559 = vmatpush1.msra.mxu0 %v353
    %560 = vmatprep.subr.mxu0 %v362
    %561 = vmatpush1.msra.mxu0 %v361
    %562 = vmatprep.subr.mxu0 %v370
    %563 = vmatpush1.msra.mxu0 %v369
    %564 = vmatprep.subr.mxu0 %v378
    %565 = vmatpush1.msra.mxu0 %v377
    %566 = vmatprep.subr.mxu0 %v386
    %567 = vmatpush1.msra.mxu0 %v385
    %568 = vmatprep.mubr.f32.mxu0 %v134
    %569 = vmatmul.mubr.f32.gmra.mrb[0].mxu0 %v133
    %v570 = vpop.f32.mrb[0].mxu0
    %v571 = vadd.f32 %v404, %v570
    %v572 = vpop.f32.mrb[0].mxu0
    %v573 = vadd.f32 %v408, %v572
    %574 = vdwg.mxu0
    %575 = vmatprep.subr.mxu0 %v140
    %576 = vmatpush1.msra.mxu0 %v139
    %577 = vmatprep.subr.mxu0 %v148
    %578 = vmatpush1.msra.mxu0 %v147
    %579 = vmatprep.subr.mxu0 %v156
    %580 = vmatpush1.msra.mxu0 %v155
    %581 = vmatprep.subr.mxu0 %v164
    %582 = vmatpush1.msra.mxu0 %v163
    %583 = vmatprep.subr.mxu0 %v172
    %584 = vmatpush1.msra.mxu0 %v171
    %585 = vmatprep.subr.mxu0 %v180
    %586 = vmatpush1.msra.mxu0 %v179
    %587 = vmatprep.subr.mxu0 %v188
    %588 = vmatpush1.msra.mxu0 %v187
    %589 = vmatprep.subr.mxu0 %v196
    %590 = vmatpush1.msra.mxu0 %v195
    %591 = vmatprep.subr.mxu0 %v204
    %592 = vmatpush1.msra.mxu0 %v203
    %593 = vmatprep.subr.mxu0 %v212
    %594 = vmatpush1.msra.mxu0 %v211
    %595 = vmatprep.subr.mxu0 %v220
    %596 = vmatpush1.msra.mxu0 %v219
    %597 = vmatprep.subr.mxu0 %v228
    %598 = vmatpush1.msra.mxu0 %v227
    %599 = vmatprep.subr.mxu0 %v236
    %600 = vmatpush1.msra.mxu0 %v235
    %601 = vmatprep.subr.mxu0 %v244
    %602 = vmatpush1.msra.mxu0 %v243
    %603 = vmatprep.subr.mxu0 %v252
    %604 = vmatpush1.msra.mxu0 %v251
    %605 = vmatprep.subr.mxu0 %v260
    %606 = vmatpush1.msra.mxu0 %v259
    %607 = vmatprep.subr.mxu0 %v268
    %608 = vmatpush1.msra.mxu0 %v267
    %609 = vmatprep.subr.mxu0 %v276
    %610 = vmatpush1.msra.mxu0 %v275
    %611 = vmatprep.subr.mxu0 %v284
    %612 = vmatpush1.msra.mxu0 %v283
    %613 = vmatprep.subr.mxu0 %v292
    %614 = vmatpush1.msra.mxu0 %v291
    %615 = vmatprep.subr.mxu0 %v300
    %616 = vmatpush1.msra.mxu0 %v299
    %617 = vmatprep.subr.mxu0 %v308
    %618 = vmatpush1.msra.mxu0 %v307
    %619 = vmatprep.subr.mxu0 %v316
    %620 = vmatpush1.msra.mxu0 %v315
    %621 = vmatprep.subr.mxu0 %v324
    %622 = vmatpush1.msra.mxu0 %v323
    %623 = vmatprep.subr.mxu0 %v332
    %624 = vmatpush1.msra.mxu0 %v331
    %625 = vmatprep.subr.mxu0 %v340
    %626 = vmatpush1.msra.mxu0 %v339
    %627 = vmatprep.subr.mxu0 %v348
    %628 = vmatpush1.msra.mxu0 %v347
    %629 = vmatprep.subr.mxu0 %v356
    %630 = vmatpush1.msra.mxu0 %v355
    %631 = vmatprep.subr.mxu0 %v364
    %632 = vmatpush1.msra.mxu0 %v363
    %633 = vmatprep.subr.mxu0 %v372
    %634 = vmatpush1.msra.mxu0 %v371
    %635 = vmatprep.subr.mxu0 %v380
    %636 = vmatpush1.msra.mxu0 %v379
    %637 = vmatprep.subr.mxu0 %v388
    %638 = vmatpush1.msra.mxu0 %v387
    %639 = vmatprep.mubr.f32.mxu0 %v134
    %640 = vmatmul.mubr.f32.gmra.mrb[0].mxu0 %v133
    %v641 = vpop.f32.mrb[0].mxu0
    %v642 = vadd.f32 %v412, %v641
    %v643 = vpop.f32.mrb[0].mxu0
    %v644 = vadd.f32 %v416, %v643
    %645 = vdwg.mxu0
    %646 = vmatprep.subr.mxu0 %v142
    %647 = vmatpush1.msra.mxu0 %v141
    %648 = vmatprep.subr.mxu0 %v150
    %649 = vmatpush1.msra.mxu0 %v149
    %650 = vmatprep.subr.mxu0 %v158
    %651 = vmatpush1.msra.mxu0 %v157
    %652 = vmatprep.subr.mxu0 %v166
    %653 = vmatpush1.msra.mxu0 %v165
    %654 = vmatprep.subr.mxu0 %v174
    %655 = vmatpush1.msra.mxu0 %v173
    %656 = vmatprep.subr.mxu0 %v182
    %657 = vmatpush1.msra.mxu0 %v181
    %658 = vmatprep.subr.mxu0 %v190
    %659 = vmatpush1.msra.mxu0 %v189
    %660 = vmatprep.subr.mxu0 %v198
    %661 = vmatpush1.msra.mxu0 %v197
    %662 = vmatprep.subr.mxu0 %v206
    %663 = vmatpush1.msra.mxu0 %v205
    %664 = vmatprep.subr.mxu0 %v214
    %665 = vmatpush1.msra.mxu0 %v213
    %666 = vmatprep.subr.mxu0 %v222
    %667 = vmatpush1.msra.mxu0 %v221
    %668 = vmatprep.subr.mxu0 %v230
    %669 = vmatpush1.msra.mxu0 %v229
    %670 = vmatprep.subr.mxu0 %v238
    %671 = vmatpush1.msra.mxu0 %v237
    %672 = vmatprep.subr.mxu0 %v246
    %673 = vmatpush1.msra.mxu0 %v245
    %674 = vmatprep.subr.mxu0 %v254
    %675 = vmatpush1.msra.mxu0 %v253
    %676 = vmatprep.subr.mxu0 %v262
    %677 = vmatpush1.msra.mxu0 %v261
    %678 = vmatprep.subr.mxu0 %v270
    %679 = vmatpush1.msra.mxu0 %v269
    %680 = vmatprep.subr.mxu0 %v278
    %681 = vmatpush1.msra.mxu0 %v277
    %682 = vmatprep.subr.mxu0 %v286
    %683 = vmatpush1.msra.mxu0 %v285
    %684 = vmatprep.subr.mxu0 %v294
    %685 = vmatpush1.msra.mxu0 %v293
    %686 = vmatprep.subr.mxu0 %v302
    %687 = vmatpush1.msra.mxu0 %v301
    %688 = vmatprep.subr.mxu0 %v310
    %689 = vmatpush1.msra.mxu0 %v309
    %690 = vmatprep.subr.mxu0 %v318
    %691 = vmatpush1.msra.mxu0 %v317
    %692 = vmatprep.subr.mxu0 %v326
    %693 = vmatpush1.msra.mxu0 %v325
    %694 = vmatprep.subr.mxu0 %v334
    %695 = vmatpush1.msra.mxu0 %v333
    %696 = vmatprep.subr.mxu0 %v342
    %697 = vmatpush1.msra.mxu0 %v341
    %698 = vmatprep.subr.mxu0 %v350
    %699 = vmatpush1.msra.mxu0 %v349
    %700 = vmatprep.subr.mxu0 %v358
    %701 = vmatpush1.msra.mxu0 %v357
    %702 = vmatprep.subr.mxu0 %v366
    %703 = vmatpush1.msra.mxu0 %v365
    %704 = vmatprep.subr.mxu0 %v374
    %705 = vmatpush1.msra.mxu0 %v373
    %706 = vmatprep.subr.mxu0 %v382
    %707 = vmatpush1.msra.mxu0 %v381
    %708 = vmatprep.subr.mxu0 %v390
    %709 = vmatpush1.msra.mxu0 %v389
    %710 = vmatprep.mubr.f32.mxu0 %v134
    %711 = vmatmul.mubr.f32.gmra.mrb[0].mxu0 %v133
    %v712 = vpop.f32.mrb[0].mxu0
    %v713 = vadd.f32 %v420, %v712
    %v714 = vpop.f32.mrb[0].mxu0
    %v715 = vadd.f32 %v424, %v714
    %716 = vdwg.mxu0
    %v717 = vmax.f32 %v500, 0.0
    %v718 = vmax.f32 %v502, 0.0
    %v719 = vmax.f32 %v571, 0.0
    %v720 = vmax.f32 %v573, 0.0
    %v721 = vmax.f32 %v642, 0.0
    %v722 = vmax.f32 %v644, 0.0
    %v723 = vmax.f32 %v713, 0.0
    %v724 = vmax.f32 %v715, 0.0
    %v725 = vld [vmem:[#allocation6] sm:$0xff]
    %v726 = vld [vmem:[#allocation6 + $0x8] sm:$0xff]
    %v727 = vld [vmem:[#allocation6 + $0x10] sm:$0xff]
    %v728 = vld [vmem:[#allocation6 + $0x18] sm:$0xff]
    %v729 = vld [vmem:[#allocation6 + $0x20] sm:$0xff]
    %v730 = vld [vmem:[#allocation6 + $0x28] sm:$0xff]
    %v731 = vld [vmem:[#allocation6 + $0x30] sm:$0xff]
    %v732 = vld [vmem:[#allocation6 + $0x38] sm:$0xff]
    %v733 = vld [vmem:[#allocation6 + $0x40] sm:$0xff]
    %v734 = vld [vmem:[#allocation6 + $0x48] sm:$0xff]
    %v735 = vld [vmem:[#allocation6 + $0x50] sm:$0xff]
    %v736 = vld [vmem:[#allocation6 + $0x58] sm:$0xff]
    %v737 = vld [vmem:[#allocation6 + $0x60] sm:$0xff]
    %v738 = vld [vmem:[#allocation6 + $0x68] sm:$0xff]
    %v739 = vld [vmem:[#allocation6 + $0x70] sm:$0xff]
    %v740 = vld [vmem:[#allocation6 + $0x78] sm:$0xff]
    %v741 = vld [vmem:[#allocation6 + $0x80] sm:$0xff]
    %v742 = vld [vmem:[#allocation6 + $0x88] sm:$0xff]
    %v743 = vld [vmem:[#allocation6 + $0x90] sm:$0xff]
    %v744 = vld [vmem:[#allocation6 + $0x98] sm:$0xff]
    %v745 = vld [vmem:[#allocation6 + $0xa0] sm:$0xff]
    %v746 = vld [vmem:[#allocation6 + $0xa8] sm:$0xff]
    %v747 = vld [vmem:[#allocation6 + $0xb0] sm:$0xff]
    %v748 = vld [vmem:[#allocation6 + $0xb8] sm:$0xff]
    %v749 = vld [vmem:[#allocation6 + $0xc0] sm:$0xff]
    %v750 = vld [vmem:[#allocation6 + $0xc8] sm:$0xff]
    %v751 = vld [vmem:[#allocation6 + $0xd0] sm:$0xff]
    %v752 = vld [vmem:[#allocation6 + $0xd8] sm:$0xff]
    %v753 = vld [vmem:[#allocation6 + $0xe0] sm:$0xff]
    %v754 = vld [vmem:[#allocation6 + $0xe8] sm:$0xff]
    %v755 = vld [vmem:[#allocation6 + $0xf0] sm:$0xff]
    %v756 = vld [vmem:[#allocation6 + $0xf8] sm:$0xff]
    %v757 = vld [vmem:[#allocation6 + $0x100] sm:$0xff]
    %v758 = vld [vmem:[#allocation6 + $0x108] sm:$0xff]
    %v759 = vld [vmem:[#allocation6 + $0x110] sm:$0xff]
    %v760 = vld [vmem:[#allocation6 + $0x118] sm:$0xff]
    %v761 = vld [vmem:[#allocation6 + $0x120] sm:$0xff]
    %v762 = vld [vmem:[#allocation6 + $0x128] sm:$0xff]
    %v763 = vld [vmem:[#allocation6 + $0x130] sm:$0xff]
    %v764 = vld [vmem:[#allocation6 + $0x138] sm:$0xff]
    %v765 = vld [vmem:[#allocation6 + $0x140] sm:$0xff]
    %v766 = vld [vmem:[#allocation6 + $0x148] sm:$0xff]
    %v767 = vld [vmem:[#allocation6 + $0x150] sm:$0xff]
    %v768 = vld [vmem:[#allocation6 + $0x158] sm:$0xff]
    %v769 = vld [vmem:[#allocation6 + $0x160] sm:$0xff]
    %v770 = vld [vmem:[#allocation6 + $0x168] sm:$0xff]
    %v771 = vld [vmem:[#allocation6 + $0x170] sm:$0xff]
    %v772 = vld [vmem:[#allocation6 + $0x178] sm:$0xff]
    %v773 = vld [vmem:[#allocation6 + $0x180] sm:$0xff]
    %v774 = vld [vmem:[#allocation6 + $0x188] sm:$0xff]
    %v775 = vld [vmem:[#allocation6 + $0x190] sm:$0xff]
    %v776 = vld [vmem:[#allocation6 + $0x198] sm:$0xff]
    %v777 = vld [vmem:[#allocation6 + $0x1a0] sm:$0xff]
    %v778 = vld [vmem:[#allocation6 + $0x1a8] sm:$0xff]
    %v779 = vld [vmem:[#allocation6 + $0x1b0] sm:$0xff]
    %v780 = vld [vmem:[#allocation6 + $0x1b8] sm:$0xff]
    %v781 = vld [vmem:[#allocation6 + $0x1c0] sm:$0xff]
    %v782 = vld [vmem:[#allocation6 + $0x1c8] sm:$0xff]
    %v783 = vld [vmem:[#allocation6 + $0x1d0] sm:$0xff]
    %v784 = vld [vmem:[#allocation6 + $0x1d8] sm:$0xff]
    %v785 = vld [vmem:[#allocation6 + $0x1e0] sm:$0xff]
    %v786 = vld [vmem:[#allocation6 + $0x1e8] sm:$0xff]
    %v787 = vld [vmem:[#allocation6 + $0x1f0] sm:$0xff]
    %v788 = vld [vmem:[#allocation6 + $0x1f8] sm:$0xff]
    %v789 = vld [vmem:[#allocation6 + $0x200] sm:$0xff]
    %v790 = vld [vmem:[#allocation6 + $0x208] sm:$0xff]
    %v791 = vld [vmem:[#allocation6 + $0x210] sm:$0xff]
    %v792 = vld [vmem:[#allocation6 + $0x218] sm:$0xff]
    %v793 = vld [vmem:[#allocation6 + $0x220] sm:$0xff]
    %v794 = vld [vmem:[#allocation6 + $0x228] sm:$0xff]
    %v795 = vld [vmem:[#allocation6 + $0x230] sm:$0xff]
    %v796 = vld [vmem:[#allocation6 + $0x238] sm:$0xff]
    %v797 = vld [vmem:[#allocation6 + $0x240] sm:$0xff]
    %v798 = vld [vmem:[#allocation6 + $0x248] sm:$0xff]
    %v799 = vld [vmem:[#allocation6 + $0x250] sm:$0xff]
    %v800 = vld [vmem:[#allocation6 + $0x258] sm:$0xff]
    %v801 = vld [vmem:[#allocation6 + $0x260] sm:$0xff]
    %v802 = vld [vmem:[#allocation6 + $0x268] sm:$0xff]
    %v803 = vld [vmem:[#allocation6 + $0x270] sm:$0xff]
    %v804 = vld [vmem:[#allocation6 + $0x278] sm:$0xff]
    %v805 = vld [vmem:[#allocation6 + $0x280] sm:$0xff]
    %v806 = vld [vmem:[#allocation6 + $0x288] sm:$0xff]
    %v807 = vld [vmem:[#allocation6 + $0x290] sm:$0xff]
    %v808 = vld [vmem:[#allocation6 + $0x298] sm:$0xff]
    %v809 = vld [vmem:[#allocation6 + $0x2a0] sm:$0xff]
    %v810 = vld [vmem:[#allocation6 + $0x2a8] sm:$0xff]
    %v811 = vld [vmem:[#allocation6 + $0x2b0] sm:$0xff]
    %v812 = vld [vmem:[#allocation6 + $0x2b8] sm:$0xff]
    %v813 = vld [vmem:[#allocation6 + $0x2c0] sm:$0xff]
    %v814 = vld [vmem:[#allocation6 + $0x2c8] sm:$0xff]
    %v815 = vld [vmem:[#allocation6 + $0x2d0] sm:$0xff]
    %v816 = vld [vmem:[#allocation6 + $0x2d8] sm:$0xff]
    %v817 = vld [vmem:[#allocation6 + $0x2e0] sm:$0xff]
    %v818 = vld [vmem:[#allocation6 + $0x2e8] sm:$0xff]
    %v819 = vld [vmem:[#allocation6 + $0x2f0] sm:$0xff]
    %v820 = vld [vmem:[#allocation6 + $0x2f8] sm:$0xff]
    %v821 = vld [vmem:[#allocation6 + $0x300] sm:$0xff]
    %v822 = vld [vmem:[#allocation6 + $0x308] sm:$0xff]
    %v823 = vld [vmem:[#allocation6 + $0x310] sm:$0xff]
    %v824 = vld [vmem:[#allocation6 + $0x318] sm:$0xff]
    %v825 = vld [vmem:[#allocation6 + $0x320] sm:$0xff]
    %v826 = vld [vmem:[#allocation6 + $0x328] sm:$0xff]
    %v827 = vld [vmem:[#allocation6 + $0x330] sm:$0xff]
    %v828 = vld [vmem:[#allocation6 + $0x338] sm:$0xff]
    %v829 = vld [vmem:[#allocation6 + $0x340] sm:$0xff]
    %v830 = vld [vmem:[#allocation6 + $0x348] sm:$0xff]
    %v831 = vld [vmem:[#allocation6 + $0x350] sm:$0xff]
    %v832 = vld [vmem:[#allocation6 + $0x358] sm:$0xff]
    %v833 = vld [vmem:[#allocation6 + $0x360] sm:$0xff]
    %v834 = vld [vmem:[#allocation6 + $0x368] sm:$0xff]
    %v835 = vld [vmem:[#allocation6 + $0x370] sm:$0xff]
    %v836 = vld [vmem:[#allocation6 + $0x378] sm:$0xff]
    %v837 = vld [vmem:[#allocation6 + $0x380] sm:$0xff]
    %v838 = vld [vmem:[#allocation6 + $0x388] sm:$0xff]
    %v839 = vld [vmem:[#allocation6 + $0x390] sm:$0xff]
    %v840 = vld [vmem:[#allocation6 + $0x398] sm:$0xff]
    %v841 = vld [vmem:[#allocation6 + $0x3a0] sm:$0xff]
    %v842 = vld [vmem:[#allocation6 + $0x3a8] sm:$0xff]
    %v843 = vld [vmem:[#allocation6 + $0x3b0] sm:$0xff]
    %v844 = vld [vmem:[#allocation6 + $0x3b8] sm:$0xff]
    %v845 = vld [vmem:[#allocation6 + $0x3c0] sm:$0xff]
    %v846 = vld [vmem:[#allocation6 + $0x3c8] sm:$0xff]
    %v847 = vld [vmem:[#allocation6 + $0x3d0] sm:$0xff]
    %v848 = vld [vmem:[#allocation6 + $0x3d8] sm:$0xff]
    %v849 = vld [vmem:[#allocation6 + $0x3e0] sm:$0xff]
    %v850 = vld [vmem:[#allocation6 + $0x3e8] sm:$0xff]
    %v851 = vld [vmem:[#allocation6 + $0x3f0] sm:$0xff]
    %v852 = vld [vmem:[#allocation6 + $0x3f8] sm:$0xff]
    %v853 = vld [vmem:[#allocation6 + $0x400] sm:$0xff]
    %v854 = vld [vmem:[#allocation6 + $0x408] sm:$0xff]
    %v855 = vld [vmem:[#allocation6 + $0x410] sm:$0xff]
    %v856 = vld [vmem:[#allocation6 + $0x418] sm:$0xff]
    %v857 = vld [vmem:[#allocation6 + $0x420] sm:$0xff]
    %v858 = vld [vmem:[#allocation6 + $0x428] sm:$0xff]
    %v859 = vld [vmem:[#allocation6 + $0x430] sm:$0xff]
    %v860 = vld [vmem:[#allocation6 + $0x438] sm:$0xff]
    %v861 = vld [vmem:[#allocation6 + $0x440] sm:$0xff]
    %v862 = vld [vmem:[#allocation6 + $0x448] sm:$0xff]
    %v863 = vld [vmem:[#allocation6 + $0x450] sm:$0xff]
    %v864 = vld [vmem:[#allocation6 + $0x458] sm:$0xff]
    %v865 = vld [vmem:[#allocation6 + $0x460] sm:$0xff]
    %v866 = vld [vmem:[#allocation6 + $0x468] sm:$0xff]
    %v867 = vld [vmem:[#allocation6 + $0x470] sm:$0xff]
    %v868 = vld [vmem:[#allocation6 + $0x478] sm:$0xff]
    %v869 = vld [vmem:[#allocation6 + $0x480] sm:$0xff]
    %v870 = vld [vmem:[#allocation6 + $0x488] sm:$0xff]
    %v871 = vld [vmem:[#allocation6 + $0x490] sm:$0xff]
    %v872 = vld [vmem:[#allocation6 + $0x498] sm:$0xff]
    %v873 = vld [vmem:[#allocation6 + $0x4a0] sm:$0xff]
    %v874 = vld [vmem:[#allocation6 + $0x4a8] sm:$0xff]
    %v875 = vld [vmem:[#allocation6 + $0x4b0] sm:$0xff]
    %v876 = vld [vmem:[#allocation6 + $0x4b8] sm:$0xff]
    %v877 = vld [vmem:[#allocation6 + $0x4c0] sm:$0xff]
    %v878 = vld [vmem:[#allocation6 + $0x4c8] sm:$0xff]
    %v879 = vld [vmem:[#allocation6 + $0x4d0] sm:$0xff]
    %v880 = vld [vmem:[#allocation6 + $0x4d8] sm:$0xff]
    %v881 = vld [vmem:[#allocation6 + $0x4e0] sm:$0xff]
    %v882 = vld [vmem:[#allocation6 + $0x4e8] sm:$0xff]
    %v883 = vld [vmem:[#allocation6 + $0x4f0] sm:$0xff]
    %v884 = vld [vmem:[#allocation6 + $0x4f8] sm:$0xff]
    %v885 = vld [vmem:[#allocation6 + $0x500] sm:$0xff]
    %v886 = vld [vmem:[#allocation6 + $0x508] sm:$0xff]
    %v887 = vld [vmem:[#allocation6 + $0x510] sm:$0xff]
    %v888 = vld [vmem:[#allocation6 + $0x518] sm:$0xff]
    %v889 = vld [vmem:[#allocation6 + $0x520] sm:$0xff]
    %v890 = vld [vmem:[#allocation6 + $0x528] sm:$0xff]
    %v891 = vld [vmem:[#allocation6 + $0x530] sm:$0xff]
    %v892 = vld [vmem:[#allocation6 + $0x538] sm:$0xff]
    %v893 = vld [vmem:[#allocation6 + $0x540] sm:$0xff]
    %v894 = vld [vmem:[#allocation6 + $0x548] sm:$0xff]
    %v895 = vld [vmem:[#allocation6 + $0x550] sm:$0xff]
    %v896 = vld [vmem:[#allocation6 + $0x558] sm:$0xff]
    %v897 = vld [vmem:[#allocation6 + $0x560] sm:$0xff]
    %v898 = vld [vmem:[#allocation6 + $0x568] sm:$0xff]
    %v899 = vld [vmem:[#allocation6 + $0x570] sm:$0xff]
    %v900 = vld [vmem:[#allocation6 + $0x578] sm:$0xff]
    %v901 = vld [vmem:[#allocation6 + $0x580] sm:$0xff]
    %v902 = vld [vmem:[#allocation6 + $0x588] sm:$0xff]
    %v903 = vld [vmem:[#allocation6 + $0x590] sm:$0xff]
    %v904 = vld [vmem:[#allocation6 + $0x598] sm:$0xff]
    %v905 = vld [vmem:[#allocation6 + $0x5a0] sm:$0xff]
    %v906 = vld [vmem:[#allocation6 + $0x5a8] sm:$0xff]
    %v907 = vld [vmem:[#allocation6 + $0x5b0] sm:$0xff]
    %v908 = vld [vmem:[#allocation6 + $0x5b8] sm:$0xff]
    %v909 = vld [vmem:[#allocation6 + $0x5c0] sm:$0xff]
    %v910 = vld [vmem:[#allocation6 + $0x5c8] sm:$0xff]
    %v911 = vld [vmem:[#allocation6 + $0x5d0] sm:$0xff]
    %v912 = vld [vmem:[#allocation6 + $0x5d8] sm:$0xff]
    %v913 = vld [vmem:[#allocation6 + $0x5e0] sm:$0xff]
    %v914 = vld [vmem:[#allocation6 + $0x5e8] sm:$0xff]
    %v915 = vld [vmem:[#allocation6 + $0x5f0] sm:$0xff]
    %v916 = vld [vmem:[#allocation6 + $0x5f8] sm:$0xff]
    %v917 = vld [vmem:[#allocation6 + $0x600] sm:$0xff]
    %v918 = vld [vmem:[#allocation6 + $0x608] sm:$0xff]
    %v919 = vld [vmem:[#allocation6 + $0x610] sm:$0xff]
    %v920 = vld [vmem:[#allocation6 + $0x618] sm:$0xff]
    %v921 = vld [vmem:[#allocation6 + $0x620] sm:$0xff]
    %v922 = vld [vmem:[#allocation6 + $0x628] sm:$0xff]
    %v923 = vld [vmem:[#allocation6 + $0x630] sm:$0xff]
    %v924 = vld [vmem:[#allocation6 + $0x638] sm:$0xff]
    %v925 = vld [vmem:[#allocation6 + $0x640] sm:$0xff]
    %v926 = vld [vmem:[#allocation6 + $0x648] sm:$0xff]
    %v927 = vld [vmem:[#allocation6 + $0x650] sm:$0xff]
    %v928 = vld [vmem:[#allocation6 + $0x658] sm:$0xff]
    %v929 = vld [vmem:[#allocation6 + $0x660] sm:$0xff]
    %v930 = vld [vmem:[#allocation6 + $0x668] sm:$0xff]
    %v931 = vld [vmem:[#allocation6 + $0x670] sm:$0xff]
    %v932 = vld [vmem:[#allocation6 + $0x678] sm:$0xff]
    %v933 = vld [vmem:[#allocation6 + $0x680] sm:$0xff]
    %v934 = vld [vmem:[#allocation6 + $0x688] sm:$0xff]
    %v935 = vld [vmem:[#allocation6 + $0x690] sm:$0xff]
    %v936 = vld [vmem:[#allocation6 + $0x698] sm:$0xff]
    %v937 = vld [vmem:[#allocation6 + $0x6a0] sm:$0xff]
    %v938 = vld [vmem:[#allocation6 + $0x6a8] sm:$0xff]
    %v939 = vld [vmem:[#allocation6 + $0x6b0] sm:$0xff]
    %v940 = vld [vmem:[#allocation6 + $0x6b8] sm:$0xff]
    %v941 = vld [vmem:[#allocation6 + $0x6c0] sm:$0xff]
    %v942 = vld [vmem:[#allocation6 + $0x6c8] sm:$0xff]
    %v943 = vld [vmem:[#allocation6 + $0x6d0] sm:$0xff]
    %v944 = vld [vmem:[#allocation6 + $0x6d8] sm:$0xff]
    %v945 = vld [vmem:[#allocation6 + $0x6e0] sm:$0xff]
    %v946 = vld [vmem:[#allocation6 + $0x6e8] sm:$0xff]
    %v947 = vld [vmem:[#allocation6 + $0x6f0] sm:$0xff]
    %v948 = vld [vmem:[#allocation6 + $0x6f8] sm:$0xff]
    %v949 = vld [vmem:[#allocation6 + $0x700] sm:$0xff]
    %v950 = vld [vmem:[#allocation6 + $0x708] sm:$0xff]
    %v951 = vld [vmem:[#allocation6 + $0x710] sm:$0xff]
    %v952 = vld [vmem:[#allocation6 + $0x718] sm:$0xff]
    %v953 = vld [vmem:[#allocation6 + $0x720] sm:$0xff]
    %v954 = vld [vmem:[#allocation6 + $0x728] sm:$0xff]
    %v955 = vld [vmem:[#allocation6 + $0x730] sm:$0xff]
    %v956 = vld [vmem:[#allocation6 + $0x738] sm:$0xff]
    %v957 = vld [vmem:[#allocation6 + $0x740] sm:$0xff]
    %v958 = vld [vmem:[#allocation6 + $0x748] sm:$0xff]
    %v959 = vld [vmem:[#allocation6 + $0x750] sm:$0xff]
    %v960 = vld [vmem:[#allocation6 + $0x758] sm:$0xff]
    %v961 = vld [vmem:[#allocation6 + $0x760] sm:$0xff]
    %v962 = vld [vmem:[#allocation6 + $0x768] sm:$0xff]
    %v963 = vld [vmem:[#allocation6 + $0x770] sm:$0xff]
    %v964 = vld [vmem:[#allocation6 + $0x778] sm:$0xff]
    %v965 = vld [vmem:[#allocation6 + $0x780] sm:$0xff]
    %v966 = vld [vmem:[#allocation6 + $0x788] sm:$0xff]
    %v967 = vld [vmem:[#allocation6 + $0x790] sm:$0xff]
    %v968 = vld [vmem:[#allocation6 + $0x798] sm:$0xff]
    %v969 = vld [vmem:[#allocation6 + $0x7a0] sm:$0xff]
    %v970 = vld [vmem:[#allocation6 + $0x7a8] sm:$0xff]
    %v971 = vld [vmem:[#allocation6 + $0x7b0] sm:$0xff]
    %v972 = vld [vmem:[#allocation6 + $0x7b8] sm:$0xff]
    %v973 = vld [vmem:[#allocation6 + $0x7c0] sm:$0xff]
    %v974 = vld [vmem:[#allocation6 + $0x7c8] sm:$0xff]
    %v975 = vld [vmem:[#allocation6 + $0x7d0] sm:$0xff]
    %v976 = vld [vmem:[#allocation6 + $0x7d8] sm:$0xff]
    %v977 = vld [vmem:[#allocation6 + $0x7e0] sm:$0xff]
    %v978 = vld [vmem:[#allocation6 + $0x7e8] sm:$0xff]
    %v979 = vld [vmem:[#allocation6 + $0x7f0] sm:$0xff]
    %v980 = vld [vmem:[#allocation6 + $0x7f8] sm:$0xff]
    %v981 = vld [vmem:[#allocation6 + $0x800] sm:$0xff]
    %v982 = vld [vmem:[#allocation6 + $0x808] sm:$0xff]
    %v983 = vld [vmem:[#allocation6 + $0x810] sm:$0xff]
    %v984 = vld [vmem:[#allocation6 + $0x818] sm:$0xff]
    %v985 = vld [vmem:[#allocation6 + $0x820] sm:$0xff]
    %v986 = vld [vmem:[#allocation6 + $0x828] sm:$0xff]
    %v987 = vld [vmem:[#allocation6 + $0x830] sm:$0xff]
    %v988 = vld [vmem:[#allocation6 + $0x838] sm:$0xff]
    %v989 = vld [vmem:[#allocation6 + $0x840] sm:$0xff]
    %v990 = vld [vmem:[#allocation6 + $0x848] sm:$0xff]
    %v991 = vld [vmem:[#allocation6 + $0x850] sm:$0xff]
    %v992 = vld [vmem:[#allocation6 + $0x858] sm:$0xff]
    %v993 = vld [vmem:[#allocation6 + $0x860] sm:$0xff]
    %v994 = vld [vmem:[#allocation6 + $0x868] sm:$0xff]
    %v995 = vld [vmem:[#allocation6 + $0x870] sm:$0xff]
    %v996 = vld [vmem:[#allocation6 + $0x878] sm:$0xff]
    %v997 = vld [vmem:[#allocation6 + $0x880] sm:$0xff]
    %v998 = vld [vmem:[#allocation6 + $0x888] sm:$0xff]
    %v999 = vld [vmem:[#allocation6 + $0x890] sm:$0xff]
    %v1000 = vld [vmem:[#allocation6 + $0x898] sm:$0xff]
    %v1001 = vld [vmem:[#allocation6 + $0x8a0] sm:$0xff]
    %v1002 = vld [vmem:[#allocation6 + $0x8a8] sm:$0xff]
    %v1003 = vld [vmem:[#allocation6 + $0x8b0] sm:$0xff]
    %v1004 = vld [vmem:[#allocation6 + $0x8b8] sm:$0xff]
    %v1005 = vld [vmem:[#allocation6 + $0x8c0] sm:$0xff]
    %v1006 = vld [vmem:[#allocation6 + $0x8c8] sm:$0xff]
    %v1007 = vld [vmem:[#allocation6 + $0x8d0] sm:$0xff]
    %v1008 = vld [vmem:[#allocation6 + $0x8d8] sm:$0xff]
    %v1009 = vld [vmem:[#allocation6 + $0x8e0] sm:$0xff]
    %v1010 = vld [vmem:[#allocation6 + $0x8e8] sm:$0xff]
    %v1011 = vld [vmem:[#allocation6 + $0x8f0] sm:$0xff]
    %v1012 = vld [vmem:[#allocation6 + $0x8f8] sm:$0xff]
    %v1013 = vld [vmem:[#allocation6 + $0x900] sm:$0xff]
    %v1014 = vld [vmem:[#allocation6 + $0x908] sm:$0xff]
    %v1015 = vld [vmem:[#allocation6 + $0x910] sm:$0xff]
    %v1016 = vld [vmem:[#allocation6 + $0x918] sm:$0xff]
    %v1017 = vld [vmem:[#allocation6 + $0x920] sm:$0xff]
    %v1018 = vld [vmem:[#allocation6 + $0x928] sm:$0xff]
    %v1019 = vld [vmem:[#allocation6 + $0x930] sm:$0xff]
    %v1020 = vld [vmem:[#allocation6 + $0x938] sm:$0xff]
    %v1021 = vld [vmem:[#allocation6 + $0x940] sm:$0xff]
    %v1022 = vld [vmem:[#allocation6 + $0x948] sm:$0xff]
    %v1023 = vld [vmem:[#allocation6 + $0x950] sm:$0xff]
    %v1024 = vld [vmem:[#allocation6 + $0x958] sm:$0xff]
    %v1025 = vld [vmem:[#allocation6 + $0x960] sm:$0xff]
    %v1026 = vld [vmem:[#allocation6 + $0x968] sm:$0xff]
    %v1027 = vld [vmem:[#allocation6 + $0x970] sm:$0xff]
    %v1028 = vld [vmem:[#allocation6 + $0x978] sm:$0xff]
    %v1029 = vld [vmem:[#allocation6 + $0x980] sm:$0xff]
    %v1030 = vld [vmem:[#allocation6 + $0x988] sm:$0xff]
    %v1031 = vld [vmem:[#allocation6 + $0x990] sm:$0xff]
    %v1032 = vld [vmem:[#allocation6 + $0x998] sm:$0xff]
    %v1033 = vld [vmem:[#allocation6 + $0x9a0] sm:$0xff]
    %v1034 = vld [vmem:[#allocation6 + $0x9a8] sm:$0xff]
    %v1035 = vld [vmem:[#allocation6 + $0x9b0] sm:$0xff]
    %v1036 = vld [vmem:[#allocation6 + $0x9b8] sm:$0xff]
    %v1037 = vld [vmem:[#allocation6 + $0x9c0] sm:$0xff]
    %v1038 = vld [vmem:[#allocation6 + $0x9c8] sm:$0xff]
    %v1039 = vld [vmem:[#allocation6 + $0x9d0] sm:$0xff]
    %v1040 = vld [vmem:[#allocation6 + $0x9d8] sm:$0xff]
    %v1041 = vld [vmem:[#allocation6 + $0x9e0] sm:$0xff]
    %v1042 = vld [vmem:[#allocation6 + $0x9e8] sm:$0xff]
    %v1043 = vld [vmem:[#allocation6 + $0x9f0] sm:$0xff]
    %v1044 = vld [vmem:[#allocation6 + $0x9f8] sm:$0xff]
    %v1045 = vld [vmem:[#allocation6 + $0xa00] sm:$0xff]
    %v1046 = vld [vmem:[#allocation6 + $0xa08] sm:$0xff]
    %v1047 = vld [vmem:[#allocation6 + $0xa10] sm:$0xff]
    %v1048 = vld [vmem:[#allocation6 + $0xa18] sm:$0xff]
    %v1049 = vld [vmem:[#allocation6 + $0xa20] sm:$0xff]
    %v1050 = vld [vmem:[#allocation6 + $0xa28] sm:$0xff]
    %v1051 = vld [vmem:[#allocation6 + $0xa30] sm:$0xff]
    %v1052 = vld [vmem:[#allocation6 + $0xa38] sm:$0xff]
    %v1053 = vld [vmem:[#allocation6 + $0xa40] sm:$0xff]
    %v1054 = vld [vmem:[#allocation6 + $0xa48] sm:$0xff]
    %v1055 = vld [vmem:[#allocation6 + $0xa50] sm:$0xff]
    %v1056 = vld [vmem:[#allocation6 + $0xa58] sm:$0xff]
    %v1057 = vld [vmem:[#allocation6 + $0xa60] sm:$0xff]
    %v1058 = vld [vmem:[#allocation6 + $0xa68] sm:$0xff]
    %v1059 = vld [vmem:[#allocation6 + $0xa70] sm:$0xff]
    %v1060 = vld [vmem:[#allocation6 + $0xa78] sm:$0xff]
    %v1061 = vld [vmem:[#allocation6 + $0xa80] sm:$0xff]
    %v1062 = vld [vmem:[#allocation6 + $0xa88] sm:$0xff]
    %v1063 = vld [vmem:[#allocation6 + $0xa90] sm:$0xff]
    %v1064 = vld [vmem:[#allocation6 + $0xa98] sm:$0xff]
    %v1065 = vld [vmem:[#allocation6 + $0xaa0] sm:$0xff]
    %v1066 = vld [vmem:[#allocation6 + $0xaa8] sm:$0xff]
    %v1067 = vld [vmem:[#allocation6 + $0xab0] sm:$0xff]
    %v1068 = vld [vmem:[#allocation6 + $0xab8] sm:$0xff]
    %v1069 = vld [vmem:[#allocation6 + $0xac0] sm:$0xff]
    %v1070 = vld [vmem:[#allocation6 + $0xac8] sm:$0xff]
    %v1071 = vld [vmem:[#allocation6 + $0xad0] sm:$0xff]
    %v1072 = vld [vmem:[#allocation6 + $0xad8] sm:$0xff]
    %v1073 = vld [vmem:[#allocation6 + $0xae0] sm:$0xff]
    %v1074 = vld [vmem:[#allocation6 + $0xae8] sm:$0xff]
    %v1075 = vld [vmem:[#allocation6 + $0xaf0] sm:$0xff]
    %v1076 = vld [vmem:[#allocation6 + $0xaf8] sm:$0xff]
    %v1077 = vld [vmem:[#allocation6 + $0xb00] sm:$0xff]
    %v1078 = vld [vmem:[#allocation6 + $0xb08] sm:$0xff]
    %v1079 = vld [vmem:[#allocation6 + $0xb10] sm:$0xff]
    %v1080 = vld [vmem:[#allocation6 + $0xb18] sm:$0xff]
    %v1081 = vld [vmem:[#allocation6 + $0xb20] sm:$0xff]
    %v1082 = vld [vmem:[#allocation6 + $0xb28] sm:$0xff]
    %v1083 = vld [vmem:[#allocation6 + $0xb30] sm:$0xff]
    %v1084 = vld [vmem:[#allocation6 + $0xb38] sm:$0xff]
    %v1085 = vld [vmem:[#allocation6 + $0xb40] sm:$0xff]
    %v1086 = vld [vmem:[#allocation6 + $0xb48] sm:$0xff]
    %v1087 = vld [vmem:[#allocation6 + $0xb50] sm:$0xff]
    %v1088 = vld [vmem:[#allocation6 + $0xb58] sm:$0xff]
    %v1089 = vld [vmem:[#allocation6 + $0xb60] sm:$0xff]
    %v1090 = vld [vmem:[#allocation6 + $0xb68] sm:$0xff]
    %v1091 = vld [vmem:[#allocation6 + $0xb70] sm:$0xff]
    %v1092 = vld [vmem:[#allocation6 + $0xb78] sm:$0xff]
    %v1093 = vld [vmem:[#allocation6 + $0xb80] sm:$0xff]
    %v1094 = vld [vmem:[#allocation6 + $0xb88] sm:$0xff]
    %v1095 = vld [vmem:[#allocation6 + $0xb90] sm:$0xff]
    %v1096 = vld [vmem:[#allocation6 + $0xb98] sm:$0xff]
    %v1097 = vld [vmem:[#allocation6 + $0xba0] sm:$0xff]
    %v1098 = vld [vmem:[#allocation6 + $0xba8] sm:$0xff]
    %v1099 = vld [vmem:[#allocation6 + $0xbb0] sm:$0xff]
    %v1100 = vld [vmem:[#allocation6 + $0xbb8] sm:$0xff]
    %v1101 = vld [vmem:[#allocation6 + $0xbc0] sm:$0xff]
    %v1102 = vld [vmem:[#allocation6 + $0xbc8] sm:$0xff]
    %v1103 = vld [vmem:[#allocation6 + $0xbd0] sm:$0xff]
    %v1104 = vld [vmem:[#allocation6 + $0xbd8] sm:$0xff]
    %v1105 = vld [vmem:[#allocation6 + $0xbe0] sm:$0xff]
    %v1106 = vld [vmem:[#allocation6 + $0xbe8] sm:$0xff]
    %v1107 = vld [vmem:[#allocation6 + $0xbf0] sm:$0xff]
    %v1108 = vld [vmem:[#allocation6 + $0xbf8] sm:$0xff]
    %v1109 = vld [vmem:[#allocation6 + $0xc00] sm:$0xff]
    %v1110 = vld [vmem:[#allocation6 + $0xc08] sm:$0xff]
    %v1111 = vld [vmem:[#allocation6 + $0xc10] sm:$0xff]
    %v1112 = vld [vmem:[#allocation6 + $0xc18] sm:$0xff]
    %v1113 = vld [vmem:[#allocation6 + $0xc20] sm:$0xff]
    %v1114 = vld [vmem:[#allocation6 + $0xc28] sm:$0xff]
    %v1115 = vld [vmem:[#allocation6 + $0xc30] sm:$0xff]
    %v1116 = vld [vmem:[#allocation6 + $0xc38] sm:$0xff]
    %v1117 = vld [vmem:[#allocation6 + $0xc40] sm:$0xff]
    %v1118 = vld [vmem:[#allocation6 + $0xc48] sm:$0xff]
    %v1119 = vld [vmem:[#allocation6 + $0xc50] sm:$0xff]
    %v1120 = vld [vmem:[#allocation6 + $0xc58] sm:$0xff]
    %v1121 = vld [vmem:[#allocation6 + $0xc60] sm:$0xff]
    %v1122 = vld [vmem:[#allocation6 + $0xc68] sm:$0xff]
    %v1123 = vld [vmem:[#allocation6 + $0xc70] sm:$0xff]
    %v1124 = vld [vmem:[#allocation6 + $0xc78] sm:$0xff]
    %v1125 = vld [vmem:[#allocation6 + $0xc80] sm:$0xff]
    %v1126 = vld [vmem:[#allocation6 + $0xc88] sm:$0xff]
    %v1127 = vld [vmem:[#allocation6 + $0xc90] sm:$0xff]
    %v1128 = vld [vmem:[#allocation6 + $0xc98] sm:$0xff]
    %v1129 = vld [vmem:[#allocation6 + $0xca0] sm:$0xff]
    %v1130 = vld [vmem:[#allocation6 + $0xca8] sm:$0xff]
    %v1131 = vld [vmem:[#allocation6 + $0xcb0] sm:$0xff]
    %v1132 = vld [vmem:[#allocation6 + $0xcb8] sm:$0xff]
    %v1133 = vld [vmem:[#allocation6 + $0xcc0] sm:$0xff]
    %v1134 = vld [vmem:[#allocation6 + $0xcc8] sm:$0xff]
    %v1135 = vld [vmem:[#allocation6 + $0xcd0] sm:$0xff]
    %v1136 = vld [vmem:[#allocation6 + $0xcd8] sm:$0xff]
    %v1137 = vld [vmem:[#allocation6 + $0xce0] sm:$0xff]
    %v1138 = vld [vmem:[#allocation6 + $0xce8] sm:$0xff]
    %v1139 = vld [vmem:[#allocation6 + $0xcf0] sm:$0xff]
    %v1140 = vld [vmem:[#allocation6 + $0xcf8] sm:$0xff]
    %v1141 = vld [vmem:[#allocation6 + $0xd00] sm:$0xff]
    %v1142 = vld [vmem:[#allocation6 + $0xd08] sm:$0xff]
    %v1143 = vld [vmem:[#allocation6 + $0xd10] sm:$0xff]
    %v1144 = vld [vmem:[#allocation6 + $0xd18] sm:$0xff]
    %v1145 = vld [vmem:[#allocation6 + $0xd20] sm:$0xff]
    %v1146 = vld [vmem:[#allocation6 + $0xd28] sm:$0xff]
    %v1147 = vld [vmem:[#allocation6 + $0xd30] sm:$0xff]
    %v1148 = vld [vmem:[#allocation6 + $0xd38] sm:$0xff]
    %v1149 = vld [vmem:[#allocation6 + $0xd40] sm:$0xff]
    %v1150 = vld [vmem:[#allocation6 + $0xd48] sm:$0xff]
    %v1151 = vld [vmem:[#allocation6 + $0xd50] sm:$0xff]
    %v1152 = vld [vmem:[#allocation6 + $0xd58] sm:$0xff]
    %v1153 = vld [vmem:[#allocation6 + $0xd60] sm:$0xff]
    %v1154 = vld [vmem:[#allocation6 + $0xd68] sm:$0xff]
    %v1155 = vld [vmem:[#allocation6 + $0xd70] sm:$0xff]
    %v1156 = vld [vmem:[#allocation6 + $0xd78] sm:$0xff]
    %v1157 = vld [vmem:[#allocation6 + $0xd80] sm:$0xff]
    %v1158 = vld [vmem:[#allocation6 + $0xd88] sm:$0xff]
    %v1159 = vld [vmem:[#allocation6 + $0xd90] sm:$0xff]
    %v1160 = vld [vmem:[#allocation6 + $0xd98] sm:$0xff]
    %v1161 = vld [vmem:[#allocation6 + $0xda0] sm:$0xff]
    %v1162 = vld [vmem:[#allocation6 + $0xda8] sm:$0xff]
    %v1163 = vld [vmem:[#allocation6 + $0xdb0] sm:$0xff]
    %v1164 = vld [vmem:[#allocation6 + $0xdb8] sm:$0xff]
    %v1165 = vld [vmem:[#allocation6 + $0xdc0] sm:$0xff]
    %v1166 = vld [vmem:[#allocation6 + $0xdc8] sm:$0xff]
    %v1167 = vld [vmem:[#allocation6 + $0xdd0] sm:$0xff]
    %v1168 = vld [vmem:[#allocation6 + $0xdd8] sm:$0xff]
    %v1169 = vld [vmem:[#allocation6 + $0xde0] sm:$0xff]
    %v1170 = vld [vmem:[#allocation6 + $0xde8] sm:$0xff]
    %v1171 = vld [vmem:[#allocation6 + $0xdf0] sm:$0xff]
    %v1172 = vld [vmem:[#allocation6 + $0xdf8] sm:$0xff]
    %v1173 = vld [vmem:[#allocation6 + $0xe00] sm:$0xff]
    %v1174 = vld [vmem:[#allocation6 + $0xe08] sm:$0xff]
    %v1175 = vld [vmem:[#allocation6 + $0xe10] sm:$0xff]
    %v1176 = vld [vmem:[#allocation6 + $0xe18] sm:$0xff]
    %v1177 = vld [vmem:[#allocation6 + $0xe20] sm:$0xff]
    %v1178 = vld [vmem:[#allocation6 + $0xe28] sm:$0xff]
    %v1179 = vld [vmem:[#allocation6 + $0xe30] sm:$0xff]
    %v1180 = vld [vmem:[#allocation6 + $0xe38] sm:$0xff]
    %v1181 = vld [vmem:[#allocation6 + $0xe40] sm:$0xff]
    %v1182 = vld [vmem:[#allocation6 + $0xe48] sm:$0xff]
    %v1183 = vld [vmem:[#allocation6 + $0xe50] sm:$0xff]
    %v1184 = vld [vmem:[#allocation6 + $0xe58] sm:$0xff]
    %v1185 = vld [vmem:[#allocation6 + $0xe60] sm:$0xff]
    %v1186 = vld [vmem:[#allocation6 + $0xe68] sm:$0xff]
    %v1187 = vld [vmem:[#allocation6 + $0xe70] sm:$0xff]
    %v1188 = vld [vmem:[#allocation6 + $0xe78] sm:$0xff]
    %v1189 = vld [vmem:[#allocation6 + $0xe80] sm:$0xff]
    %v1190 = vld [vmem:[#allocation6 + $0xe88] sm:$0xff]
    %v1191 = vld [vmem:[#allocation6 + $0xe90] sm:$0xff]
    %v1192 = vld [vmem:[#allocation6 + $0xe98] sm:$0xff]
    %v1193 = vld [vmem:[#allocation6 + $0xea0] sm:$0xff]
    %v1194 = vld [vmem:[#allocation6 + $0xea8] sm:$0xff]
    %v1195 = vld [vmem:[#allocation6 + $0xeb0] sm:$0xff]
    %v1196 = vld [vmem:[#allocation6 + $0xeb8] sm:$0xff]
    %v1197 = vld [vmem:[#allocation6 + $0xec0] sm:$0xff]
    %v1198 = vld [vmem:[#allocation6 + $0xec8] sm:$0xff]
    %v1199 = vld [vmem:[#allocation6 + $0xed0] sm:$0xff]
    %v1200 = vld [vmem:[#allocation6 + $0xed8] sm:$0xff]
    %v1201 = vld [vmem:[#allocation6 + $0xee0] sm:$0xff]
    %v1202 = vld [vmem:[#allocation6 + $0xee8] sm:$0xff]
    %v1203 = vld [vmem:[#allocation6 + $0xef0] sm:$0xff]
    %v1204 = vld [vmem:[#allocation6 + $0xef8] sm:$0xff]
    %v1205 = vld [vmem:[#allocation6 + $0xf00] sm:$0xff]
    %v1206 = vld [vmem:[#allocation6 + $0xf08] sm:$0xff]
    %v1207 = vld [vmem:[#allocation6 + $0xf10] sm:$0xff]
    %v1208 = vld [vmem:[#allocation6 + $0xf18] sm:$0xff]
    %v1209 = vld [vmem:[#allocation6 + $0xf20] sm:$0xff]
    %v1210 = vld [vmem:[#allocation6 + $0xf28] sm:$0xff]
    %v1211 = vld [vmem:[#allocation6 + $0xf30] sm:$0xff]
    %v1212 = vld [vmem:[#allocation6 + $0xf38] sm:$0xff]
    %v1213 = vld [vmem:[#allocation6 + $0xf40] sm:$0xff]
    %v1214 = vld [vmem:[#allocation6 + $0xf48] sm:$0xff]
    %v1215 = vld [vmem:[#allocation6 + $0xf50] sm:$0xff]
    %v1216 = vld [vmem:[#allocation6 + $0xf58] sm:$0xff]
    %v1217 = vld [vmem:[#allocation6 + $0xf60] sm:$0xff]
    %v1218 = vld [vmem:[#allocation6 + $0xf68] sm:$0xff]
    %v1219 = vld [vmem:[#allocation6 + $0xf70] sm:$0xff]
    %v1220 = vld [vmem:[#allocation6 + $0xf78] sm:$0xff]
    %v1221 = vld [vmem:[#allocation6 + $0xf80] sm:$0xff]
    %v1222 = vld [vmem:[#allocation6 + $0xf88] sm:$0xff]
    %v1223 = vld [vmem:[#allocation6 + $0xf90] sm:$0xff]
    %v1224 = vld [vmem:[#allocation6 + $0xf98] sm:$0xff]
    %v1225 = vld [vmem:[#allocation6 + $0xfa0] sm:$0xff]
    %v1226 = vld [vmem:[#allocation6 + $0xfa8] sm:$0xff]
    %v1227 = vld [vmem:[#allocation6 + $0xfb0] sm:$0xff]
    %v1228 = vld [vmem:[#allocation6 + $0xfb8] sm:$0xff]
    %v1229 = vld [vmem:[#allocation6 + $0xfc0] sm:$0xff]
    %v1230 = vld [vmem:[#allocation6 + $0xfc8] sm:$0xff]
    %v1231 = vld [vmem:[#allocation6 + $0xfd0] sm:$0xff]
    %v1232 = vld [vmem:[#allocation6 + $0xfd8] sm:$0xff]
    %v1233 = vld [vmem:[#allocation6 + $0xfe0] sm:$0xff]
    %v1234 = vld [vmem:[#allocation6 + $0xfe8] sm:$0xff]
    %v1235 = vld [vmem:[#allocation6 + $0xff0] sm:$0xff]
    %v1236 = vld [vmem:[#allocation6 + $0xff8] sm:$0xff]
    %v1237 = vld [vmem:[#allocation7] sm:$0xf]
    %v1239 = vlaneseq
    %v1240 = vshrl.u32 %v1239, 7
    %v1241 = vsub.s32 0, %v1240
    %v1242 = vrot.slane %v1237, %v1241
    %v1243 = vlaneseq
    %v1244 = vshrl.u32 %v1243, 7
    %v1245 = vsub.s32 1, %v1244
    %v1246 = vrot.slane %v1237, %v1245
    %v1247 = vlaneseq
    %v1248 = vshrl.u32 %v1247, 7
    %v1249 = vsub.s32 2, %v1248
    %v1250 = vrot.slane %v1237, %v1249
    %v1251 = vlaneseq
    %v1252 = vshrl.u32 %v1251, 7
    %v1253 = vsub.s32 3, %v1252
    %v1254 = vrot.slane %v1237, %v1253
    %1259 = vmatprep.subr.mxu0 %v726
    %1260 = vmatpush1.msra.mxu0 %v725
    %1261 = vmatprep.subr.mxu0 %v730
    %1262 = vmatpush1.msra.mxu0 %v729
    %1263 = vmatprep.subr.mxu0 %v734
    %1264 = vmatpush1.msra.mxu0 %v733
    %1265 = vmatprep.subr.mxu0 %v738
    %1266 = vmatpush1.msra.mxu0 %v737
    %1267 = vmatprep.subr.mxu0 %v742
    %1268 = vmatpush1.msra.mxu0 %v741
    %1269 = vmatprep.subr.mxu0 %v746
    %1270 = vmatpush1.msra.mxu0 %v745
    %1271 = vmatprep.subr.mxu0 %v750
    %1272 = vmatpush1.msra.mxu0 %v749
    %1273 = vmatprep.subr.mxu0 %v754
    %1274 = vmatpush1.msra.mxu0 %v753
    %1275 = vmatprep.subr.mxu0 %v758
    %1276 = vmatpush1.msra.mxu0 %v757
    %1277 = vmatprep.subr.mxu0 %v762
    %1278 = vmatpush1.msra.mxu0 %v761
    %1279 = vmatprep.subr.mxu0 %v766
    %1280 = vmatpush1.msra.mxu0 %v765
    %1281 = vmatprep.subr.mxu0 %v770
    %1282 = vmatpush1.msra.mxu0 %v769
    %1283 = vmatprep.subr.mxu0 %v774
    %1284 = vmatpush1.msra.mxu0 %v773
    %1285 = vmatprep.subr.mxu0 %v778
    %1286 = vmatpush1.msra.mxu0 %v777
    %1287 = vmatprep.subr.mxu0 %v782
    %1288 = vmatpush1.msra.mxu0 %v781
    %1289 = vmatprep.subr.mxu0 %v786
    %1290 = vmatpush1.msra.mxu0 %v785
    %1291 = vmatprep.subr.mxu0 %v790
    %1292 = vmatpush1.msra.mxu0 %v789
    %1293 = vmatprep.subr.mxu0 %v794
    %1294 = vmatpush1.msra.mxu0 %v793
    %1295 = vmatprep.subr.mxu0 %v798
    %1296 = vmatpush1.msra.mxu0 %v797
    %1297 = vmatprep.subr.mxu0 %v802
    %1298 = vmatpush1.msra.mxu0 %v801
    %1299 = vmatprep.subr.mxu0 %v806
    %1300 = vmatpush1.msra.mxu0 %v805
    %1301 = vmatprep.subr.mxu0 %v810
    %1302 = vmatpush1.msra.mxu0 %v809
    %1303 = vmatprep.subr.mxu0 %v814
    %1304 = vmatpush1.msra.mxu0 %v813
    %1305 = vmatprep.subr.mxu0 %v818
    %1306 = vmatpush1.msra.mxu0 %v817
    %1307 = vmatprep.subr.mxu0 %v822
    %1308 = vmatpush1.msra.mxu0 %v821
    %1309 = vmatprep.subr.mxu0 %v826
    %1310 = vmatpush1.msra.mxu0 %v825
    %1311 = vmatprep.subr.mxu0 %v830
    %1312 = vmatpush1.msra.mxu0 %v829
    %1313 = vmatprep.subr.mxu0 %v834
    %1314 = vmatpush1.msra.mxu0 %v833
    %1315 = vmatprep.subr.mxu0 %v838
    %1316 = vmatpush1.msra.mxu0 %v837
    %1317 = vmatprep.subr.mxu0 %v842
    %1318 = vmatpush1.msra.mxu0 %v841
    %1319 = vmatprep.subr.mxu0 %v846
    %1320 = vmatpush1.msra.mxu0 %v845
    %1321 = vmatprep.subr.mxu0 %v850
    %1322 = vmatpush1.msra.mxu0 %v849
    %1323 = vmatprep.mubr.f32.mxu0 %v718
    %1324 = vmatmul.mubr.f32.gmra.mrb[0].mxu0 %v717
    %v1325 = vpop.f32.mrb[0].mxu0
    %v1326 = vadd.f32 %v1242, %v1325
    %v1327 = vpop.f32.mrb[0].mxu0
    %v1328 = vadd.f32 %v1246, %v1327
    %1329 = vdwg.mxu0
    %1330 = vmatprep.subr.mxu0 %v854
    %1331 = vmatpush1.msra.mxu0 %v853
    %1332 = vmatprep.subr.mxu0 %v858
    %1333 = vmatpush1.msra.mxu0 %v857
    %1334 = vmatprep.subr.mxu0 %v862
    %1335 = vmatpush1.msra.mxu0 %v861
    %1336 = vmatprep.subr.mxu0 %v866
    %1337 = vmatpush1.msra.mxu0 %v865
    %1338 = vmatprep.subr.mxu0 %v870
    %1339 = vmatpush1.msra.mxu0 %v869
    %1340 = vmatprep.subr.mxu0 %v874
    %1341 = vmatpush1.msra.mxu0 %v873
    %1342 = vmatprep.subr.mxu0 %v878
    %1343 = vmatpush1.msra.mxu0 %v877
    %1344 = vmatprep.subr.mxu0 %v882
    %1345 = vmatpush1.msra.mxu0 %v881
    %1346 = vmatprep.subr.mxu0 %v886
    %1347 = vmatpush1.msra.mxu0 %v885
    %1348 = vmatprep.subr.mxu0 %v890
    %1349 = vmatpush1.msra.mxu0 %v889
    %1350 = vmatprep.subr.mxu0 %v894
    %1351 = vmatpush1.msra.mxu0 %v893
    %1352 = vmatprep.subr.mxu0 %v898
    %1353 = vmatpush1.msra.mxu0 %v897
    %1354 = vmatprep.subr.mxu0 %v902
    %1355 = vmatpush1.msra.mxu0 %v901
    %1356 = vmatprep.subr.mxu0 %v906
    %1357 = vmatpush1.msra.mxu0 %v905
    %1358 = vmatprep.subr.mxu0 %v910
    %1359 = vmatpush1.msra.mxu0 %v909
    %1360 = vmatprep.subr.mxu0 %v914
    %1361 = vmatpush1.msra.mxu0 %v913
    %1362 = vmatprep.subr.mxu0 %v918
    %1363 = vmatpush1.msra.mxu0 %v917
    %1364 = vmatprep.subr.mxu0 %v922
    %1365 = vmatpush1.msra.mxu0 %v921
    %1366 = vmatprep.subr.mxu0 %v926
    %1367 = vmatpush1.msra.mxu0 %v925
    %1368 = vmatprep.subr.mxu0 %v930
    %1369 = vmatpush1.msra.mxu0 %v929
    %1370 = vmatprep.subr.mxu0 %v934
    %1371 = vmatpush1.msra.mxu0 %v933
    %1372 = vmatprep.subr.mxu0 %v938
    %1373 = vmatpush1.msra.mxu0 %v937
    %1374 = vmatprep.subr.mxu0 %v942
    %1375 = vmatpush1.msra.mxu0 %v941
    %1376 = vmatprep.subr.mxu0 %v946
    %1377 = vmatpush1.msra.mxu0 %v945
    %1378 = vmatprep.subr.mxu0 %v950
    %1379 = vmatpush1.msra.mxu0 %v949
    %1380 = vmatprep.subr.mxu0 %v954
    %1381 = vmatpush1.msra.mxu0 %v953
    %1382 = vmatprep.subr.mxu0 %v958
    %1383 = vmatpush1.msra.mxu0 %v957
    %1384 = vmatprep.subr.mxu0 %v962
    %1385 = vmatpush1.msra.mxu0 %v961
    %1386 = vmatprep.subr.mxu0 %v966
    %1387 = vmatpush1.msra.mxu0 %v965
    %1388 = vmatprep.subr.mxu0 %v970
    %1389 = vmatpush1.msra.mxu0 %v969
    %1390 = vmatprep.subr.mxu0 %v974
    %1391 = vmatpush1.msra.mxu0 %v973
    %1392 = vmatprep.subr.mxu0 %v978
    %1393 = vmatpush1.msra.mxu0 %v977
    %1394 = vmatprep.mubr.f32.mxu0 %v720
    %1395 = vmatmul.mubr.f32.gmra.mrb[0].mxu0 %v719
    %v1396 = vpop.f32.mrb[0].mxu0
    %v1397 = vadd.f32 %v1326, %v1396
    %v1398 = vpop.f32.mrb[0].mxu0
    %v1399 = vadd.f32 %v1328, %v1398
    %1400 = vdwg.mxu0
    %1401 = vmatprep.subr.mxu0 %v982
    %1402 = vmatpush1.msra.mxu0 %v981
    %1403 = vmatprep.subr.mxu0 %v986
    %1404 = vmatpush1.msra.mxu0 %v985
    %1405 = vmatprep.subr.mxu0 %v990
    %1406 = vmatpush1.msra.mxu0 %v989
    %1407 = vmatprep.subr.mxu0 %v994
    %1408 = vmatpush1.msra.mxu0 %v993
    %1409 = vmatprep.subr.mxu0 %v998
    %1410 = vmatpush1.msra.mxu0 %v997
    %1411 = vmatprep.subr.mxu0 %v1002
    %1412 = vmatpush1.msra.mxu0 %v1001
    %1413 = vmatprep.subr.mxu0 %v1006
    %1414 = vmatpush1.msra.mxu0 %v1005
    %1415 = vmatprep.subr.mxu0 %v1010
    %1416 = vmatpush1.msra.mxu0 %v1009
    %1417 = vmatprep.subr.mxu0 %v1014
    %1418 = vmatpush1.msra.mxu0 %v1013
    %1419 = vmatprep.subr.mxu0 %v1018
    %1420 = vmatpush1.msra.mxu0 %v1017
    %1421 = vmatprep.subr.mxu0 %v1022
    %1422 = vmatpush1.msra.mxu0 %v1021
    %1423 = vmatprep.subr.mxu0 %v1026
    %1424 = vmatpush1.msra.mxu0 %v1025
    %1425 = vmatprep.subr.mxu0 %v1030
    %1426 = vmatpush1.msra.mxu0 %v1029
    %1427 = vmatprep.subr.mxu0 %v1034
    %1428 = vmatpush1.msra.mxu0 %v1033
    %1429 = vmatprep.subr.mxu0 %v1038
    %1430 = vmatpush1.msra.mxu0 %v1037
    %1431 = vmatprep.subr.mxu0 %v1042
    %1432 = vmatpush1.msra.mxu0 %v1041
    %1433 = vmatprep.subr.mxu0 %v1046
    %1434 = vmatpush1.msra.mxu0 %v1045
    %1435 = vmatprep.subr.mxu0 %v1050
    %1436 = vmatpush1.msra.mxu0 %v1049
    %1437 = vmatprep.subr.mxu0 %v1054
    %1438 = vmatpush1.msra.mxu0 %v1053
    %1439 = vmatprep.subr.mxu0 %v1058
    %1440 = vmatpush1.msra.mxu0 %v1057
    %1441 = vmatprep.subr.mxu0 %v1062
    %1442 = vmatpush1.msra.mxu0 %v1061
    %1443 = vmatprep.subr.mxu0 %v1066
    %1444 = vmatpush1.msra.mxu0 %v1065
    %1445 = vmatprep.subr.mxu0 %v1070
    %1446 = vmatpush1.msra.mxu0 %v1069
    %1447 = vmatprep.subr.mxu0 %v1074
    %1448 = vmatpush1.msra.mxu0 %v1073
    %1449 = vmatprep.subr.mxu0 %v1078
    %1450 = vmatpush1.msra.mxu0 %v1077
    %1451 = vmatprep.subr.mxu0 %v1082
    %1452 = vmatpush1.msra.mxu0 %v1081
    %1453 = vmatprep.subr.mxu0 %v1086
    %1454 = vmatpush1.msra.mxu0 %v1085
    %1455 = vmatprep.subr.mxu0 %v1090
    %1456 = vmatpush1.msra.mxu0 %v1089
    %1457 = vmatprep.subr.mxu0 %v1094
    %1458 = vmatpush1.msra.mxu0 %v1093
    %1459 = vmatprep.subr.mxu0 %v1098
    %1460 = vmatpush1.msra.mxu0 %v1097
    %1461 = vmatprep.subr.mxu0 %v1102
    %1462 = vmatpush1.msra.mxu0 %v1101
    %1463 = vmatprep.subr.mxu0 %v1106
    %1464 = vmatpush1.msra.mxu0 %v1105
    %1465 = vmatprep.mubr.f32.mxu0 %v722
    %1466 = vmatmul.mubr.f32.gmra.mrb[0].mxu0 %v721
    %v1467 = vpop.f32.mrb[0].mxu0
    %v1468 = vadd.f32 %v1397, %v1467
    %v1469 = vpop.f32.mrb[0].mxu0
    %v1470 = vadd.f32 %v1399, %v1469
    %1471 = vdwg.mxu0
    %1472 = vmatprep.subr.mxu0 %v1110
    %1473 = vmatpush1.msra.mxu0 %v1109
    %1474 = vmatprep.subr.mxu0 %v1114
    %1475 = vmatpush1.msra.mxu0 %v1113
    %1476 = vmatprep.subr.mxu0 %v1118
    %1477 = vmatpush1.msra.mxu0 %v1117
    %1478 = vmatprep.subr.mxu0 %v1122
    %1479 = vmatpush1.msra.mxu0 %v1121
    %1480 = vmatprep.subr.mxu0 %v1126
    %1481 = vmatpush1.msra.mxu0 %v1125
    %1482 = vmatprep.subr.mxu0 %v1130
    %1483 = vmatpush1.msra.mxu0 %v1129
    %1484 = vmatprep.subr.mxu0 %v1134
    %1485 = vmatpush1.msra.mxu0 %v1133
    %1486 = vmatprep.subr.mxu0 %v1138
    %1487 = vmatpush1.msra.mxu0 %v1137
    %1488 = vmatprep.subr.mxu0 %v1142
    %1489 = vmatpush1.msra.mxu0 %v1141
    %1490 = vmatprep.subr.mxu0 %v1146
    %1491 = vmatpush1.msra.mxu0 %v1145
    %1492 = vmatprep.subr.mxu0 %v1150
    %1493 = vmatpush1.msra.mxu0 %v1149
    %1494 = vmatprep.subr.mxu0 %v1154
    %1495 = vmatpush1.msra.mxu0 %v1153
    %1496 = vmatprep.subr.mxu0 %v1158
    %1497 = vmatpush1.msra.mxu0 %v1157
    %1498 = vmatprep.subr.mxu0 %v1162
    %1499 = vmatpush1.msra.mxu0 %v1161
    %1500 = vmatprep.subr.mxu0 %v1166
    %1501 = vmatpush1.msra.mxu0 %v1165
    %1502 = vmatprep.subr.mxu0 %v1170
    %1503 = vmatpush1.msra.mxu0 %v1169
    %1504 = vmatprep.subr.mxu0 %v1174
    %1505 = vmatpush1.msra.mxu0 %v1173
    %1506 = vmatprep.subr.mxu0 %v1178
    %1507 = vmatpush1.msra.mxu0 %v1177
    %1508 = vmatprep.subr.mxu0 %v1182
    %1509 = vmatpush1.msra.mxu0 %v1181
    %1510 = vmatprep.subr.mxu0 %v1186
    %1511 = vmatpush1.msra.mxu0 %v1185
    %1512 = vmatprep.subr.mxu0 %v1190
    %1513 = vmatpush1.msra.mxu0 %v1189
    %1514 = vmatprep.subr.mxu0 %v1194
    %1515 = vmatpush1.msra.mxu0 %v1193
    %1516 = vmatprep.subr.mxu0 %v1198
    %1517 = vmatpush1.msra.mxu0 %v1197
    %1518 = vmatprep.subr.mxu0 %v1202
    %1519 = vmatpush1.msra.mxu0 %v1201
    %1520 = vmatprep.subr.mxu0 %v1206
    %1521 = vmatpush1.msra.mxu0 %v1205
    %1522 = vmatprep.subr.mxu0 %v1210
    %1523 = vmatpush1.msra.mxu0 %v1209
    %1524 = vmatprep.subr.mxu0 %v1214
    %1525 = vmatpush1.msra.mxu0 %v1213
    %1526 = vmatprep.subr.mxu0 %v1218
    %1527 = vmatpush1.msra.mxu0 %v1217
    %1528 = vmatprep.subr.mxu0 %v1222
    %1529 = vmatpush1.msra.mxu0 %v1221
    %1530 = vmatprep.subr.mxu0 %v1226
    %1531 = vmatpush1.msra.mxu0 %v1225
    %1532 = vmatprep.subr.mxu0 %v1230
    %1533 = vmatpush1.msra.mxu0 %v1229
    %1534 = vmatprep.subr.mxu0 %v1234
    %1535 = vmatpush1.msra.mxu0 %v1233
    %1536 = vmatprep.mubr.f32.mxu0 %v724
    %1537 = vmatmul.mubr.f32.gmra.mrb[0].mxu0 %v723
    %v1538 = vpop.f32.mrb[0].mxu0
    %v1539 = vadd.f32 %v1468, %v1538
    %v1540 = vpop.f32.mrb[0].mxu0
    %v1541 = vadd.f32 %v1470, %v1540
    %1542 = vdwg.mxu0
    %1543 = vmatprep.subr.mxu0 %v728
    %1544 = vmatpush1.msra.mxu0 %v727
    %1545 = vmatprep.subr.mxu0 %v732
    %1546 = vmatpush1.msra.mxu0 %v731
    %1547 = vmatprep.subr.mxu0 %v736
    %1548 = vmatpush1.msra.mxu0 %v735
    %1549 = vmatprep.subr.mxu0 %v740
    %1550 = vmatpush1.msra.mxu0 %v739
    %1551 = vmatprep.subr.mxu0 %v744
    %1552 = vmatpush1.msra.mxu0 %v743
    %1553 = vmatprep.subr.mxu0 %v748
    %1554 = vmatpush1.msra.mxu0 %v747
    %1555 = vmatprep.subr.mxu0 %v752
    %1556 = vmatpush1.msra.mxu0 %v751
    %1557 = vmatprep.subr.mxu0 %v756
    %1558 = vmatpush1.msra.mxu0 %v755
    %1559 = vmatprep.subr.mxu0 %v760
    %1560 = vmatpush1.msra.mxu0 %v759
    %1561 = vmatprep.subr.mxu0 %v764
    %1562 = vmatpush1.msra.mxu0 %v763
    %1563 = vmatprep.subr.mxu0 %v768
    %1564 = vmatpush1.msra.mxu0 %v767
    %1565 = vmatprep.subr.mxu0 %v772
    %1566 = vmatpush1.msra.mxu0 %v771
    %1567 = vmatprep.subr.mxu0 %v776
    %1568 = vmatpush1.msra.mxu0 %v775
    %1569 = vmatprep.subr.mxu0 %v780
    %1570 = vmatpush1.msra.mxu0 %v779
    %1571 = vmatprep.subr.mxu0 %v784
    %1572 = vmatpush1.msra.mxu0 %v783
    %1573 = vmatprep.subr.mxu0 %v788
    %1574 = vmatpush1.msra.mxu0 %v787
    %1575 = vmatprep.subr.mxu0 %v792
    %1576 = vmatpush1.msra.mxu0 %v791
    %1577 = vmatprep.subr.mxu0 %v796
    %1578 = vmatpush1.msra.mxu0 %v795
    %1579 = vmatprep.subr.mxu0 %v800
    %1580 = vmatpush1.msra.mxu0 %v799
    %1581 = vmatprep.subr.mxu0 %v804
    %1582 = vmatpush1.msra.mxu0 %v803
    %1583 = vmatprep.subr.mxu0 %v808
    %1584 = vmatpush1.msra.mxu0 %v807
    %1585 = vmatprep.subr.mxu0 %v812
    %1586 = vmatpush1.msra.mxu0 %v811
    %1587 = vmatprep.subr.mxu0 %v816
    %1588 = vmatpush1.msra.mxu0 %v815
    %1589 = vmatprep.subr.mxu0 %v820
    %1590 = vmatpush1.msra.mxu0 %v819
    %1591 = vmatprep.subr.mxu0 %v824
    %1592 = vmatpush1.msra.mxu0 %v823
    %1593 = vmatprep.subr.mxu0 %v828
    %1594 = vmatpush1.msra.mxu0 %v827
    %1595 = vmatprep.subr.mxu0 %v832
    %1596 = vmatpush1.msra.mxu0 %v831
    %1597 = vmatprep.subr.mxu0 %v836
    %1598 = vmatpush1.msra.mxu0 %v835
    %1599 = vmatprep.subr.mxu0 %v840
    %1600 = vmatpush1.msra.mxu0 %v839
    %1601 = vmatprep.subr.mxu0 %v844
    %1602 = vmatpush1.msra.mxu0 %v843
    %1603 = vmatprep.subr.mxu0 %v848
    %1604 = vmatpush1.msra.mxu0 %v847
    %1605 = vmatprep.subr.mxu0 %v852
    %1606 = vmatpush1.msra.mxu0 %v851
    %1607 = vmatprep.mubr.f32.mxu0 %v718
    %1608 = vmatmul.mubr.f32.gmra.mrb[0].mxu0 %v717
    %v1609 = vpop.f32.mrb[0].mxu0
    %v1610 = vadd.f32 %v1250, %v1609
    %v1611 = vpop.f32.mrb[0].mxu0
    %v1612 = vadd.f32 %v1254, %v1611
    %1613 = vdwg.mxu0
    %1614 = vmatprep.subr.mxu0 %v856
    %1615 = vmatpush1.msra.mxu0 %v855
    %1616 = vmatprep.subr.mxu0 %v860
    %1617 = vmatpush1.msra.mxu0 %v859
    %1618 = vmatprep.subr.mxu0 %v864
    %1619 = vmatpush1.msra.mxu0 %v863
    %1620 = vmatprep.subr.mxu0 %v868
    %1621 = vmatpush1.msra.mxu0 %v867
    %1622 = vmatprep.subr.mxu0 %v872
    %1623 = vmatpush1.msra.mxu0 %v871
    %1624 = vmatprep.subr.mxu0 %v876
    %1625 = vmatpush1.msra.mxu0 %v875
    %1626 = vmatprep.subr.mxu0 %v880
    %1627 = vmatpush1.msra.mxu0 %v879
    %1628 = vmatprep.subr.mxu0 %v884
    %1629 = vmatpush1.msra.mxu0 %v883
    %1630 = vmatprep.subr.mxu0 %v888
    %1631 = vmatpush1.msra.mxu0 %v887
    %1632 = vmatprep.subr.mxu0 %v892
    %1633 = vmatpush1.msra.mxu0 %v891
    %1634 = vmatprep.subr.mxu0 %v896
    %1635 = vmatpush1.msra.mxu0 %v895
    %1636 = vmatprep.subr.mxu0 %v900
    %1637 = vmatpush1.msra.mxu0 %v899
    %1638 = vmatprep.subr.mxu0 %v904
    %1639 = vmatpush1.msra.mxu0 %v903
    %1640 = vmatprep.subr.mxu0 %v908
    %1641 = vmatpush1.msra.mxu0 %v907
    %1642 = vmatprep.subr.mxu0 %v912
    %1643 = vmatpush1.msra.mxu0 %v911
    %1644 = vmatprep.subr.mxu0 %v916
    %1645 = vmatpush1.msra.mxu0 %v915
    %1646 = vmatprep.subr.mxu0 %v920
    %1647 = vmatpush1.msra.mxu0 %v919
    %1648 = vmatprep.subr.mxu0 %v924
    %1649 = vmatpush1.msra.mxu0 %v923
    %1650 = vmatprep.subr.mxu0 %v928
    %1651 = vmatpush1.msra.mxu0 %v927
    %1652 = vmatprep.subr.mxu0 %v932
    %1653 = vmatpush1.msra.mxu0 %v931
    %1654 = vmatprep.subr.mxu0 %v936
    %1655 = vmatpush1.msra.mxu0 %v935
    %1656 = vmatprep.subr.mxu0 %v940
    %1657 = vmatpush1.msra.mxu0 %v939
    %1658 = vmatprep.subr.mxu0 %v944
    %1659 = vmatpush1.msra.mxu0 %v943
    %1660 = vmatprep.subr.mxu0 %v948
    %1661 = vmatpush1.msra.mxu0 %v947
    %1662 = vmatprep.subr.mxu0 %v952
    %1663 = vmatpush1.msra.mxu0 %v951
    %1664 = vmatprep.subr.mxu0 %v956
    %1665 = vmatpush1.msra.mxu0 %v955
    %1666 = vmatprep.subr.mxu0 %v960
    %1667 = vmatpush1.msra.mxu0 %v959
    %1668 = vmatprep.subr.mxu0 %v964
    %1669 = vmatpush1.msra.mxu0 %v963
    %1670 = vmatprep.subr.mxu0 %v968
    %1671 = vmatpush1.msra.mxu0 %v967
    %1672 = vmatprep.subr.mxu0 %v972
    %1673 = vmatpush1.msra.mxu0 %v971
    %1674 = vmatprep.subr.mxu0 %v976
    %1675 = vmatpush1.msra.mxu0 %v975
    %1676 = vmatprep.subr.mxu0 %v980
    %1677 = vmatpush1.msra.mxu0 %v979
    %1678 = vmatprep.mubr.f32.mxu0 %v720
    %1679 = vmatmul.mubr.f32.gmra.mrb[0].mxu0 %v719
    %v1680 = vpop.f32.mrb[0].mxu0
    %v1681 = vadd.f32 %v1610, %v1680
    %v1682 = vpop.f32.mrb[0].mxu0
    %v1683 = vadd.f32 %v1612, %v1682
    %1684 = vdwg.mxu0
    %1685 = vmatprep.subr.mxu0 %v984
    %1686 = vmatpush1.msra.mxu0 %v983
    %1687 = vmatprep.subr.mxu0 %v988
    %1688 = vmatpush1.msra.mxu0 %v987
    %1689 = vmatprep.subr.mxu0 %v992
    %1690 = vmatpush1.msra.mxu0 %v991
    %1691 = vmatprep.subr.mxu0 %v996
    %1692 = vmatpush1.msra.mxu0 %v995
    %1693 = vmatprep.subr.mxu0 %v1000
    %1694 = vmatpush1.msra.mxu0 %v999
    %1695 = vmatprep.subr.mxu0 %v1004
    %1696 = vmatpush1.msra.mxu0 %v1003
    %1697 = vmatprep.subr.mxu0 %v1008
    %1698 = vmatpush1.msra.mxu0 %v1007
    %1699 = vmatprep.subr.mxu0 %v1012
    %1700 = vmatpush1.msra.mxu0 %v1011
    %1701 = vmatprep.subr.mxu0 %v1016
    %1702 = vmatpush1.msra.mxu0 %v1015
    %1703 = vmatprep.subr.mxu0 %v1020
    %1704 = vmatpush1.msra.mxu0 %v1019
    %1705 = vmatprep.subr.mxu0 %v1024
    %1706 = vmatpush1.msra.mxu0 %v1023
    %1707 = vmatprep.subr.mxu0 %v1028
    %1708 = vmatpush1.msra.mxu0 %v1027
    %1709 = vmatprep.subr.mxu0 %v1032
    %1710 = vmatpush1.msra.mxu0 %v1031
    %1711 = vmatprep.subr.mxu0 %v1036
    %1712 = vmatpush1.msra.mxu0 %v1035
    %1713 = vmatprep.subr.mxu0 %v1040
    %1714 = vmatpush1.msra.mxu0 %v1039
    %1715 = vmatprep.subr.mxu0 %v1044
    %1716 = vmatpush1.msra.mxu0 %v1043
    %1717 = vmatprep.subr.mxu0 %v1048
    %1718 = vmatpush1.msra.mxu0 %v1047
    %1719 = vmatprep.subr.mxu0 %v1052
    %1720 = vmatpush1.msra.mxu0 %v1051
    %1721 = vmatprep.subr.mxu0 %v1056
    %1722 = vmatpush1.msra.mxu0 %v1055
    %1723 = vmatprep.subr.mxu0 %v1060
    %1724 = vmatpush1.msra.mxu0 %v1059
    %1725 = vmatprep.subr.mxu0 %v1064
    %1726 = vmatpush1.msra.mxu0 %v1063
    %1727 = vmatprep.subr.mxu0 %v1068
    %1728 = vmatpush1.msra.mxu0 %v1067
    %1729 = vmatprep.subr.mxu0 %v1072
    %1730 = vmatpush1.msra.mxu0 %v1071
    %1731 = vmatprep.subr.mxu0 %v1076
    %1732 = vmatpush1.msra.mxu0 %v1075
    %1733 = vmatprep.subr.mxu0 %v1080
    %1734 = vmatpush1.msra.mxu0 %v1079
    %1735 = vmatprep.subr.mxu0 %v1084
    %1736 = vmatpush1.msra.mxu0 %v1083
    %1737 = vmatprep.subr.mxu0 %v1088
    %1738 = vmatpush1.msra.mxu0 %v1087
    %1739 = vmatprep.subr.mxu0 %v1092
    %1740 = vmatpush1.msra.mxu0 %v1091
    %1741 = vmatprep.subr.mxu0 %v1096
    %1742 = vmatpush1.msra.mxu0 %v1095
    %1743 = vmatprep.subr.mxu0 %v1100
    %1744 = vmatpush1.msra.mxu0 %v1099
    %1745 = vmatprep.subr.mxu0 %v1104
    %1746 = vmatpush1.msra.mxu0 %v1103
    %1747 = vmatprep.subr.mxu0 %v1108
    %1748 = vmatpush1.msra.mxu0 %v1107
    %1749 = vmatprep.mubr.f32.mxu0 %v722
    %1750 = vmatmul.mubr.f32.gmra.mrb[0].mxu0 %v721
    %v1751 = vpop.f32.mrb[0].mxu0
    %v1752 = vadd.f32 %v1681, %v1751
    %v1753 = vpop.f32.mrb[0].mxu0
    %v1754 = vadd.f32 %v1683, %v1753
    %1755 = vdwg.mxu0
    %1756 = vmatprep.subr.mxu0 %v1112
    %1757 = vmatpush1.msra.mxu0 %v1111
    %1758 = vmatprep.subr.mxu0 %v1116
    %1759 = vmatpush1.msra.mxu0 %v1115
    %1760 = vmatprep.subr.mxu0 %v1120
    %1761 = vmatpush1.msra.mxu0 %v1119
    %1762 = vmatprep.subr.mxu0 %v1124
    %1763 = vmatpush1.msra.mxu0 %v1123
    %1764 = vmatprep.subr.mxu0 %v1128
    %1765 = vmatpush1.msra.mxu0 %v1127
    %1766 = vmatprep.subr.mxu0 %v1132
    %1767 = vmatpush1.msra.mxu0 %v1131
    %1768 = vmatprep.subr.mxu0 %v1136
    %1769 = vmatpush1.msra.mxu0 %v1135
    %1770 = vmatprep.subr.mxu0 %v1140
    %1771 = vmatpush1.msra.mxu0 %v1139
    %1772 = vmatprep.subr.mxu0 %v1144
    %1773 = vmatpush1.msra.mxu0 %v1143
    %1774 = vmatprep.subr.mxu0 %v1148
    %1775 = vmatpush1.msra.mxu0 %v1147
    %1776 = vmatprep.subr.mxu0 %v1152
    %1777 = vmatpush1.msra.mxu0 %v1151
    %1778 = vmatprep.subr.mxu0 %v1156
    %1779 = vmatpush1.msra.mxu0 %v1155
    %1780 = vmatprep.subr.mxu0 %v1160
    %1781 = vmatpush1.msra.mxu0 %v1159
    %1782 = vmatprep.subr.mxu0 %v1164
    %1783 = vmatpush1.msra.mxu0 %v1163
    %1784 = vmatprep.subr.mxu0 %v1168
    %1785 = vmatpush1.msra.mxu0 %v1167
    %1786 = vmatprep.subr.mxu0 %v1172
    %1787 = vmatpush1.msra.mxu0 %v1171
    %1788 = vmatprep.subr.mxu0 %v1176
    %1789 = vmatpush1.msra.mxu0 %v1175
    %1790 = vmatprep.subr.mxu0 %v1180
    %1791 = vmatpush1.msra.mxu0 %v1179
    %1792 = vmatprep.subr.mxu0 %v1184
    %1793 = vmatpush1.msra.mxu0 %v1183
    %1794 = vmatprep.subr.mxu0 %v1188
    %1795 = vmatpush1.msra.mxu0 %v1187
    %1796 = vmatprep.subr.mxu0 %v1192
    %1797 = vmatpush1.msra.mxu0 %v1191
    %1798 = vmatprep.subr.mxu0 %v1196
    %1799 = vmatpush1.msra.mxu0 %v1195
    %1800 = vmatprep.subr.mxu0 %v1200
    %1801 = vmatpush1.msra.mxu0 %v1199
    %1802 = vmatprep.subr.mxu0 %v1204
    %1803 = vmatpush1.msra.mxu0 %v1203
    %1804 = vmatprep.subr.mxu0 %v1208
    %1805 = vmatpush1.msra.mxu0 %v1207
    %1806 = vmatprep.subr.mxu0 %v1212
    %1807 = vmatpush1.msra.mxu0 %v1211
    %1808 = vmatprep.subr.mxu0 %v1216
    %1809 = vmatpush1.msra.mxu0 %v1215
    %1810 = vmatprep.subr.mxu0 %v1220
    %1811 = vmatpush1.msra.mxu0 %v1219
    %1812 = vmatprep.subr.mxu0 %v1224
    %1813 = vmatpush1.msra.mxu0 %v1223
    %1814 = vmatprep.subr.mxu0 %v1228
    %1815 = vmatpush1.msra.mxu0 %v1227
    %1816 = vmatprep.subr.mxu0 %v1232
    %1817 = vmatpush1.msra.mxu0 %v1231
    %1818 = vmatprep.subr.mxu0 %v1236
    %1819 = vmatpush1.msra.mxu0 %v1235
    %1820 = vmatprep.mubr.f32.mxu0 %v724
    %1821 = vmatmul.mubr.f32.gmra.mrb[0].mxu0 %v723
    %v1822 = vpop.f32.mrb[0].mxu0
    %v1823 = vadd.f32 %v1752, %v1822
    %v1824 = vpop.f32.mrb[0].mxu0
    %v1825 = vadd.f32 %v1754, %v1824
    %1826 = vdwg.mxu0
    %v1827 = vmax.f32 %v1539, 0.0
    %v1828 = vmax.f32 %v1541, 0.0
    %v1829 = vmax.f32 %v1823, 0.0
    %v1830 = vmax.f32 %v1825, 0.0
    %v1831 = vld [vmem:[#allocation9] sm:$0xff]
    %v1832 = vld [vmem:[#allocation9 + $0x8] sm:$0xff]
    %v1833 = vld [vmem:[#allocation9 + $0x10] sm:$0xff]
    %v1834 = vld [vmem:[#allocation9 + $0x18] sm:$0xff]
    %v1835 = vld [vmem:[#allocation9 + $0x20] sm:$0xff]
    %v1836 = vld [vmem:[#allocation9 + $0x28] sm:$0xff]
    %v1837 = vld [vmem:[#allocation9 + $0x30] sm:$0xff]
    %v1838 = vld [vmem:[#allocation9 + $0x38] sm:$0xff]
    %v1839 = vld [vmem:[#allocation9 + $0x40] sm:$0xff]
    %v1840 = vld [vmem:[#allocation9 + $0x48] sm:$0xff]
    %v1841 = vld [vmem:[#allocation9 + $0x50] sm:$0xff]
    %v1842 = vld [vmem:[#allocation9 + $0x58] sm:$0xff]
    %v1843 = vld [vmem:[#allocation9 + $0x60] sm:$0xff]
    %v1844 = vld [vmem:[#allocation9 + $0x68] sm:$0xff]
    %v1845 = vld [vmem:[#allocation9 + $0x70] sm:$0xff]
    %v1846 = vld [vmem:[#allocation9 + $0x78] sm:$0xff]
    %v1847 = vld [vmem:[#allocation9 + $0x80] sm:$0xff]
    %v1848 = vld [vmem:[#allocation9 + $0x88] sm:$0xff]
    %v1849 = vld [vmem:[#allocation9 + $0x90] sm:$0xff]
    %v1850 = vld [vmem:[#allocation9 + $0x98] sm:$0xff]
    %v1851 = vld [vmem:[#allocation9 + $0xa0] sm:$0xff]
    %v1852 = vld [vmem:[#allocation9 + $0xa8] sm:$0xff]
    %v1853 = vld [vmem:[#allocation9 + $0xb0] sm:$0xff]
    %v1854 = vld [vmem:[#allocation9 + $0xb8] sm:$0xff]
    %v1855 = vld [vmem:[#allocation9 + $0xc0] sm:$0xff]
    %v1856 = vld [vmem:[#allocation9 + $0xc8] sm:$0xff]
    %v1857 = vld [vmem:[#allocation9 + $0xd0] sm:$0xff]
    %v1858 = vld [vmem:[#allocation9 + $0xd8] sm:$0xff]
    %v1859 = vld [vmem:[#allocation9 + $0xe0] sm:$0xff]
    %v1860 = vld [vmem:[#allocation9 + $0xe8] sm:$0xff]
    %v1861 = vld [vmem:[#allocation9 + $0xf0] sm:$0xff]
    %v1862 = vld [vmem:[#allocation9 + $0xf8] sm:$0xff]
    %v1863 = vld [vmem:[#allocation9 + $0x100] sm:$0xff]
    %v1864 = vld [vmem:[#allocation9 + $0x108] sm:$0xff]
    %v1865 = vld [vmem:[#allocation9 + $0x110] sm:$0xff]
    %v1866 = vld [vmem:[#allocation9 + $0x118] sm:$0xff]
    %v1867 = vld [vmem:[#allocation9 + $0x120] sm:$0xff]
    %v1868 = vld [vmem:[#allocation9 + $0x128] sm:$0xff]
    %v1869 = vld [vmem:[#allocation9 + $0x130] sm:$0xff]
    %v1870 = vld [vmem:[#allocation9 + $0x138] sm:$0xff]
    %v1871 = vld [vmem:[#allocation9 + $0x140] sm:$0xff]
    %v1872 = vld [vmem:[#allocation9 + $0x148] sm:$0xff]
    %v1873 = vld [vmem:[#allocation9 + $0x150] sm:$0xff]
    %v1874 = vld [vmem:[#allocation9 + $0x158] sm:$0xff]
    %v1875 = vld [vmem:[#allocation9 + $0x160] sm:$0xff]
    %v1876 = vld [vmem:[#allocation9 + $0x168] sm:$0xff]
    %v1877 = vld [vmem:[#allocation9 + $0x170] sm:$0xff]
    %v1878 = vld [vmem:[#allocation9 + $0x178] sm:$0xff]
    %v1879 = vld [vmem:[#allocation9 + $0x180] sm:$0xff]
    %v1880 = vld [vmem:[#allocation9 + $0x188] sm:$0xff]
    %v1881 = vld [vmem:[#allocation9 + $0x190] sm:$0xff]
    %v1882 = vld [vmem:[#allocation9 + $0x198] sm:$0xff]
    %v1883 = vld [vmem:[#allocation9 + $0x1a0] sm:$0xff]
    %v1884 = vld [vmem:[#allocation9 + $0x1a8] sm:$0xff]
    %v1885 = vld [vmem:[#allocation9 + $0x1b0] sm:$0xff]
    %v1886 = vld [vmem:[#allocation9 + $0x1b8] sm:$0xff]
    %v1887 = vld [vmem:[#allocation9 + $0x1c0] sm:$0xff]
    %v1888 = vld [vmem:[#allocation9 + $0x1c8] sm:$0xff]
    %v1889 = vld [vmem:[#allocation9 + $0x1d0] sm:$0xff]
    %v1890 = vld [vmem:[#allocation9 + $0x1d8] sm:$0xff]
    %v1891 = vld [vmem:[#allocation9 + $0x1e0] sm:$0xff]
    %v1892 = vld [vmem:[#allocation9 + $0x1e8] sm:$0xff]
    %v1893 = vld [vmem:[#allocation9 + $0x1f0] sm:$0xff]
    %v1894 = vld [vmem:[#allocation9 + $0x1f8] sm:$0xff]
    %v1895 = vld [vmem:[#allocation9 + $0x200] sm:$0xff]
    %v1896 = vld [vmem:[#allocation9 + $0x208] sm:$0xff]
    %v1897 = vld [vmem:[#allocation9 + $0x210] sm:$0xff]
    %v1898 = vld [vmem:[#allocation9 + $0x218] sm:$0xff]
    %v1899 = vld [vmem:[#allocation9 + $0x220] sm:$0xff]
    %v1900 = vld [vmem:[#allocation9 + $0x228] sm:$0xff]
    %v1901 = vld [vmem:[#allocation9 + $0x230] sm:$0xff]
    %v1902 = vld [vmem:[#allocation9 + $0x238] sm:$0xff]
    %v1903 = vld [vmem:[#allocation9 + $0x240] sm:$0xff]
    %v1904 = vld [vmem:[#allocation9 + $0x248] sm:$0xff]
    %v1905 = vld [vmem:[#allocation9 + $0x250] sm:$0xff]
    %v1906 = vld [vmem:[#allocation9 + $0x258] sm:$0xff]
    %v1907 = vld [vmem:[#allocation9 + $0x260] sm:$0xff]
    %v1908 = vld [vmem:[#allocation9 + $0x268] sm:$0xff]
    %v1909 = vld [vmem:[#allocation9 + $0x270] sm:$0xff]
    %v1910 = vld [vmem:[#allocation9 + $0x278] sm:$0xff]
    %v1911 = vld [vmem:[#allocation9 + $0x280] sm:$0xff]
    %v1912 = vld [vmem:[#allocation9 + $0x288] sm:$0xff]
    %v1913 = vld [vmem:[#allocation9 + $0x290] sm:$0xff]
    %v1914 = vld [vmem:[#allocation9 + $0x298] sm:$0xff]
    %v1915 = vld [vmem:[#allocation9 + $0x2a0] sm:$0xff]
    %v1916 = vld [vmem:[#allocation9 + $0x2a8] sm:$0xff]
    %v1917 = vld [vmem:[#allocation9 + $0x2b0] sm:$0xff]
    %v1918 = vld [vmem:[#allocation9 + $0x2b8] sm:$0xff]
    %v1919 = vld [vmem:[#allocation9 + $0x2c0] sm:$0xff]
    %v1920 = vld [vmem:[#allocation9 + $0x2c8] sm:$0xff]
    %v1921 = vld [vmem:[#allocation9 + $0x2d0] sm:$0xff]
    %v1922 = vld [vmem:[#allocation9 + $0x2d8] sm:$0xff]
    %v1923 = vld [vmem:[#allocation9 + $0x2e0] sm:$0xff]
    %v1924 = vld [vmem:[#allocation9 + $0x2e8] sm:$0xff]
    %v1925 = vld [vmem:[#allocation9 + $0x2f0] sm:$0xff]
    %v1926 = vld [vmem:[#allocation9 + $0x2f8] sm:$0xff]
    %v1927 = vld [vmem:[#allocation9 + $0x300] sm:$0xff]
    %v1928 = vld [vmem:[#allocation9 + $0x308] sm:$0xff]
    %v1929 = vld [vmem:[#allocation9 + $0x310] sm:$0xff]
    %v1930 = vld [vmem:[#allocation9 + $0x318] sm:$0xff]
    %v1931 = vld [vmem:[#allocation9 + $0x320] sm:$0xff]
    %v1932 = vld [vmem:[#allocation9 + $0x328] sm:$0xff]
    %v1933 = vld [vmem:[#allocation9 + $0x330] sm:$0xff]
    %v1934 = vld [vmem:[#allocation9 + $0x338] sm:$0xff]
    %v1935 = vld [vmem:[#allocation9 + $0x340] sm:$0xff]
    %v1936 = vld [vmem:[#allocation9 + $0x348] sm:$0xff]
    %v1937 = vld [vmem:[#allocation9 + $0x350] sm:$0xff]
    %v1938 = vld [vmem:[#allocation9 + $0x358] sm:$0xff]
    %v1939 = vld [vmem:[#allocation9 + $0x360] sm:$0xff]
    %v1940 = vld [vmem:[#allocation9 + $0x368] sm:$0xff]
    %v1941 = vld [vmem:[#allocation9 + $0x370] sm:$0xff]
    %v1942 = vld [vmem:[#allocation9 + $0x378] sm:$0xff]
    %v1943 = vld [vmem:[#allocation9 + $0x380] sm:$0xff]
    %v1944 = vld [vmem:[#allocation9 + $0x388] sm:$0xff]
    %v1945 = vld [vmem:[#allocation9 + $0x390] sm:$0xff]
    %v1946 = vld [vmem:[#allocation9 + $0x398] sm:$0xff]
    %v1947 = vld [vmem:[#allocation9 + $0x3a0] sm:$0xff]
    %v1948 = vld [vmem:[#allocation9 + $0x3a8] sm:$0xff]
    %v1949 = vld [vmem:[#allocation9 + $0x3b0] sm:$0xff]
    %v1950 = vld [vmem:[#allocation9 + $0x3b8] sm:$0xff]
    %v1951 = vld [vmem:[#allocation9 + $0x3c0] sm:$0xff]
    %v1952 = vld [vmem:[#allocation9 + $0x3c8] sm:$0xff]
    %v1953 = vld [vmem:[#allocation9 + $0x3d0] sm:$0xff]
    %v1954 = vld [vmem:[#allocation9 + $0x3d8] sm:$0xff]
    %v1955 = vld [vmem:[#allocation9 + $0x3e0] sm:$0xff]
    %v1956 = vld [vmem:[#allocation9 + $0x3e8] sm:$0xff]
    %v1957 = vld [vmem:[#allocation9 + $0x3f0] sm:$0xff]
    %v1958 = vld [vmem:[#allocation9 + $0x3f8] sm:$0xff]
    %v1959 = vld [vmem:[#allocation9 + $0x400] sm:$0xff]
    %v1960 = vld [vmem:[#allocation9 + $0x408] sm:$0xff]
    %v1961 = vld [vmem:[#allocation9 + $0x410] sm:$0xff]
    %v1962 = vld [vmem:[#allocation9 + $0x418] sm:$0xff]
    %v1963 = vld [vmem:[#allocation9 + $0x420] sm:$0xff]
    %v1964 = vld [vmem:[#allocation9 + $0x428] sm:$0xff]
    %v1965 = vld [vmem:[#allocation9 + $0x430] sm:$0xff]
    %v1966 = vld [vmem:[#allocation9 + $0x438] sm:$0xff]
    %v1967 = vld [vmem:[#allocation9 + $0x440] sm:$0xff]
    %v1968 = vld [vmem:[#allocation9 + $0x448] sm:$0xff]
    %v1969 = vld [vmem:[#allocation9 + $0x450] sm:$0xff]
    %v1970 = vld [vmem:[#allocation9 + $0x458] sm:$0xff]
    %v1971 = vld [vmem:[#allocation9 + $0x460] sm:$0xff]
    %v1972 = vld [vmem:[#allocation9 + $0x468] sm:$0xff]
    %v1973 = vld [vmem:[#allocation9 + $0x470] sm:$0xff]
    %v1974 = vld [vmem:[#allocation9 + $0x478] sm:$0xff]
    %v1975 = vld [vmem:[#allocation9 + $0x480] sm:$0xff]
    %v1976 = vld [vmem:[#allocation9 + $0x488] sm:$0xff]
    %v1977 = vld [vmem:[#allocation9 + $0x490] sm:$0xff]
    %v1978 = vld [vmem:[#allocation9 + $0x498] sm:$0xff]
    %v1979 = vld [vmem:[#allocation9 + $0x4a0] sm:$0xff]
    %v1980 = vld [vmem:[#allocation9 + $0x4a8] sm:$0xff]
    %v1981 = vld [vmem:[#allocation9 + $0x4b0] sm:$0xff]
    %v1982 = vld [vmem:[#allocation9 + $0x4b8] sm:$0xff]
    %v1983 = vld [vmem:[#allocation9 + $0x4c0] sm:$0xff]
    %v1984 = vld [vmem:[#allocation9 + $0x4c8] sm:$0xff]
    %v1985 = vld [vmem:[#allocation9 + $0x4d0] sm:$0xff]
    %v1986 = vld [vmem:[#allocation9 + $0x4d8] sm:$0xff]
    %v1987 = vld [vmem:[#allocation9 + $0x4e0] sm:$0xff]
    %v1988 = vld [vmem:[#allocation9 + $0x4e8] sm:$0xff]
    %v1989 = vld [vmem:[#allocation9 + $0x4f0] sm:$0xff]
    %v1990 = vld [vmem:[#allocation9 + $0x4f8] sm:$0xff]
    %v1991 = vld [vmem:[#allocation9 + $0x500] sm:$0xff]
    %v1992 = vld [vmem:[#allocation9 + $0x508] sm:$0xff]
    %v1993 = vld [vmem:[#allocation9 + $0x510] sm:$0xff]
    %v1994 = vld [vmem:[#allocation9 + $0x518] sm:$0xff]
    %v1995 = vld [vmem:[#allocation9 + $0x520] sm:$0xff]
    %v1996 = vld [vmem:[#allocation9 + $0x528] sm:$0xff]
    %v1997 = vld [vmem:[#allocation9 + $0x530] sm:$0xff]
    %v1998 = vld [vmem:[#allocation9 + $0x538] sm:$0xff]
    %v1999 = vld [vmem:[#allocation9 + $0x540] sm:$0xff]
    %v2000 = vld [vmem:[#allocation9 + $0x548] sm:$0xff]
    %v2001 = vld [vmem:[#allocation9 + $0x550] sm:$0xff]
    %v2002 = vld [vmem:[#allocation9 + $0x558] sm:$0xff]
    %v2003 = vld [vmem:[#allocation9 + $0x560] sm:$0xff]
    %v2004 = vld [vmem:[#allocation9 + $0x568] sm:$0xff]
    %v2005 = vld [vmem:[#allocation9 + $0x570] sm:$0xff]
    %v2006 = vld [vmem:[#allocation9 + $0x578] sm:$0xff]
    %v2007 = vld [vmem:[#allocation9 + $0x580] sm:$0xff]
    %v2008 = vld [vmem:[#allocation9 + $0x588] sm:$0xff]
    %v2009 = vld [vmem:[#allocation9 + $0x590] sm:$0xff]
    %v2010 = vld [vmem:[#allocation9 + $0x598] sm:$0xff]
    %v2011 = vld [vmem:[#allocation9 + $0x5a0] sm:$0xff]
    %v2012 = vld [vmem:[#allocation9 + $0x5a8] sm:$0xff]
    %v2013 = vld [vmem:[#allocation9 + $0x5b0] sm:$0xff]
    %v2014 = vld [vmem:[#allocation9 + $0x5b8] sm:$0xff]
    %v2015 = vld [vmem:[#allocation9 + $0x5c0] sm:$0xff]
    %v2016 = vld [vmem:[#allocation9 + $0x5c8] sm:$0xff]
    %v2017 = vld [vmem:[#allocation9 + $0x5d0] sm:$0xff]
    %v2018 = vld [vmem:[#allocation9 + $0x5d8] sm:$0xff]
    %v2019 = vld [vmem:[#allocation9 + $0x5e0] sm:$0xff]
    %v2020 = vld [vmem:[#allocation9 + $0x5e8] sm:$0xff]
    %v2021 = vld [vmem:[#allocation9 + $0x5f0] sm:$0xff]
    %v2022 = vld [vmem:[#allocation9 + $0x5f8] sm:$0xff]
    %v2023 = vld [vmem:[#allocation9 + $0x600] sm:$0xff]
    %v2024 = vld [vmem:[#allocation9 + $0x608] sm:$0xff]
    %v2025 = vld [vmem:[#allocation9 + $0x610] sm:$0xff]
    %v2026 = vld [vmem:[#allocation9 + $0x618] sm:$0xff]
    %v2027 = vld [vmem:[#allocation9 + $0x620] sm:$0xff]
    %v2028 = vld [vmem:[#allocation9 + $0x628] sm:$0xff]
    %v2029 = vld [vmem:[#allocation9 + $0x630] sm:$0xff]
    %v2030 = vld [vmem:[#allocation9 + $0x638] sm:$0xff]
    %v2031 = vld [vmem:[#allocation9 + $0x640] sm:$0xff]
    %v2032 = vld [vmem:[#allocation9 + $0x648] sm:$0xff]
    %v2033 = vld [vmem:[#allocation9 + $0x650] sm:$0xff]
    %v2034 = vld [vmem:[#allocation9 + $0x658] sm:$0xff]
    %v2035 = vld [vmem:[#allocation9 + $0x660] sm:$0xff]
    %v2036 = vld [vmem:[#allocation9 + $0x668] sm:$0xff]
    %v2037 = vld [vmem:[#allocation9 + $0x670] sm:$0xff]
    %v2038 = vld [vmem:[#allocation9 + $0x678] sm:$0xff]
    %v2039 = vld [vmem:[#allocation9 + $0x680] sm:$0xff]
    %v2040 = vld [vmem:[#allocation9 + $0x688] sm:$0xff]
    %v2041 = vld [vmem:[#allocation9 + $0x690] sm:$0xff]
    %v2042 = vld [vmem:[#allocation9 + $0x698] sm:$0xff]
    %v2043 = vld [vmem:[#allocation9 + $0x6a0] sm:$0xff]
    %v2044 = vld [vmem:[#allocation9 + $0x6a8] sm:$0xff]
    %v2045 = vld [vmem:[#allocation9 + $0x6b0] sm:$0xff]
    %v2046 = vld [vmem:[#allocation9 + $0x6b8] sm:$0xff]
    %v2047 = vld [vmem:[#allocation9 + $0x6c0] sm:$0xff]
    %v2048 = vld [vmem:[#allocation9 + $0x6c8] sm:$0xff]
    %v2049 = vld [vmem:[#allocation9 + $0x6d0] sm:$0xff]
    %v2050 = vld [vmem:[#allocation9 + $0x6d8] sm:$0xff]
    %v2051 = vld [vmem:[#allocation9 + $0x6e0] sm:$0xff]
    %v2052 = vld [vmem:[#allocation9 + $0x6e8] sm:$0xff]
    %v2053 = vld [vmem:[#allocation9 + $0x6f0] sm:$0xff]
    %v2054 = vld [vmem:[#allocation9 + $0x6f8] sm:$0xff]
    %v2055 = vld [vmem:[#allocation9 + $0x700] sm:$0xff]
    %v2056 = vld [vmem:[#allocation9 + $0x708] sm:$0xff]
    %v2057 = vld [vmem:[#allocation9 + $0x710] sm:$0xff]
    %v2058 = vld [vmem:[#allocation9 + $0x718] sm:$0xff]
    %v2059 = vld [vmem:[#allocation9 + $0x720] sm:$0xff]
    %v2060 = vld [vmem:[#allocation9 + $0x728] sm:$0xff]
    %v2061 = vld [vmem:[#allocation9 + $0x730] sm:$0xff]
    %v2062 = vld [vmem:[#allocation9 + $0x738] sm:$0xff]
    %v2063 = vld [vmem:[#allocation9 + $0x740] sm:$0xff]
    %v2064 = vld [vmem:[#allocation9 + $0x748] sm:$0xff]
    %v2065 = vld [vmem:[#allocation9 + $0x750] sm:$0xff]
    %v2066 = vld [vmem:[#allocation9 + $0x758] sm:$0xff]
    %v2067 = vld [vmem:[#allocation9 + $0x760] sm:$0xff]
    %v2068 = vld [vmem:[#allocation9 + $0x768] sm:$0xff]
    %v2069 = vld [vmem:[#allocation9 + $0x770] sm:$0xff]
    %v2070 = vld [vmem:[#allocation9 + $0x778] sm:$0xff]
    %v2071 = vld [vmem:[#allocation9 + $0x780] sm:$0xff]
    %v2072 = vld [vmem:[#allocation9 + $0x788] sm:$0xff]
    %v2073 = vld [vmem:[#allocation9 + $0x790] sm:$0xff]
    %v2074 = vld [vmem:[#allocation9 + $0x798] sm:$0xff]
    %v2075 = vld [vmem:[#allocation9 + $0x7a0] sm:$0xff]
    %v2076 = vld [vmem:[#allocation9 + $0x7a8] sm:$0xff]
    %v2077 = vld [vmem:[#allocation9 + $0x7b0] sm:$0xff]
    %v2078 = vld [vmem:[#allocation9 + $0x7b8] sm:$0xff]
    %v2079 = vld [vmem:[#allocation9 + $0x7c0] sm:$0xff]
    %v2080 = vld [vmem:[#allocation9 + $0x7c8] sm:$0xff]
    %v2081 = vld [vmem:[#allocation9 + $0x7d0] sm:$0xff]
    %v2082 = vld [vmem:[#allocation9 + $0x7d8] sm:$0xff]
    %v2083 = vld [vmem:[#allocation9 + $0x7e0] sm:$0xff]
    %v2084 = vld [vmem:[#allocation9 + $0x7e8] sm:$0xff]
    %v2085 = vld [vmem:[#allocation9 + $0x7f0] sm:$0xff]
    %v2086 = vld [vmem:[#allocation9 + $0x7f8] sm:$0xff]
    %v2087 = vld [vmem:[#allocation9 + $0x800] sm:$0xff]
    %v2088 = vld [vmem:[#allocation9 + $0x808] sm:$0xff]
    %v2089 = vld [vmem:[#allocation9 + $0x810] sm:$0xff]
    %v2090 = vld [vmem:[#allocation9 + $0x818] sm:$0xff]
    %v2091 = vld [vmem:[#allocation9 + $0x820] sm:$0xff]
    %v2092 = vld [vmem:[#allocation9 + $0x828] sm:$0xff]
    %v2093 = vld [vmem:[#allocation9 + $0x830] sm:$0xff]
    %v2094 = vld [vmem:[#allocation9 + $0x838] sm:$0xff]
    %v2095 = vld [vmem:[#allocation9 + $0x840] sm:$0xff]
    %v2096 = vld [vmem:[#allocation9 + $0x848] sm:$0xff]
    %v2097 = vld [vmem:[#allocation9 + $0x850] sm:$0xff]
    %v2098 = vld [vmem:[#allocation9 + $0x858] sm:$0xff]
    %v2099 = vld [vmem:[#allocation9 + $0x860] sm:$0xff]
    %v2100 = vld [vmem:[#allocation9 + $0x868] sm:$0xff]
    %v2101 = vld [vmem:[#allocation9 + $0x870] sm:$0xff]
    %v2102 = vld [vmem:[#allocation9 + $0x878] sm:$0xff]
    %v2103 = vld [vmem:[#allocation9 + $0x880] sm:$0xff]
    %v2104 = vld [vmem:[#allocation9 + $0x888] sm:$0xff]
    %v2105 = vld [vmem:[#allocation9 + $0x890] sm:$0xff]
    %v2106 = vld [vmem:[#allocation9 + $0x898] sm:$0xff]
    %v2107 = vld [vmem:[#allocation9 + $0x8a0] sm:$0xff]
    %v2108 = vld [vmem:[#allocation9 + $0x8a8] sm:$0xff]
    %v2109 = vld [vmem:[#allocation9 + $0x8b0] sm:$0xff]
    %v2110 = vld [vmem:[#allocation9 + $0x8b8] sm:$0xff]
    %v2111 = vld [vmem:[#allocation9 + $0x8c0] sm:$0xff]
    %v2112 = vld [vmem:[#allocation9 + $0x8c8] sm:$0xff]
    %v2113 = vld [vmem:[#allocation9 + $0x8d0] sm:$0xff]
    %v2114 = vld [vmem:[#allocation9 + $0x8d8] sm:$0xff]
    %v2115 = vld [vmem:[#allocation9 + $0x8e0] sm:$0xff]
    %v2116 = vld [vmem:[#allocation9 + $0x8e8] sm:$0xff]
    %v2117 = vld [vmem:[#allocation9 + $0x8f0] sm:$0xff]
    %v2118 = vld [vmem:[#allocation9 + $0x8f8] sm:$0xff]
    %v2119 = vld [vmem:[#allocation9 + $0x900] sm:$0xff]
    %v2120 = vld [vmem:[#allocation9 + $0x908] sm:$0xff]
    %v2121 = vld [vmem:[#allocation9 + $0x910] sm:$0xff]
    %v2122 = vld [vmem:[#allocation9 + $0x918] sm:$0xff]
    %v2123 = vld [vmem:[#allocation9 + $0x920] sm:$0xff]
    %v2124 = vld [vmem:[#allocation9 + $0x928] sm:$0xff]
    %v2125 = vld [vmem:[#allocation9 + $0x930] sm:$0xff]
    %v2126 = vld [vmem:[#allocation9 + $0x938] sm:$0xff]
    %v2127 = vld [vmem:[#allocation9 + $0x940] sm:$0xff]
    %v2128 = vld [vmem:[#allocation9 + $0x948] sm:$0xff]
    %v2129 = vld [vmem:[#allocation9 + $0x950] sm:$0xff]
    %v2130 = vld [vmem:[#allocation9 + $0x958] sm:$0xff]
    %v2131 = vld [vmem:[#allocation9 + $0x960] sm:$0xff]
    %v2132 = vld [vmem:[#allocation9 + $0x968] sm:$0xff]
    %v2133 = vld [vmem:[#allocation9 + $0x970] sm:$0xff]
    %v2134 = vld [vmem:[#allocation9 + $0x978] sm:$0xff]
    %v2135 = vld [vmem:[#allocation9 + $0x980] sm:$0xff]
    %v2136 = vld [vmem:[#allocation9 + $0x988] sm:$0xff]
    %v2137 = vld [vmem:[#allocation9 + $0x990] sm:$0xff]
    %v2138 = vld [vmem:[#allocation9 + $0x998] sm:$0xff]
    %v2139 = vld [vmem:[#allocation9 + $0x9a0] sm:$0xff]
    %v2140 = vld [vmem:[#allocation9 + $0x9a8] sm:$0xff]
    %v2141 = vld [vmem:[#allocation9 + $0x9b0] sm:$0xff]
    %v2142 = vld [vmem:[#allocation9 + $0x9b8] sm:$0xff]
    %v2143 = vld [vmem:[#allocation9 + $0x9c0] sm:$0xff]
    %v2144 = vld [vmem:[#allocation9 + $0x9c8] sm:$0xff]
    %v2145 = vld [vmem:[#allocation9 + $0x9d0] sm:$0xff]
    %v2146 = vld [vmem:[#allocation9 + $0x9d8] sm:$0xff]
    %v2147 = vld [vmem:[#allocation9 + $0x9e0] sm:$0xff]
    %v2148 = vld [vmem:[#allocation9 + $0x9e8] sm:$0xff]
    %v2149 = vld [vmem:[#allocation9 + $0x9f0] sm:$0xff]
    %v2150 = vld [vmem:[#allocation9 + $0x9f8] sm:$0xff]
    %v2151 = vld [vmem:[#allocation9 + $0xa00] sm:$0xff]
    %v2152 = vld [vmem:[#allocation9 + $0xa08] sm:$0xff]
    %v2153 = vld [vmem:[#allocation9 + $0xa10] sm:$0xff]
    %v2154 = vld [vmem:[#allocation9 + $0xa18] sm:$0xff]
    %v2155 = vld [vmem:[#allocation9 + $0xa20] sm:$0xff]
    %v2156 = vld [vmem:[#allocation9 + $0xa28] sm:$0xff]
    %v2157 = vld [vmem:[#allocation9 + $0xa30] sm:$0xff]
    %v2158 = vld [vmem:[#allocation9 + $0xa38] sm:$0xff]
    %v2159 = vld [vmem:[#allocation9 + $0xa40] sm:$0xff]
    %v2160 = vld [vmem:[#allocation9 + $0xa48] sm:$0xff]
    %v2161 = vld [vmem:[#allocation9 + $0xa50] sm:$0xff]
    %v2162 = vld [vmem:[#allocation9 + $0xa58] sm:$0xff]
    %v2163 = vld [vmem:[#allocation9 + $0xa60] sm:$0xff]
    %v2164 = vld [vmem:[#allocation9 + $0xa68] sm:$0xff]
    %v2165 = vld [vmem:[#allocation9 + $0xa70] sm:$0xff]
    %v2166 = vld [vmem:[#allocation9 + $0xa78] sm:$0xff]
    %v2167 = vld [vmem:[#allocation9 + $0xa80] sm:$0xff]
    %v2168 = vld [vmem:[#allocation9 + $0xa88] sm:$0xff]
    %v2169 = vld [vmem:[#allocation9 + $0xa90] sm:$0xff]
    %v2170 = vld [vmem:[#allocation9 + $0xa98] sm:$0xff]
    %v2171 = vld [vmem:[#allocation9 + $0xaa0] sm:$0xff]
    %v2172 = vld [vmem:[#allocation9 + $0xaa8] sm:$0xff]
    %v2173 = vld [vmem:[#allocation9 + $0xab0] sm:$0xff]
    %v2174 = vld [vmem:[#allocation9 + $0xab8] sm:$0xff]
    %v2175 = vld [vmem:[#allocation9 + $0xac0] sm:$0xff]
    %v2176 = vld [vmem:[#allocation9 + $0xac8] sm:$0xff]
    %v2177 = vld [vmem:[#allocation9 + $0xad0] sm:$0xff]
    %v2178 = vld [vmem:[#allocation9 + $0xad8] sm:$0xff]
    %v2179 = vld [vmem:[#allocation9 + $0xae0] sm:$0xff]
    %v2180 = vld [vmem:[#allocation9 + $0xae8] sm:$0xff]
    %v2181 = vld [vmem:[#allocation9 + $0xaf0] sm:$0xff]
    %v2182 = vld [vmem:[#allocation9 + $0xaf8] sm:$0xff]
    %v2183 = vld [vmem:[#allocation9 + $0xb00] sm:$0xff]
    %v2184 = vld [vmem:[#allocation9 + $0xb08] sm:$0xff]
    %v2185 = vld [vmem:[#allocation9 + $0xb10] sm:$0xff]
    %v2186 = vld [vmem:[#allocation9 + $0xb18] sm:$0xff]
    %v2187 = vld [vmem:[#allocation9 + $0xb20] sm:$0xff]
    %v2188 = vld [vmem:[#allocation9 + $0xb28] sm:$0xff]
    %v2189 = vld [vmem:[#allocation9 + $0xb30] sm:$0xff]
    %v2190 = vld [vmem:[#allocation9 + $0xb38] sm:$0xff]
    %v2191 = vld [vmem:[#allocation9 + $0xb40] sm:$0xff]
    %v2192 = vld [vmem:[#allocation9 + $0xb48] sm:$0xff]
    %v2193 = vld [vmem:[#allocation9 + $0xb50] sm:$0xff]
    %v2194 = vld [vmem:[#allocation9 + $0xb58] sm:$0xff]
    %v2195 = vld [vmem:[#allocation9 + $0xb60] sm:$0xff]
    %v2196 = vld [vmem:[#allocation9 + $0xb68] sm:$0xff]
    %v2197 = vld [vmem:[#allocation9 + $0xb70] sm:$0xff]
    %v2198 = vld [vmem:[#allocation9 + $0xb78] sm:$0xff]
    %v2199 = vld [vmem:[#allocation9 + $0xb80] sm:$0xff]
    %v2200 = vld [vmem:[#allocation9 + $0xb88] sm:$0xff]
    %v2201 = vld [vmem:[#allocation9 + $0xb90] sm:$0xff]
    %v2202 = vld [vmem:[#allocation9 + $0xb98] sm:$0xff]
    %v2203 = vld [vmem:[#allocation9 + $0xba0] sm:$0xff]
    %v2204 = vld [vmem:[#allocation9 + $0xba8] sm:$0xff]
    %v2205 = vld [vmem:[#allocation9 + $0xbb0] sm:$0xff]
    %v2206 = vld [vmem:[#allocation9 + $0xbb8] sm:$0xff]
    %v2207 = vld [vmem:[#allocation9 + $0xbc0] sm:$0xff]
    %v2208 = vld [vmem:[#allocation9 + $0xbc8] sm:$0xff]
    %v2209 = vld [vmem:[#allocation9 + $0xbd0] sm:$0xff]
    %v2210 = vld [vmem:[#allocation9 + $0xbd8] sm:$0xff]
    %v2211 = vld [vmem:[#allocation9 + $0xbe0] sm:$0xff]
    %v2212 = vld [vmem:[#allocation9 + $0xbe8] sm:$0xff]
    %v2213 = vld [vmem:[#allocation9 + $0xbf0] sm:$0xff]
    %v2214 = vld [vmem:[#allocation9 + $0xbf8] sm:$0xff]
    %v2215 = vld [vmem:[#allocation9 + $0xc00] sm:$0xff]
    %v2216 = vld [vmem:[#allocation9 + $0xc08] sm:$0xff]
    %v2217 = vld [vmem:[#allocation9 + $0xc10] sm:$0xff]
    %v2218 = vld [vmem:[#allocation9 + $0xc18] sm:$0xff]
    %v2219 = vld [vmem:[#allocation9 + $0xc20] sm:$0xff]
    %v2220 = vld [vmem:[#allocation9 + $0xc28] sm:$0xff]
    %v2221 = vld [vmem:[#allocation9 + $0xc30] sm:$0xff]
    %v2222 = vld [vmem:[#allocation9 + $0xc38] sm:$0xff]
    %v2223 = vld [vmem:[#allocation9 + $0xc40] sm:$0xff]
    %v2224 = vld [vmem:[#allocation9 + $0xc48] sm:$0xff]
    %v2225 = vld [vmem:[#allocation9 + $0xc50] sm:$0xff]
    %v2226 = vld [vmem:[#allocation9 + $0xc58] sm:$0xff]
    %v2227 = vld [vmem:[#allocation9 + $0xc60] sm:$0xff]
    %v2228 = vld [vmem:[#allocation9 + $0xc68] sm:$0xff]
    %v2229 = vld [vmem:[#allocation9 + $0xc70] sm:$0xff]
    %v2230 = vld [vmem:[#allocation9 + $0xc78] sm:$0xff]
    %v2231 = vld [vmem:[#allocation9 + $0xc80] sm:$0xff]
    %v2232 = vld [vmem:[#allocation9 + $0xc88] sm:$0xff]
    %v2233 = vld [vmem:[#allocation9 + $0xc90] sm:$0xff]
    %v2234 = vld [vmem:[#allocation9 + $0xc98] sm:$0xff]
    %v2235 = vld [vmem:[#allocation9 + $0xca0] sm:$0xff]
    %v2236 = vld [vmem:[#allocation9 + $0xca8] sm:$0xff]
    %v2237 = vld [vmem:[#allocation9 + $0xcb0] sm:$0xff]
    %v2238 = vld [vmem:[#allocation9 + $0xcb8] sm:$0xff]
    %v2239 = vld [vmem:[#allocation9 + $0xcc0] sm:$0xff]
    %v2240 = vld [vmem:[#allocation9 + $0xcc8] sm:$0xff]
    %v2241 = vld [vmem:[#allocation9 + $0xcd0] sm:$0xff]
    %v2242 = vld [vmem:[#allocation9 + $0xcd8] sm:$0xff]
    %v2243 = vld [vmem:[#allocation9 + $0xce0] sm:$0xff]
    %v2244 = vld [vmem:[#allocation9 + $0xce8] sm:$0xff]
    %v2245 = vld [vmem:[#allocation9 + $0xcf0] sm:$0xff]
    %v2246 = vld [vmem:[#allocation9 + $0xcf8] sm:$0xff]
    %v2247 = vld [vmem:[#allocation9 + $0xd00] sm:$0xff]
    %v2248 = vld [vmem:[#allocation9 + $0xd08] sm:$0xff]
    %v2249 = vld [vmem:[#allocation9 + $0xd10] sm:$0xff]
    %v2250 = vld [vmem:[#allocation9 + $0xd18] sm:$0xff]
    %v2251 = vld [vmem:[#allocation9 + $0xd20] sm:$0xff]
    %v2252 = vld [vmem:[#allocation9 + $0xd28] sm:$0xff]
    %v2253 = vld [vmem:[#allocation9 + $0xd30] sm:$0xff]
    %v2254 = vld [vmem:[#allocation9 + $0xd38] sm:$0xff]
    %v2255 = vld [vmem:[#allocation9 + $0xd40] sm:$0xff]
    %v2256 = vld [vmem:[#allocation9 + $0xd48] sm:$0xff]
    %v2257 = vld [vmem:[#allocation9 + $0xd50] sm:$0xff]
    %v2258 = vld [vmem:[#allocation9 + $0xd58] sm:$0xff]
    %v2259 = vld [vmem:[#allocation9 + $0xd60] sm:$0xff]
    %v2260 = vld [vmem:[#allocation9 + $0xd68] sm:$0xff]
    %v2261 = vld [vmem:[#allocation9 + $0xd70] sm:$0xff]
    %v2262 = vld [vmem:[#allocation9 + $0xd78] sm:$0xff]
    %v2263 = vld [vmem:[#allocation9 + $0xd80] sm:$0xff]
    %v2264 = vld [vmem:[#allocation9 + $0xd88] sm:$0xff]
    %v2265 = vld [vmem:[#allocation9 + $0xd90] sm:$0xff]
    %v2266 = vld [vmem:[#allocation9 + $0xd98] sm:$0xff]
    %v2267 = vld [vmem:[#allocation9 + $0xda0] sm:$0xff]
    %v2268 = vld [vmem:[#allocation9 + $0xda8] sm:$0xff]
    %v2269 = vld [vmem:[#allocation9 + $0xdb0] sm:$0xff]
    %v2270 = vld [vmem:[#allocation9 + $0xdb8] sm:$0xff]
    %v2271 = vld [vmem:[#allocation9 + $0xdc0] sm:$0xff]
    %v2272 = vld [vmem:[#allocation9 + $0xdc8] sm:$0xff]
    %v2273 = vld [vmem:[#allocation9 + $0xdd0] sm:$0xff]
    %v2274 = vld [vmem:[#allocation9 + $0xdd8] sm:$0xff]
    %v2275 = vld [vmem:[#allocation9 + $0xde0] sm:$0xff]
    %v2276 = vld [vmem:[#allocation9 + $0xde8] sm:$0xff]
    %v2277 = vld [vmem:[#allocation9 + $0xdf0] sm:$0xff]
    %v2278 = vld [vmem:[#allocation9 + $0xdf8] sm:$0xff]
    %v2279 = vld [vmem:[#allocation9 + $0xe00] sm:$0xff]
    %v2280 = vld [vmem:[#allocation9 + $0xe08] sm:$0xff]
    %v2281 = vld [vmem:[#allocation9 + $0xe10] sm:$0xff]
    %v2282 = vld [vmem:[#allocation9 + $0xe18] sm:$0xff]
    %v2283 = vld [vmem:[#allocation9 + $0xe20] sm:$0xff]
    %v2284 = vld [vmem:[#allocation9 + $0xe28] sm:$0xff]
    %v2285 = vld [vmem:[#allocation9 + $0xe30] sm:$0xff]
    %v2286 = vld [vmem:[#allocation9 + $0xe38] sm:$0xff]
    %v2287 = vld [vmem:[#allocation9 + $0xe40] sm:$0xff]
    %v2288 = vld [vmem:[#allocation9 + $0xe48] sm:$0xff]
    %v2289 = vld [vmem:[#allocation9 + $0xe50] sm:$0xff]
    %v2290 = vld [vmem:[#allocation9 + $0xe58] sm:$0xff]
    %v2291 = vld [vmem:[#allocation9 + $0xe60] sm:$0xff]
    %v2292 = vld [vmem:[#allocation9 + $0xe68] sm:$0xff]
    %v2293 = vld [vmem:[#allocation9 + $0xe70] sm:$0xff]
    %v2294 = vld [vmem:[#allocation9 + $0xe78] sm:$0xff]
    %v2295 = vld [vmem:[#allocation9 + $0xe80] sm:$0xff]
    %v2296 = vld [vmem:[#allocation9 + $0xe88] sm:$0xff]
    %v2297 = vld [vmem:[#allocation9 + $0xe90] sm:$0xff]
    %v2298 = vld [vmem:[#allocation9 + $0xe98] sm:$0xff]
    %v2299 = vld [vmem:[#allocation9 + $0xea0] sm:$0xff]
    %v2300 = vld [vmem:[#allocation9 + $0xea8] sm:$0xff]
    %v2301 = vld [vmem:[#allocation9 + $0xeb0] sm:$0xff]
    %v2302 = vld [vmem:[#allocation9 + $0xeb8] sm:$0xff]
    %v2303 = vld [vmem:[#allocation9 + $0xec0] sm:$0xff]
    %v2304 = vld [vmem:[#allocation9 + $0xec8] sm:$0xff]
    %v2305 = vld [vmem:[#allocation9 + $0xed0] sm:$0xff]
    %v2306 = vld [vmem:[#allocation9 + $0xed8] sm:$0xff]
    %v2307 = vld [vmem:[#allocation9 + $0xee0] sm:$0xff]
    %v2308 = vld [vmem:[#allocation9 + $0xee8] sm:$0xff]
    %v2309 = vld [vmem:[#allocation9 + $0xef0] sm:$0xff]
    %v2310 = vld [vmem:[#allocation9 + $0xef8] sm:$0xff]
    %v2311 = vld [vmem:[#allocation9 + $0xf00] sm:$0xff]
    %v2312 = vld [vmem:[#allocation9 + $0xf08] sm:$0xff]
    %v2313 = vld [vmem:[#allocation9 + $0xf10] sm:$0xff]
    %v2314 = vld [vmem:[#allocation9 + $0xf18] sm:$0xff]
    %v2315 = vld [vmem:[#allocation9 + $0xf20] sm:$0xff]
    %v2316 = vld [vmem:[#allocation9 + $0xf28] sm:$0xff]
    %v2317 = vld [vmem:[#allocation9 + $0xf30] sm:$0xff]
    %v2318 = vld [vmem:[#allocation9 + $0xf38] sm:$0xff]
    %v2319 = vld [vmem:[#allocation9 + $0xf40] sm:$0xff]
    %v2320 = vld [vmem:[#allocation9 + $0xf48] sm:$0xff]
    %v2321 = vld [vmem:[#allocation9 + $0xf50] sm:$0xff]
    %v2322 = vld [vmem:[#allocation9 + $0xf58] sm:$0xff]
    %v2323 = vld [vmem:[#allocation9 + $0xf60] sm:$0xff]
    %v2324 = vld [vmem:[#allocation9 + $0xf68] sm:$0xff]
    %v2325 = vld [vmem:[#allocation9 + $0xf70] sm:$0xff]
    %v2326 = vld [vmem:[#allocation9 + $0xf78] sm:$0xff]
    %v2327 = vld [vmem:[#allocation9 + $0xf80] sm:$0xff]
    %v2328 = vld [vmem:[#allocation9 + $0xf88] sm:$0xff]
    %v2329 = vld [vmem:[#allocation9 + $0xf90] sm:$0xff]
    %v2330 = vld [vmem:[#allocation9 + $0xf98] sm:$0xff]
    %v2331 = vld [vmem:[#allocation9 + $0xfa0] sm:$0xff]
    %v2332 = vld [vmem:[#allocation9 + $0xfa8] sm:$0xff]
    %v2333 = vld [vmem:[#allocation9 + $0xfb0] sm:$0xff]
    %v2334 = vld [vmem:[#allocation9 + $0xfb8] sm:$0xff]
    %v2335 = vld [vmem:[#allocation9 + $0xfc0] sm:$0xff]
    %v2336 = vld [vmem:[#allocation9 + $0xfc8] sm:$0xff]
    %v2337 = vld [vmem:[#allocation9 + $0xfd0] sm:$0xff]
    %v2338 = vld [vmem:[#allocation9 + $0xfd8] sm:$0xff]
    %v2339 = vld [vmem:[#allocation9 + $0xfe0] sm:$0xff]
    %v2340 = vld [vmem:[#allocation9 + $0xfe8] sm:$0xff]
    %v2341 = vld [vmem:[#allocation9 + $0xff0] sm:$0xff]
    %v2342 = vld [vmem:[#allocation9 + $0xff8] sm:$0xff]
    %v2343 = vld [vmem:[#allocation10] sm:$0xff]
    %v2345 = vlaneseq
    %v2346 = vshrl.u32 %v2345, 7
    %v2347 = vsub.s32 0, %v2346
    %v2348 = vrot.slane %v2343, %v2347
    %v2349 = vlaneseq
    %v2350 = vshrl.u32 %v2349, 7
    %v2351 = vsub.s32 1, %v2350
    %v2352 = vrot.slane %v2343, %v2351
    %v2353 = vlaneseq
    %v2354 = vshrl.u32 %v2353, 7
    %v2355 = vsub.s32 2, %v2354
    %v2356 = vrot.slane %v2343, %v2355
    %v2357 = vlaneseq
    %v2358 = vshrl.u32 %v2357, 7
    %v2359 = vsub.s32 3, %v2358
    %v2360 = vrot.slane %v2343, %v2359
    %v2361 = vlaneseq
    %v2362 = vshrl.u32 %v2361, 7
    %v2363 = vsub.s32 4, %v2362
    %v2364 = vrot.slane %v2343, %v2363
    %v2365 = vlaneseq
    %v2366 = vshrl.u32 %v2365, 7
    %v2367 = vsub.s32 5, %v2366
    %v2368 = vrot.slane %v2343, %v2367
    %v2369 = vlaneseq
    %v2370 = vshrl.u32 %v2369, 7
    %v2371 = vsub.s32 6, %v2370
    %v2372 = vrot.slane %v2343, %v2371
    %v2373 = vlaneseq
    %v2374 = vshrl.u32 %v2373, 7
    %v2375 = vsub.s32 7, %v2374
    %v2376 = vrot.slane %v2343, %v2375
    %2385 = vmatprep.subr.mxu0 %v1832
    %2386 = vmatpush1.msra.mxu0 %v1831
    %2387 = vmatprep.subr.mxu0 %v1840
    %2388 = vmatpush1.msra.mxu0 %v1839
    %2389 = vmatprep.subr.mxu0 %v1848
    %2390 = vmatpush1.msra.mxu0 %v1847
    %2391 = vmatprep.subr.mxu0 %v1856
    %2392 = vmatpush1.msra.mxu0 %v1855
    %2393 = vmatprep.subr.mxu0 %v1864
    %2394 = vmatpush1.msra.mxu0 %v1863
    %2395 = vmatprep.subr.mxu0 %v1872
    %2396 = vmatpush1.msra.mxu0 %v1871
    %2397 = vmatprep.subr.mxu0 %v1880
    %2398 = vmatpush1.msra.mxu0 %v1879
    %2399 = vmatprep.subr.mxu0 %v1888
    %2400 = vmatpush1.msra.mxu0 %v1887
    %2401 = vmatprep.subr.mxu0 %v1896
    %2402 = vmatpush1.msra.mxu0 %v1895
    %2403 = vmatprep.subr.mxu0 %v1904
    %2404 = vmatpush1.msra.mxu0 %v1903
    %2405 = vmatprep.subr.mxu0 %v1912
    %2406 = vmatpush1.msra.mxu0 %v1911
    %2407 = vmatprep.subr.mxu0 %v1920
    %2408 = vmatpush1.msra.mxu0 %v1919
    %2409 = vmatprep.subr.mxu0 %v1928
    %2410 = vmatpush1.msra.mxu0 %v1927
    %2411 = vmatprep.subr.mxu0 %v1936
    %2412 = vmatpush1.msra.mxu0 %v1935
    %2413 = vmatprep.subr.mxu0 %v1944
    %2414 = vmatpush1.msra.mxu0 %v1943
    %2415 = vmatprep.subr.mxu0 %v1952
    %2416 = vmatpush1.msra.mxu0 %v1951
    %2417 = vmatprep.subr.mxu0 %v1960
    %2418 = vmatpush1.msra.mxu0 %v1959
    %2419 = vmatprep.subr.mxu0 %v1968
    %2420 = vmatpush1.msra.mxu0 %v1967
    %2421 = vmatprep.subr.mxu0 %v1976
    %2422 = vmatpush1.msra.mxu0 %v1975
    %2423 = vmatprep.subr.mxu0 %v1984
    %2424 = vmatpush1.msra.mxu0 %v1983
    %2425 = vmatprep.subr.mxu0 %v1992
    %2426 = vmatpush1.msra.mxu0 %v1991
    %2427 = vmatprep.subr.mxu0 %v2000
    %2428 = vmatpush1.msra.mxu0 %v1999
    %2429 = vmatprep.subr.mxu0 %v2008
    %2430 = vmatpush1.msra.mxu0 %v2007
    %2431 = vmatprep.subr.mxu0 %v2016
    %2432 = vmatpush1.msra.mxu0 %v2015
    %2433 = vmatprep.subr.mxu0 %v2024
    %2434 = vmatpush1.msra.mxu0 %v2023
    %2435 = vmatprep.subr.mxu0 %v2032
    %2436 = vmatpush1.msra.mxu0 %v2031
    %2437 = vmatprep.subr.mxu0 %v2040
    %2438 = vmatpush1.msra.mxu0 %v2039
    %2439 = vmatprep.subr.mxu0 %v2048
    %2440 = vmatpush1.msra.mxu0 %v2047
    %2441 = vmatprep.subr.mxu0 %v2056
    %2442 = vmatpush1.msra.mxu0 %v2055
    %2443 = vmatprep.subr.mxu0 %v2064
    %2444 = vmatpush1.msra.mxu0 %v2063
    %2445 = vmatprep.subr.mxu0 %v2072
    %2446 = vmatpush1.msra.mxu0 %v2071
    %2447 = vmatprep.subr.mxu0 %v2080
    %2448 = vmatpush1.msra.mxu0 %v2079
    %2449 = vmatprep.mubr.f32.mxu0 %v1828
    %2450 = vmatmul.mubr.f32.gmra.mrb[0].mxu0 %v1827
    %v2451 = vpop.f32.mrb[0].mxu0
    %v2452 = vadd.f32 %v2348, %v2451
    %v2453 = vpop.f32.mrb[0].mxu0
    %v2454 = vadd.f32 %v2352, %v2453
    %2455 = vdwg.mxu0
    %2456 = vmatprep.subr.mxu0 %v2088
    %2457 = vmatpush1.msra.mxu0 %v2087
    %2458 = vmatprep.subr.mxu0 %v2096
    %2459 = vmatpush1.msra.mxu0 %v2095
    %2460 = vmatprep.subr.mxu0 %v2104
    %2461 = vmatpush1.msra.mxu0 %v2103
    %2462 = vmatprep.subr.mxu0 %v2112
    %2463 = vmatpush1.msra.mxu0 %v2111
    %2464 = vmatprep.subr.mxu0 %v2120
    %2465 = vmatpush1.msra.mxu0 %v2119
    %2466 = vmatprep.subr.mxu0 %v2128
    %2467 = vmatpush1.msra.mxu0 %v2127
    %2468 = vmatprep.subr.mxu0 %v2136
    %2469 = vmatpush1.msra.mxu0 %v2135
    %2470 = vmatprep.subr.mxu0 %v2144
    %2471 = vmatpush1.msra.mxu0 %v2143
    %2472 = vmatprep.subr.mxu0 %v2152
    %2473 = vmatpush1.msra.mxu0 %v2151
    %2474 = vmatprep.subr.mxu0 %v2160
    %2475 = vmatpush1.msra.mxu0 %v2159
    %2476 = vmatprep.subr.mxu0 %v2168
    %2477 = vmatpush1.msra.mxu0 %v2167
    %2478 = vmatprep.subr.mxu0 %v2176
    %2479 = vmatpush1.msra.mxu0 %v2175
    %2480 = vmatprep.subr.mxu0 %v2184
    %2481 = vmatpush1.msra.mxu0 %v2183
    %2482 = vmatprep.subr.mxu0 %v2192
    %2483 = vmatpush1.msra.mxu0 %v2191
    %2484 = vmatprep.subr.mxu0 %v2200
    %2485 = vmatpush1.msra.mxu0 %v2199
    %2486 = vmatprep.subr.mxu0 %v2208
    %2487 = vmatpush1.msra.mxu0 %v2207
    %2488 = vmatprep.subr.mxu0 %v2216
    %2489 = vmatpush1.msra.mxu0 %v2215
    %2490 = vmatprep.subr.mxu0 %v2224
    %2491 = vmatpush1.msra.mxu0 %v2223
    %2492 = vmatprep.subr.mxu0 %v2232
    %2493 = vmatpush1.msra.mxu0 %v2231
    %2494 = vmatprep.subr.mxu0 %v2240
    %2495 = vmatpush1.msra.mxu0 %v2239
    %2496 = vmatprep.subr.mxu0 %v2248
    %2497 = vmatpush1.msra.mxu0 %v2247
    %2498 = vmatprep.subr.mxu0 %v2256
    %2499 = vmatpush1.msra.mxu0 %v2255
    %2500 = vmatprep.subr.mxu0 %v2264
    %2501 = vmatpush1.msra.mxu0 %v2263
    %2502 = vmatprep.subr.mxu0 %v2272
    %2503 = vmatpush1.msra.mxu0 %v2271
    %2504 = vmatprep.subr.mxu0 %v2280
    %2505 = vmatpush1.msra.mxu0 %v2279
    %2506 = vmatprep.subr.mxu0 %v2288
    %2507 = vmatpush1.msra.mxu0 %v2287
    %2508 = vmatprep.subr.mxu0 %v2296
    %2509 = vmatpush1.msra.mxu0 %v2295
    %2510 = vmatprep.subr.mxu0 %v2304
    %2511 = vmatpush1.msra.mxu0 %v2303
    %2512 = vmatprep.subr.mxu0 %v2312
    %2513 = vmatpush1.msra.mxu0 %v2311
    %2514 = vmatprep.subr.mxu0 %v2320
    %2515 = vmatpush1.msra.mxu0 %v2319
    %2516 = vmatprep.subr.mxu0 %v2328
    %2517 = vmatpush1.msra.mxu0 %v2327
    %2518 = vmatprep.subr.mxu0 %v2336
    %2519 = vmatpush1.msra.mxu0 %v2335
    %2520 = vmatprep.mubr.f32.mxu0 %v1830
    %2521 = vmatmul.mubr.f32.gmra.mrb[0].mxu0 %v1829
    %v2522 = vpop.f32.mrb[0].mxu0
    %v2523 = vadd.f32 %v2452, %v2522
    %v2524 = vpop.f32.mrb[0].mxu0
    %v2525 = vadd.f32 %v2454, %v2524
    %2526 = vdwg.mxu0
    %2527 = vmatprep.subr.mxu0 %v1834
    %2528 = vmatpush1.msra.mxu0 %v1833
    %2529 = vmatprep.subr.mxu0 %v1842
    %2530 = vmatpush1.msra.mxu0 %v1841
    %2531 = vmatprep.subr.mxu0 %v1850
    %2532 = vmatpush1.msra.mxu0 %v1849
    %2533 = vmatprep.subr.mxu0 %v1858
    %2534 = vmatpush1.msra.mxu0 %v1857
    %2535 = vmatprep.subr.mxu0 %v1866
    %2536 = vmatpush1.msra.mxu0 %v1865
    %2537 = vmatprep.subr.mxu0 %v1874
    %2538 = vmatpush1.msra.mxu0 %v1873
    %2539 = vmatprep.subr.mxu0 %v1882
    %2540 = vmatpush1.msra.mxu0 %v1881
    %2541 = vmatprep.subr.mxu0 %v1890
    %2542 = vmatpush1.msra.mxu0 %v1889
    %2543 = vmatprep.subr.mxu0 %v1898
    %2544 = vmatpush1.msra.mxu0 %v1897
    %2545 = vmatprep.subr.mxu0 %v1906
    %2546 = vmatpush1.msra.mxu0 %v1905
    %2547 = vmatprep.subr.mxu0 %v1914
    %2548 = vmatpush1.msra.mxu0 %v1913
    %2549 = vmatprep.subr.mxu0 %v1922
    %2550 = vmatpush1.msra.mxu0 %v1921
    %2551 = vmatprep.subr.mxu0 %v1930
    %2552 = vmatpush1.msra.mxu0 %v1929
    %2553 = vmatprep.subr.mxu0 %v1938
    %2554 = vmatpush1.msra.mxu0 %v1937
    %2555 = vmatprep.subr.mxu0 %v1946
    %2556 = vmatpush1.msra.mxu0 %v1945
    %2557 = vmatprep.subr.mxu0 %v1954
    %2558 = vmatpush1.msra.mxu0 %v1953
    %2559 = vmatprep.subr.mxu0 %v1962
    %2560 = vmatpush1.msra.mxu0 %v1961
    %2561 = vmatprep.subr.mxu0 %v1970
    %2562 = vmatpush1.msra.mxu0 %v1969
    %2563 = vmatprep.subr.mxu0 %v1978
    %2564 = vmatpush1.msra.mxu0 %v1977
    %2565 = vmatprep.subr.mxu0 %v1986
    %2566 = vmatpush1.msra.mxu0 %v1985
    %2567 = vmatprep.subr.mxu0 %v1994
    %2568 = vmatpush1.msra.mxu0 %v1993
    %2569 = vmatprep.subr.mxu0 %v2002
    %2570 = vmatpush1.msra.mxu0 %v2001
    %2571 = vmatprep.subr.mxu0 %v2010
    %2572 = vmatpush1.msra.mxu0 %v2009
    %2573 = vmatprep.subr.mxu0 %v2018
    %2574 = vmatpush1.msra.mxu0 %v2017
    %2575 = vmatprep.subr.mxu0 %v2026
    %2576 = vmatpush1.msra.mxu0 %v2025
    %2577 = vmatprep.subr.mxu0 %v2034
    %2578 = vmatpush1.msra.mxu0 %v2033
    %2579 = vmatprep.subr.mxu0 %v2042
    %2580 = vmatpush1.msra.mxu0 %v2041
    %2581 = vmatprep.subr.mxu0 %v2050
    %2582 = vmatpush1.msra.mxu0 %v2049
    %2583 = vmatprep.subr.mxu0 %v2058
    %2584 = vmatpush1.msra.mxu0 %v2057
    %2585 = vmatprep.subr.mxu0 %v2066
    %2586 = vmatpush1.msra.mxu0 %v2065
    %2587 = vmatprep.subr.mxu0 %v2074
    %2588 = vmatpush1.msra.mxu0 %v2073
    %2589 = vmatprep.subr.mxu0 %v2082
    %2590 = vmatpush1.msra.mxu0 %v2081
    %2591 = vmatprep.mubr.f32.mxu0 %v1828
    %2592 = vmatmul.mubr.f32.gmra.mrb[0].mxu0 %v1827
    %v2593 = vpop.f32.mrb[0].mxu0
    %v2594 = vadd.f32 %v2356, %v2593
    %v2595 = vpop.f32.mrb[0].mxu0
    %v2596 = vadd.f32 %v2360, %v2595
    %2597 = vdwg.mxu0
    %2598 = vmatprep.subr.mxu0 %v2090
    %2599 = vmatpush1.msra.mxu0 %v2089
    %2600 = vmatprep.subr.mxu0 %v2098
    %2601 = vmatpush1.msra.mxu0 %v2097
    %2602 = vmatprep.subr.mxu0 %v2106
    %2603 = vmatpush1.msra.mxu0 %v2105
    %2604 = vmatprep.subr.mxu0 %v2114
    %2605 = vmatpush1.msra.mxu0 %v2113
    %2606 = vmatprep.subr.mxu0 %v2122
    %2607 = vmatpush1.msra.mxu0 %v2121
    %2608 = vmatprep.subr.mxu0 %v2130
    %2609 = vmatpush1.msra.mxu0 %v2129
    %2610 = vmatprep.subr.mxu0 %v2138
    %2611 = vmatpush1.msra.mxu0 %v2137
    %2612 = vmatprep.subr.mxu0 %v2146
    %2613 = vmatpush1.msra.mxu0 %v2145
    %2614 = vmatprep.subr.mxu0 %v2154
    %2615 = vmatpush1.msra.mxu0 %v2153
    %2616 = vmatprep.subr.mxu0 %v2162
    %2617 = vmatpush1.msra.mxu0 %v2161
    %2618 = vmatprep.subr.mxu0 %v2170
    %2619 = vmatpush1.msra.mxu0 %v2169
    %2620 = vmatprep.subr.mxu0 %v2178
    %2621 = vmatpush1.msra.mxu0 %v2177
    %2622 = vmatprep.subr.mxu0 %v2186
    %2623 = vmatpush1.msra.mxu0 %v2185
    %2624 = vmatprep.subr.mxu0 %v2194
    %2625 = vmatpush1.msra.mxu0 %v2193
    %2626 = vmatprep.subr.mxu0 %v2202
    %2627 = vmatpush1.msra.mxu0 %v2201
    %2628 = vmatprep.subr.mxu0 %v2210
    %2629 = vmatpush1.msra.mxu0 %v2209
    %2630 = vmatprep.subr.mxu0 %v2218
    %2631 = vmatpush1.msra.mxu0 %v2217
    %2632 = vmatprep.subr.mxu0 %v2226
    %2633 = vmatpush1.msra.mxu0 %v2225
    %2634 = vmatprep.subr.mxu0 %v2234
    %2635 = vmatpush1.msra.mxu0 %v2233
    %2636 = vmatprep.subr.mxu0 %v2242
    %2637 = vmatpush1.msra.mxu0 %v2241
    %2638 = vmatprep.subr.mxu0 %v2250
    %2639 = vmatpush1.msra.mxu0 %v2249
    %2640 = vmatprep.subr.mxu0 %v2258
    %2641 = vmatpush1.msra.mxu0 %v2257
    %2642 = vmatprep.subr.mxu0 %v2266
    %2643 = vmatpush1.msra.mxu0 %v2265
    %2644 = vmatprep.subr.mxu0 %v2274
    %2645 = vmatpush1.msra.mxu0 %v2273
    %2646 = vmatprep.subr.mxu0 %v2282
    %2647 = vmatpush1.msra.mxu0 %v2281
    %2648 = vmatprep.subr.mxu0 %v2290
    %2649 = vmatpush1.msra.mxu0 %v2289
    %2650 = vmatprep.subr.mxu0 %v2298
    %2651 = vmatpush1.msra.mxu0 %v2297
    %2652 = vmatprep.subr.mxu0 %v2306
    %2653 = vmatpush1.msra.mxu0 %v2305
    %2654 = vmatprep.subr.mxu0 %v2314
    %2655 = vmatpush1.msra.mxu0 %v2313
    %2656 = vmatprep.subr.mxu0 %v2322
    %2657 = vmatpush1.msra.mxu0 %v2321
    %2658 = vmatprep.subr.mxu0 %v2330
    %2659 = vmatpush1.msra.mxu0 %v2329
    %2660 = vmatprep.subr.mxu0 %v2338
    %2661 = vmatpush1.msra.mxu0 %v2337
    %2662 = vmatprep.mubr.f32.mxu0 %v1830
    %2663 = vmatmul.mubr.f32.gmra.mrb[0].mxu0 %v1829
    %v2664 = vpop.f32.mrb[0].mxu0
    %v2665 = vadd.f32 %v2594, %v2664
    %v2666 = vpop.f32.mrb[0].mxu0
    %v2667 = vadd.f32 %v2596, %v2666
    %2668 = vdwg.mxu0
    %2669 = vmatprep.subr.mxu0 %v1836
    %2670 = vmatpush1.msra.mxu0 %v1835
    %2671 = vmatprep.subr.mxu0 %v1844
    %2672 = vmatpush1.msra.mxu0 %v1843
    %2673 = vmatprep.subr.mxu0 %v1852
    %2674 = vmatpush1.msra.mxu0 %v1851
    %2675 = vmatprep.subr.mxu0 %v1860
    %2676 = vmatpush1.msra.mxu0 %v1859
    %2677 = vmatprep.subr.mxu0 %v1868
    %2678 = vmatpush1.msra.mxu0 %v1867
    %2679 = vmatprep.subr.mxu0 %v1876
    %2680 = vmatpush1.msra.mxu0 %v1875
    %2681 = vmatprep.subr.mxu0 %v1884
    %2682 = vmatpush1.msra.mxu0 %v1883
    %2683 = vmatprep.subr.mxu0 %v1892
    %2684 = vmatpush1.msra.mxu0 %v1891
    %2685 = vmatprep.subr.mxu0 %v1900
    %2686 = vmatpush1.msra.mxu0 %v1899
    %2687 = vmatprep.subr.mxu0 %v1908
    %2688 = vmatpush1.msra.mxu0 %v1907
    %2689 = vmatprep.subr.mxu0 %v1916
    %2690 = vmatpush1.msra.mxu0 %v1915
    %2691 = vmatprep.subr.mxu0 %v1924
    %2692 = vmatpush1.msra.mxu0 %v1923
    %2693 = vmatprep.subr.mxu0 %v1932
    %2694 = vmatpush1.msra.mxu0 %v1931
    %2695 = vmatprep.subr.mxu0 %v1940
    %2696 = vmatpush1.msra.mxu0 %v1939
    %2697 = vmatprep.subr.mxu0 %v1948
    %2698 = vmatpush1.msra.mxu0 %v1947
    %2699 = vmatprep.subr.mxu0 %v1956
    %2700 = vmatpush1.msra.mxu0 %v1955
    %2701 = vmatprep.subr.mxu0 %v1964
    %2702 = vmatpush1.msra.mxu0 %v1963
    %2703 = vmatprep.subr.mxu0 %v1972
    %2704 = vmatpush1.msra.mxu0 %v1971
    %2705 = vmatprep.subr.mxu0 %v1980
    %2706 = vmatpush1.msra.mxu0 %v1979
    %2707 = vmatprep.subr.mxu0 %v1988
    %2708 = vmatpush1.msra.mxu0 %v1987
    %2709 = vmatprep.subr.mxu0 %v1996
    %2710 = vmatpush1.msra.mxu0 %v1995
    %2711 = vmatprep.subr.mxu0 %v2004
    %2712 = vmatpush1.msra.mxu0 %v2003
    %2713 = vmatprep.subr.mxu0 %v2012
    %2714 = vmatpush1.msra.mxu0 %v2011
    %2715 = vmatprep.subr.mxu0 %v2020
    %2716 = vmatpush1.msra.mxu0 %v2019
    %2717 = vmatprep.subr.mxu0 %v2028
    %2718 = vmatpush1.msra.mxu0 %v2027
    %2719 = vmatprep.subr.mxu0 %v2036
    %2720 = vmatpush1.msra.mxu0 %v2035
    %2721 = vmatprep.subr.mxu0 %v2044
    %2722 = vmatpush1.msra.mxu0 %v2043
    %2723 = vmatprep.subr.mxu0 %v2052
    %2724 = vmatpush1.msra.mxu0 %v2051
    %2725 = vmatprep.subr.mxu0 %v2060
    %2726 = vmatpush1.msra.mxu0 %v2059
    %2727 = vmatprep.subr.mxu0 %v2068
    %2728 = vmatpush1.msra.mxu0 %v2067
    %2729 = vmatprep.subr.mxu0 %v2076
    %2730 = vmatpush1.msra.mxu0 %v2075
    %2731 = vmatprep.subr.mxu0 %v2084
    %2732 = vmatpush1.msra.mxu0 %v2083
    %2733 = vmatprep.mubr.f32.mxu0 %v1828
    %2734 = vmatmul.mubr.f32.gmra.mrb[0].mxu0 %v1827
    %v2735 = vpop.f32.mrb[0].mxu0
    %v2736 = vadd.f32 %v2364, %v2735
    %v2737 = vpop.f32.mrb[0].mxu0
    %v2738 = vadd.f32 %v2368, %v2737
    %2739 = vdwg.mxu0
    %2740 = vmatprep.subr.mxu0 %v2092
    %2741 = vmatpush1.msra.mxu0 %v2091
    %2742 = vmatprep.subr.mxu0 %v2100
    %2743 = vmatpush1.msra.mxu0 %v2099
    %2744 = vmatprep.subr.mxu0 %v2108
    %2745 = vmatpush1.msra.mxu0 %v2107
    %2746 = vmatprep.subr.mxu0 %v2116
    %2747 = vmatpush1.msra.mxu0 %v2115
    %2748 = vmatprep.subr.mxu0 %v2124
    %2749 = vmatpush1.msra.mxu0 %v2123
    %2750 = vmatprep.subr.mxu0 %v2132
    %2751 = vmatpush1.msra.mxu0 %v2131
    %2752 = vmatprep.subr.mxu0 %v2140
    %2753 = vmatpush1.msra.mxu0 %v2139
    %2754 = vmatprep.subr.mxu0 %v2148
    %2755 = vmatpush1.msra.mxu0 %v2147
    %2756 = vmatprep.subr.mxu0 %v2156
    %2757 = vmatpush1.msra.mxu0 %v2155
    %2758 = vmatprep.subr.mxu0 %v2164
    %2759 = vmatpush1.msra.mxu0 %v2163
    %2760 = vmatprep.subr.mxu0 %v2172
    %2761 = vmatpush1.msra.mxu0 %v2171
    %2762 = vmatprep.subr.mxu0 %v2180
    %2763 = vmatpush1.msra.mxu0 %v2179
    %2764 = vmatprep.subr.mxu0 %v2188
    %2765 = vmatpush1.msra.mxu0 %v2187
    %2766 = vmatprep.subr.mxu0 %v2196
    %2767 = vmatpush1.msra.mxu0 %v2195
    %2768 = vmatprep.subr.mxu0 %v2204
    %2769 = vmatpush1.msra.mxu0 %v2203
    %2770 = vmatprep.subr.mxu0 %v2212
    %2771 = vmatpush1.msra.mxu0 %v2211
    %2772 = vmatprep.subr.mxu0 %v2220
    %2773 = vmatpush1.msra.mxu0 %v2219
    %2774 = vmatprep.subr.mxu0 %v2228
    %2775 = vmatpush1.msra.mxu0 %v2227
    %2776 = vmatprep.subr.mxu0 %v2236
    %2777 = vmatpush1.msra.mxu0 %v2235
    %2778 = vmatprep.subr.mxu0 %v2244
    %2779 = vmatpush1.msra.mxu0 %v2243
    %2780 = vmatprep.subr.mxu0 %v2252
    %2781 = vmatpush1.msra.mxu0 %v2251
    %2782 = vmatprep.subr.mxu0 %v2260
    %2783 = vmatpush1.msra.mxu0 %v2259
    %2784 = vmatprep.subr.mxu0 %v2268
    %2785 = vmatpush1.msra.mxu0 %v2267
    %2786 = vmatprep.subr.mxu0 %v2276
    %2787 = vmatpush1.msra.mxu0 %v2275
    %2788 = vmatprep.subr.mxu0 %v2284
    %2789 = vmatpush1.msra.mxu0 %v2283
    %2790 = vmatprep.subr.mxu0 %v2292
    %2791 = vmatpush1.msra.mxu0 %v2291
    %2792 = vmatprep.subr.mxu0 %v2300
    %2793 = vmatpush1.msra.mxu0 %v2299
    %2794 = vmatprep.subr.mxu0 %v2308
    %2795 = vmatpush1.msra.mxu0 %v2307
    %2796 = vmatprep.subr.mxu0 %v2316
    %2797 = vmatpush1.msra.mxu0 %v2315
    %2798 = vmatprep.subr.mxu0 %v2324
    %2799 = vmatpush1.msra.mxu0 %v2323
    %2800 = vmatprep.subr.mxu0 %v2332
    %2801 = vmatpush1.msra.mxu0 %v2331
    %2802 = vmatprep.subr.mxu0 %v2340
    %2803 = vmatpush1.msra.mxu0 %v2339
    %2804 = vmatprep.mubr.f32.mxu0 %v1830
    %2805 = vmatmul.mubr.f32.gmra.mrb[0].mxu0 %v1829
    %v2806 = vpop.f32.mrb[0].mxu0
    %v2807 = vadd.f32 %v2736, %v2806
    %v2808 = vpop.f32.mrb[0].mxu0
    %v2809 = vadd.f32 %v2738, %v2808
    %2810 = vdwg.mxu0
    %2811 = vmatprep.subr.mxu0 %v1838
    %2812 = vmatpush1.msra.mxu0 %v1837
    %2813 = vmatprep.subr.mxu0 %v1846
    %2814 = vmatpush1.msra.mxu0 %v1845
    %2815 = vmatprep.subr.mxu0 %v1854
    %2816 = vmatpush1.msra.mxu0 %v1853
    %2817 = vmatprep.subr.mxu0 %v1862
    %2818 = vmatpush1.msra.mxu0 %v1861
    %2819 = vmatprep.subr.mxu0 %v1870
    %2820 = vmatpush1.msra.mxu0 %v1869
    %2821 = vmatprep.subr.mxu0 %v1878
    %2822 = vmatpush1.msra.mxu0 %v1877
    %2823 = vmatprep.subr.mxu0 %v1886
    %2824 = vmatpush1.msra.mxu0 %v1885
    %2825 = vmatprep.subr.mxu0 %v1894
    %2826 = vmatpush1.msra.mxu0 %v1893
    %2827 = vmatprep.subr.mxu0 %v1902
    %2828 = vmatpush1.msra.mxu0 %v1901
    %2829 = vmatprep.subr.mxu0 %v1910
    %2830 = vmatpush1.msra.mxu0 %v1909
    %2831 = vmatprep.subr.mxu0 %v1918
    %2832 = vmatpush1.msra.mxu0 %v1917
    %2833 = vmatprep.subr.mxu0 %v1926
    %2834 = vmatpush1.msra.mxu0 %v1925
    %2835 = vmatprep.subr.mxu0 %v1934
    %2836 = vmatpush1.msra.mxu0 %v1933
    %2837 = vmatprep.subr.mxu0 %v1942
    %2838 = vmatpush1.msra.mxu0 %v1941
    %2839 = vmatprep.subr.mxu0 %v1950
    %2840 = vmatpush1.msra.mxu0 %v1949
    %2841 = vmatprep.subr.mxu0 %v1958
    %2842 = vmatpush1.msra.mxu0 %v1957
    %2843 = vmatprep.subr.mxu0 %v1966
    %2844 = vmatpush1.msra.mxu0 %v1965
    %2845 = vmatprep.subr.mxu0 %v1974
    %2846 = vmatpush1.msra.mxu0 %v1973
    %2847 = vmatprep.subr.mxu0 %v1982
    %2848 = vmatpush1.msra.mxu0 %v1981
    %2849 = vmatprep.subr.mxu0 %v1990
    %2850 = vmatpush1.msra.mxu0 %v1989
    %2851 = vmatprep.subr.mxu0 %v1998
    %2852 = vmatpush1.msra.mxu0 %v1997
    %2853 = vmatprep.subr.mxu0 %v2006
    %2854 = vmatpush1.msra.mxu0 %v2005
    %2855 = vmatprep.subr.mxu0 %v2014
    %2856 = vmatpush1.msra.mxu0 %v2013
    %2857 = vmatprep.subr.mxu0 %v2022
    %2858 = vmatpush1.msra.mxu0 %v2021
    %2859 = vmatprep.subr.mxu0 %v2030
    %2860 = vmatpush1.msra.mxu0 %v2029
    %2861 = vmatprep.subr.mxu0 %v2038
    %2862 = vmatpush1.msra.mxu0 %v2037
    %2863 = vmatprep.subr.mxu0 %v2046
    %2864 = vmatpush1.msra.mxu0 %v2045
    %2865 = vmatprep.subr.mxu0 %v2054
    %2866 = vmatpush1.msra.mxu0 %v2053
    %2867 = vmatprep.subr.mxu0 %v2062
    %2868 = vmatpush1.msra.mxu0 %v2061
    %2869 = vmatprep.subr.mxu0 %v2070
    %2870 = vmatpush1.msra.mxu0 %v2069
    %2871 = vmatprep.subr.mxu0 %v2078
    %2872 = vmatpush1.msra.mxu0 %v2077
    %2873 = vmatprep.subr.mxu0 %v2086
    %2874 = vmatpush1.msra.mxu0 %v2085
    %2875 = vmatprep.mubr.f32.mxu0 %v1828
    %2876 = vmatmul.mubr.f32.gmra.mrb[0].mxu0 %v1827
    %v2877 = vpop.f32.mrb[0].mxu0
    %v2878 = vadd.f32 %v2372, %v2877
    %v2879 = vpop.f32.mrb[0].mxu0
    %v2880 = vadd.f32 %v2376, %v2879
    %2881 = vdwg.mxu0
    %2882 = vmatprep.subr.mxu0 %v2094
    %2883 = vmatpush1.msra.mxu0 %v2093
    %2884 = vmatprep.subr.mxu0 %v2102
    %2885 = vmatpush1.msra.mxu0 %v2101
    %2886 = vmatprep.subr.mxu0 %v2110
    %2887 = vmatpush1.msra.mxu0 %v2109
    %2888 = vmatprep.subr.mxu0 %v2118
    %2889 = vmatpush1.msra.mxu0 %v2117
    %2890 = vmatprep.subr.mxu0 %v2126
    %2891 = vmatpush1.msra.mxu0 %v2125
    %2892 = vmatprep.subr.mxu0 %v2134
    %2893 = vmatpush1.msra.mxu0 %v2133
    %2894 = vmatprep.subr.mxu0 %v2142
    %2895 = vmatpush1.msra.mxu0 %v2141
    %2896 = vmatprep.subr.mxu0 %v2150
    %2897 = vmatpush1.msra.mxu0 %v2149
    %2898 = vmatprep.subr.mxu0 %v2158
    %2899 = vmatpush1.msra.mxu0 %v2157
    %2900 = vmatprep.subr.mxu0 %v2166
    %2901 = vmatpush1.msra.mxu0 %v2165
    %2902 = vmatprep.subr.mxu0 %v2174
    %2903 = vmatpush1.msra.mxu0 %v2173
    %2904 = vmatprep.subr.mxu0 %v2182
    %2905 = vmatpush1.msra.mxu0 %v2181
    %2906 = vmatprep.subr.mxu0 %v2190
    %2907 = vmatpush1.msra.mxu0 %v2189
    %2908 = vmatprep.subr.mxu0 %v2198
    %2909 = vmatpush1.msra.mxu0 %v2197
    %2910 = vmatprep.subr.mxu0 %v2206
    %2911 = vmatpush1.msra.mxu0 %v2205
    %2912 = vmatprep.subr.mxu0 %v2214
    %2913 = vmatpush1.msra.mxu0 %v2213
    %2914 = vmatprep.subr.mxu0 %v2222
    %2915 = vmatpush1.msra.mxu0 %v2221
    %2916 = vmatprep.subr.mxu0 %v2230
    %2917 = vmatpush1.msra.mxu0 %v2229
    %2918 = vmatprep.subr.mxu0 %v2238
    %2919 = vmatpush1.msra.mxu0 %v2237
    %2920 = vmatprep.subr.mxu0 %v2246
    %2921 = vmatpush1.msra.mxu0 %v2245
    %2922 = vmatprep.subr.mxu0 %v2254
    %2923 = vmatpush1.msra.mxu0 %v2253
    %2924 = vmatprep.subr.mxu0 %v2262
    %2925 = vmatpush1.msra.mxu0 %v2261
    %2926 = vmatprep.subr.mxu0 %v2270
    %2927 = vmatpush1.msra.mxu0 %v2269
    %2928 = vmatprep.subr.mxu0 %v2278
    %2929 = vmatpush1.msra.mxu0 %v2277
    %2930 = vmatprep.subr.mxu0 %v2286
    %2931 = vmatpush1.msra.mxu0 %v2285
    %2932 = vmatprep.subr.mxu0 %v2294
    %2933 = vmatpush1.msra.mxu0 %v2293
    %2934 = vmatprep.subr.mxu0 %v2302
    %2935 = vmatpush1.msra.mxu0 %v2301
    %2936 = vmatprep.subr.mxu0 %v2310
    %2937 = vmatpush1.msra.mxu0 %v2309
    %2938 = vmatprep.subr.mxu0 %v2318
    %2939 = vmatpush1.msra.mxu0 %v2317
    %2940 = vmatprep.subr.mxu0 %v2326
    %2941 = vmatpush1.msra.mxu0 %v2325
    %2942 = vmatprep.subr.mxu0 %v2334
    %2943 = vmatpush1.msra.mxu0 %v2333
    %2944 = vmatprep.subr.mxu0 %v2342
    %2945 = vmatpush1.msra.mxu0 %v2341
    %2946 = vmatprep.mubr.f32.mxu0 %v1830
    %2947 = vmatmul.mubr.f32.gmra.mrb[0].mxu0 %v1829
    %v2948 = vpop.f32.mrb[0].mxu0
    %v2949 = vadd.f32 %v2878, %v2948
    %v2950 = vpop.f32.mrb[0].mxu0
    %v2951 = vadd.f32 %v2880, %v2950
    %2952 = vdwg.mxu0
    %v2953 = vmax.f32 %v2523, 0.0
    %v2954 = vmax.f32 %v2525, 0.0
    %v2955 = vmax.f32 %v2665, 0.0
    %v2956 = vmax.f32 %v2667, 0.0
    %v2957 = vmax.f32 %v2807, 0.0
    %v2958 = vmax.f32 %v2809, 0.0
    %v2959 = vmax.f32 %v2949, 0.0
    %v2960 = vmax.f32 %v2951, 0.0
    %v2961 = vld [vmem:[#allocation12] sm:$0xff]
    %v2962 = vld [vmem:[#allocation12 + $0x8] sm:$0xff]
    %v2963 = vld [vmem:[#allocation12 + $0x10] sm:$0xff]
    %v2964 = vld [vmem:[#allocation12 + $0x18] sm:$0xff]
    %v2965 = vld [vmem:[#allocation12 + $0x20] sm:$0xff]
    %v2966 = vld [vmem:[#allocation12 + $0x28] sm:$0xff]
    %v2967 = vld [vmem:[#allocation12 + $0x30] sm:$0xff]
    %v2968 = vld [vmem:[#allocation12 + $0x38] sm:$0xff]
    %v2969 = vld [vmem:[#allocation12 + $0x40] sm:$0xff]
    %v2970 = vld [vmem:[#allocation12 + $0x48] sm:$0xff]
    %v2971 = vld [vmem:[#allocation12 + $0x50] sm:$0xff]
    %v2972 = vld [vmem:[#allocation12 + $0x58] sm:$0xff]
    %v2973 = vld [vmem:[#allocation12 + $0x60] sm:$0xff]
    %v2974 = vld [vmem:[#allocation12 + $0x68] sm:$0xff]
    %v2975 = vld [vmem:[#allocation12 + $0x70] sm:$0xff]
    %v2976 = vld [vmem:[#allocation12 + $0x78] sm:$0xff]
    %v2977 = vld [vmem:[#allocation12 + $0x80] sm:$0xff]
    %v2978 = vld [vmem:[#allocation12 + $0x88] sm:$0xff]
    %v2979 = vld [vmem:[#allocation12 + $0x90] sm:$0xff]
    %v2980 = vld [vmem:[#allocation12 + $0x98] sm:$0xff]
    %v2981 = vld [vmem:[#allocation12 + $0xa0] sm:$0xff]
    %v2982 = vld [vmem:[#allocation12 + $0xa8] sm:$0xff]
    %v2983 = vld [vmem:[#allocation12 + $0xb0] sm:$0xff]
    %v2984 = vld [vmem:[#allocation12 + $0xb8] sm:$0xff]
    %v2985 = vld [vmem:[#allocation12 + $0xc0] sm:$0xff]
    %v2986 = vld [vmem:[#allocation12 + $0xc8] sm:$0xff]
    %v2987 = vld [vmem:[#allocation12 + $0xd0] sm:$0xff]
    %v2988 = vld [vmem:[#allocation12 + $0xd8] sm:$0xff]
    %v2989 = vld [vmem:[#allocation12 + $0xe0] sm:$0xff]
    %v2990 = vld [vmem:[#allocation12 + $0xe8] sm:$0xff]
    %v2991 = vld [vmem:[#allocation12 + $0xf0] sm:$0xff]
    %v2992 = vld [vmem:[#allocation12 + $0xf8] sm:$0xff]
    %v2993 = vld [vmem:[#allocation12 + $0x100] sm:$0xff]
    %v2994 = vld [vmem:[#allocation12 + $0x108] sm:$0xff]
    %v2995 = vld [vmem:[#allocation12 + $0x110] sm:$0xff]
    %v2996 = vld [vmem:[#allocation12 + $0x118] sm:$0xff]
    %v2997 = vld [vmem:[#allocation12 + $0x120] sm:$0xff]
    %v2998 = vld [vmem:[#allocation12 + $0x128] sm:$0xff]
    %v2999 = vld [vmem:[#allocation12 + $0x130] sm:$0xff]
    %v3000 = vld [vmem:[#allocation12 + $0x138] sm:$0xff]
    %v3001 = vld [vmem:[#allocation12 + $0x140] sm:$0xff]
    %v3002 = vld [vmem:[#allocation12 + $0x148] sm:$0xff]
    %v3003 = vld [vmem:[#allocation12 + $0x150] sm:$0xff]
    %v3004 = vld [vmem:[#allocation12 + $0x158] sm:$0xff]
    %v3005 = vld [vmem:[#allocation12 + $0x160] sm:$0xff]
    %v3006 = vld [vmem:[#allocation12 + $0x168] sm:$0xff]
    %v3007 = vld [vmem:[#allocation12 + $0x170] sm:$0xff]
    %v3008 = vld [vmem:[#allocation12 + $0x178] sm:$0xff]
    %v3009 = vld [vmem:[#allocation12 + $0x180] sm:$0xff]
    %v3010 = vld [vmem:[#allocation12 + $0x188] sm:$0xff]
    %v3011 = vld [vmem:[#allocation12 + $0x190] sm:$0xff]
    %v3012 = vld [vmem:[#allocation12 + $0x198] sm:$0xff]
    %v3013 = vld [vmem:[#allocation12 + $0x1a0] sm:$0xff]
    %v3014 = vld [vmem:[#allocation12 + $0x1a8] sm:$0xff]
    %v3015 = vld [vmem:[#allocation12 + $0x1b0] sm:$0xff]
    %v3016 = vld [vmem:[#allocation12 + $0x1b8] sm:$0xff]
    %v3017 = vld [vmem:[#allocation12 + $0x1c0] sm:$0xff]
    %v3018 = vld [vmem:[#allocation12 + $0x1c8] sm:$0xff]
    %v3019 = vld [vmem:[#allocation12 + $0x1d0] sm:$0xff]
    %v3020 = vld [vmem:[#allocation12 + $0x1d8] sm:$0xff]
    %v3021 = vld [vmem:[#allocation12 + $0x1e0] sm:$0xff]
    %v3022 = vld [vmem:[#allocation12 + $0x1e8] sm:$0xff]
    %v3023 = vld [vmem:[#allocation12 + $0x1f0] sm:$0xff]
    %v3024 = vld [vmem:[#allocation12 + $0x1f8] sm:$0xff]
    %v3025 = vld [vmem:[#allocation12 + $0x200] sm:$0xff]
    %v3026 = vld [vmem:[#allocation12 + $0x208] sm:$0xff]
    %v3027 = vld [vmem:[#allocation12 + $0x210] sm:$0xff]
    %v3028 = vld [vmem:[#allocation12 + $0x218] sm:$0xff]
    %v3029 = vld [vmem:[#allocation12 + $0x220] sm:$0xff]
    %v3030 = vld [vmem:[#allocation12 + $0x228] sm:$0xff]
    %v3031 = vld [vmem:[#allocation12 + $0x230] sm:$0xff]
    %v3032 = vld [vmem:[#allocation12 + $0x238] sm:$0xff]
    %v3033 = vld [vmem:[#allocation12 + $0x240] sm:$0xff]
    %v3034 = vld [vmem:[#allocation12 + $0x248] sm:$0xff]
    %v3035 = vld [vmem:[#allocation12 + $0x250] sm:$0xff]
    %v3036 = vld [vmem:[#allocation12 + $0x258] sm:$0xff]
    %v3037 = vld [vmem:[#allocation12 + $0x260] sm:$0xff]
    %v3038 = vld [vmem:[#allocation12 + $0x268] sm:$0xff]
    %v3039 = vld [vmem:[#allocation12 + $0x270] sm:$0xff]
    %v3040 = vld [vmem:[#allocation12 + $0x278] sm:$0xff]
    %v3041 = vld [vmem:[#allocation12 + $0x280] sm:$0xff]
    %v3042 = vld [vmem:[#allocation12 + $0x288] sm:$0xff]
    %v3043 = vld [vmem:[#allocation12 + $0x290] sm:$0xff]
    %v3044 = vld [vmem:[#allocation12 + $0x298] sm:$0xff]
    %v3045 = vld [vmem:[#allocation12 + $0x2a0] sm:$0xff]
    %v3046 = vld [vmem:[#allocation12 + $0x2a8] sm:$0xff]
    %v3047 = vld [vmem:[#allocation12 + $0x2b0] sm:$0xff]
    %v3048 = vld [vmem:[#allocation12 + $0x2b8] sm:$0xff]
    %v3049 = vld [vmem:[#allocation12 + $0x2c0] sm:$0xff]
    %v3050 = vld [vmem:[#allocation12 + $0x2c8] sm:$0xff]
    %v3051 = vld [vmem:[#allocation12 + $0x2d0] sm:$0xff]
    %v3052 = vld [vmem:[#allocation12 + $0x2d8] sm:$0xff]
    %v3053 = vld [vmem:[#allocation12 + $0x2e0] sm:$0xff]
    %v3054 = vld [vmem:[#allocation12 + $0x2e8] sm:$0xff]
    %v3055 = vld [vmem:[#allocation12 + $0x2f0] sm:$0xff]
    %v3056 = vld [vmem:[#allocation12 + $0x2f8] sm:$0xff]
    %v3057 = vld [vmem:[#allocation12 + $0x300] sm:$0xff]
    %v3058 = vld [vmem:[#allocation12 + $0x308] sm:$0xff]
    %v3059 = vld [vmem:[#allocation12 + $0x310] sm:$0xff]
    %v3060 = vld [vmem:[#allocation12 + $0x318] sm:$0xff]
    %v3061 = vld [vmem:[#allocation12 + $0x320] sm:$0xff]
    %v3062 = vld [vmem:[#allocation12 + $0x328] sm:$0xff]
    %v3063 = vld [vmem:[#allocation12 + $0x330] sm:$0xff]
    %v3064 = vld [vmem:[#allocation12 + $0x338] sm:$0xff]
    %v3065 = vld [vmem:[#allocation12 + $0x340] sm:$0xff]
    %v3066 = vld [vmem:[#allocation12 + $0x348] sm:$0xff]
    %v3067 = vld [vmem:[#allocation12 + $0x350] sm:$0xff]
    %v3068 = vld [vmem:[#allocation12 + $0x358] sm:$0xff]
    %v3069 = vld [vmem:[#allocation12 + $0x360] sm:$0xff]
    %v3070 = vld [vmem:[#allocation12 + $0x368] sm:$0xff]
    %v3071 = vld [vmem:[#allocation12 + $0x370] sm:$0xff]
    %v3072 = vld [vmem:[#allocation12 + $0x378] sm:$0xff]
    %v3073 = vld [vmem:[#allocation12 + $0x380] sm:$0xff]
    %v3074 = vld [vmem:[#allocation12 + $0x388] sm:$0xff]
    %v3075 = vld [vmem:[#allocation12 + $0x390] sm:$0xff]
    %v3076 = vld [vmem:[#allocation12 + $0x398] sm:$0xff]
    %v3077 = vld [vmem:[#allocation12 + $0x3a0] sm:$0xff]
    %v3078 = vld [vmem:[#allocation12 + $0x3a8] sm:$0xff]
    %v3079 = vld [vmem:[#allocation12 + $0x3b0] sm:$0xff]
    %v3080 = vld [vmem:[#allocation12 + $0x3b8] sm:$0xff]
    %v3081 = vld [vmem:[#allocation12 + $0x3c0] sm:$0xff]
    %v3082 = vld [vmem:[#allocation12 + $0x3c8] sm:$0xff]
    %v3083 = vld [vmem:[#allocation12 + $0x3d0] sm:$0xff]
    %v3084 = vld [vmem:[#allocation12 + $0x3d8] sm:$0xff]
    %v3085 = vld [vmem:[#allocation12 + $0x3e0] sm:$0xff]
    %v3086 = vld [vmem:[#allocation12 + $0x3e8] sm:$0xff]
    %v3087 = vld [vmem:[#allocation12 + $0x3f0] sm:$0xff]
    %v3088 = vld [vmem:[#allocation12 + $0x3f8] sm:$0xff]
    %v3089 = vld [vmem:[#allocation12 + $0x400] sm:$0xff]
    %v3090 = vld [vmem:[#allocation12 + $0x408] sm:$0xff]
    %v3091 = vld [vmem:[#allocation12 + $0x410] sm:$0xff]
    %v3092 = vld [vmem:[#allocation12 + $0x418] sm:$0xff]
    %v3093 = vld [vmem:[#allocation12 + $0x420] sm:$0xff]
    %v3094 = vld [vmem:[#allocation12 + $0x428] sm:$0xff]
    %v3095 = vld [vmem:[#allocation12 + $0x430] sm:$0xff]
    %v3096 = vld [vmem:[#allocation12 + $0x438] sm:$0xff]
    %v3097 = vld [vmem:[#allocation12 + $0x440] sm:$0xff]
    %v3098 = vld [vmem:[#allocation12 + $0x448] sm:$0xff]
    %v3099 = vld [vmem:[#allocation12 + $0x450] sm:$0xff]
    %v3100 = vld [vmem:[#allocation12 + $0x458] sm:$0xff]
    %v3101 = vld [vmem:[#allocation12 + $0x460] sm:$0xff]
    %v3102 = vld [vmem:[#allocation12 + $0x468] sm:$0xff]
    %v3103 = vld [vmem:[#allocation12 + $0x470] sm:$0xff]
    %v3104 = vld [vmem:[#allocation12 + $0x478] sm:$0xff]
    %v3105 = vld [vmem:[#allocation12 + $0x480] sm:$0xff]
    %v3106 = vld [vmem:[#allocation12 + $0x488] sm:$0xff]
    %v3107 = vld [vmem:[#allocation12 + $0x490] sm:$0xff]
    %v3108 = vld [vmem:[#allocation12 + $0x498] sm:$0xff]
    %v3109 = vld [vmem:[#allocation12 + $0x4a0] sm:$0xff]
    %v3110 = vld [vmem:[#allocation12 + $0x4a8] sm:$0xff]
    %v3111 = vld [vmem:[#allocation12 + $0x4b0] sm:$0xff]
    %v3112 = vld [vmem:[#allocation12 + $0x4b8] sm:$0xff]
    %v3113 = vld [vmem:[#allocation12 + $0x4c0] sm:$0xff]
    %v3114 = vld [vmem:[#allocation12 + $0x4c8] sm:$0xff]
    %v3115 = vld [vmem:[#allocation12 + $0x4d0] sm:$0xff]
    %v3116 = vld [vmem:[#allocation12 + $0x4d8] sm:$0xff]
    %v3117 = vld [vmem:[#allocation12 + $0x4e0] sm:$0xff]
    %v3118 = vld [vmem:[#allocation12 + $0x4e8] sm:$0xff]
    %v3119 = vld [vmem:[#allocation12 + $0x4f0] sm:$0xff]
    %v3120 = vld [vmem:[#allocation12 + $0x4f8] sm:$0xff]
    %v3121 = vld [vmem:[#allocation12 + $0x500] sm:$0xff]
    %v3122 = vld [vmem:[#allocation12 + $0x508] sm:$0xff]
    %v3123 = vld [vmem:[#allocation12 + $0x510] sm:$0xff]
    %v3124 = vld [vmem:[#allocation12 + $0x518] sm:$0xff]
    %v3125 = vld [vmem:[#allocation12 + $0x520] sm:$0xff]
    %v3126 = vld [vmem:[#allocation12 + $0x528] sm:$0xff]
    %v3127 = vld [vmem:[#allocation12 + $0x530] sm:$0xff]
    %v3128 = vld [vmem:[#allocation12 + $0x538] sm:$0xff]
    %v3129 = vld [vmem:[#allocation12 + $0x540] sm:$0xff]
    %v3130 = vld [vmem:[#allocation12 + $0x548] sm:$0xff]
    %v3131 = vld [vmem:[#allocation12 + $0x550] sm:$0xff]
    %v3132 = vld [vmem:[#allocation12 + $0x558] sm:$0xff]
    %v3133 = vld [vmem:[#allocation12 + $0x560] sm:$0xff]
    %v3134 = vld [vmem:[#allocation12 + $0x568] sm:$0xff]
    %v3135 = vld [vmem:[#allocation12 + $0x570] sm:$0xff]
    %v3136 = vld [vmem:[#allocation12 + $0x578] sm:$0xff]
    %v3137 = vld [vmem:[#allocation12 + $0x580] sm:$0xff]
    %v3138 = vld [vmem:[#allocation12 + $0x588] sm:$0xff]
    %v3139 = vld [vmem:[#allocation12 + $0x590] sm:$0xff]
    %v3140 = vld [vmem:[#allocation12 + $0x598] sm:$0xff]
    %v3141 = vld [vmem:[#allocation12 + $0x5a0] sm:$0xff]
    %v3142 = vld [vmem:[#allocation12 + $0x5a8] sm:$0xff]
    %v3143 = vld [vmem:[#allocation12 + $0x5b0] sm:$0xff]
    %v3144 = vld [vmem:[#allocation12 + $0x5b8] sm:$0xff]
    %v3145 = vld [vmem:[#allocation12 + $0x5c0] sm:$0xff]
    %v3146 = vld [vmem:[#allocation12 + $0x5c8] sm:$0xff]
    %v3147 = vld [vmem:[#allocation12 + $0x5d0] sm:$0xff]
    %v3148 = vld [vmem:[#allocation12 + $0x5d8] sm:$0xff]
    %v3149 = vld [vmem:[#allocation12 + $0x5e0] sm:$0xff]
    %v3150 = vld [vmem:[#allocation12 + $0x5e8] sm:$0xff]
    %v3151 = vld [vmem:[#allocation12 + $0x5f0] sm:$0xff]
    %v3152 = vld [vmem:[#allocation12 + $0x5f8] sm:$0xff]
    %v3153 = vld [vmem:[#allocation12 + $0x600] sm:$0xff]
    %v3154 = vld [vmem:[#allocation12 + $0x608] sm:$0xff]
    %v3155 = vld [vmem:[#allocation12 + $0x610] sm:$0xff]
    %v3156 = vld [vmem:[#allocation12 + $0x618] sm:$0xff]
    %v3157 = vld [vmem:[#allocation12 + $0x620] sm:$0xff]
    %v3158 = vld [vmem:[#allocation12 + $0x628] sm:$0xff]
    %v3159 = vld [vmem:[#allocation12 + $0x630] sm:$0xff]
    %v3160 = vld [vmem:[#allocation12 + $0x638] sm:$0xff]
    %v3161 = vld [vmem:[#allocation12 + $0x640] sm:$0xff]
    %v3162 = vld [vmem:[#allocation12 + $0x648] sm:$0xff]
    %v3163 = vld [vmem:[#allocation12 + $0x650] sm:$0xff]
    %v3164 = vld [vmem:[#allocation12 + $0x658] sm:$0xff]
    %v3165 = vld [vmem:[#allocation12 + $0x660] sm:$0xff]
    %v3166 = vld [vmem:[#allocation12 + $0x668] sm:$0xff]
    %v3167 = vld [vmem:[#allocation12 + $0x670] sm:$0xff]
    %v3168 = vld [vmem:[#allocation12 + $0x678] sm:$0xff]
    %v3169 = vld [vmem:[#allocation12 + $0x680] sm:$0xff]
    %v3170 = vld [vmem:[#allocation12 + $0x688] sm:$0xff]
    %v3171 = vld [vmem:[#allocation12 + $0x690] sm:$0xff]
    %v3172 = vld [vmem:[#allocation12 + $0x698] sm:$0xff]
    %v3173 = vld [vmem:[#allocation12 + $0x6a0] sm:$0xff]
    %v3174 = vld [vmem:[#allocation12 + $0x6a8] sm:$0xff]
    %v3175 = vld [vmem:[#allocation12 + $0x6b0] sm:$0xff]
    %v3176 = vld [vmem:[#allocation12 + $0x6b8] sm:$0xff]
    %v3177 = vld [vmem:[#allocation12 + $0x6c0] sm:$0xff]
    %v3178 = vld [vmem:[#allocation12 + $0x6c8] sm:$0xff]
    %v3179 = vld [vmem:[#allocation12 + $0x6d0] sm:$0xff]
    %v3180 = vld [vmem:[#allocation12 + $0x6d8] sm:$0xff]
    %v3181 = vld [vmem:[#allocation12 + $0x6e0] sm:$0xff]
    %v3182 = vld [vmem:[#allocation12 + $0x6e8] sm:$0xff]
    %v3183 = vld [vmem:[#allocation12 + $0x6f0] sm:$0xff]
    %v3184 = vld [vmem:[#allocation12 + $0x6f8] sm:$0xff]
    %v3185 = vld [vmem:[#allocation12 + $0x700] sm:$0xff]
    %v3186 = vld [vmem:[#allocation12 + $0x708] sm:$0xff]
    %v3187 = vld [vmem:[#allocation12 + $0x710] sm:$0xff]
    %v3188 = vld [vmem:[#allocation12 + $0x718] sm:$0xff]
    %v3189 = vld [vmem:[#allocation12 + $0x720] sm:$0xff]
    %v3190 = vld [vmem:[#allocation12 + $0x728] sm:$0xff]
    %v3191 = vld [vmem:[#allocation12 + $0x730] sm:$0xff]
    %v3192 = vld [vmem:[#allocation12 + $0x738] sm:$0xff]
    %v3193 = vld [vmem:[#allocation12 + $0x740] sm:$0xff]
    %v3194 = vld [vmem:[#allocation12 + $0x748] sm:$0xff]
    %v3195 = vld [vmem:[#allocation12 + $0x750] sm:$0xff]
    %v3196 = vld [vmem:[#allocation12 + $0x758] sm:$0xff]
    %v3197 = vld [vmem:[#allocation12 + $0x760] sm:$0xff]
    %v3198 = vld [vmem:[#allocation12 + $0x768] sm:$0xff]
    %v3199 = vld [vmem:[#allocation12 + $0x770] sm:$0xff]
    %v3200 = vld [vmem:[#allocation12 + $0x778] sm:$0xff]
    %v3201 = vld [vmem:[#allocation12 + $0x780] sm:$0xff]
    %v3202 = vld [vmem:[#allocation12 + $0x788] sm:$0xff]
    %v3203 = vld [vmem:[#allocation12 + $0x790] sm:$0xff]
    %v3204 = vld [vmem:[#allocation12 + $0x798] sm:$0xff]
    %v3205 = vld [vmem:[#allocation12 + $0x7a0] sm:$0xff]
    %v3206 = vld [vmem:[#allocation12 + $0x7a8] sm:$0xff]
    %v3207 = vld [vmem:[#allocation12 + $0x7b0] sm:$0xff]
    %v3208 = vld [vmem:[#allocation12 + $0x7b8] sm:$0xff]
    %v3209 = vld [vmem:[#allocation12 + $0x7c0] sm:$0xff]
    %v3210 = vld [vmem:[#allocation12 + $0x7c8] sm:$0xff]
    %v3211 = vld [vmem:[#allocation12 + $0x7d0] sm:$0xff]
    %v3212 = vld [vmem:[#allocation12 + $0x7d8] sm:$0xff]
    %v3213 = vld [vmem:[#allocation12 + $0x7e0] sm:$0xff]
    %v3214 = vld [vmem:[#allocation12 + $0x7e8] sm:$0xff]
    %v3215 = vld [vmem:[#allocation12 + $0x7f0] sm:$0xff]
    %v3216 = vld [vmem:[#allocation12 + $0x7f8] sm:$0xff]
    %v3217 = vld [vmem:[#allocation13] sm:$0x3]
    %v3219 = vlaneseq
    %v3220 = vshrl.u32 %v3219, 7
    %v3221 = vsub.s32 0, %v3220
    %v3222 = vrot.slane %v3217, %v3221
    %v3223 = vlaneseq
    %v3224 = vshrl.u32 %v3223, 7
    %v3225 = vsub.s32 1, %v3224
    %v3226 = vrot.slane %v3217, %v3225
    %3229 = vmatprep.subr.mxu0 %v2962
    %3230 = vmatpush1.msra.mxu0 %v2961
    %3231 = vmatprep.subr.mxu0 %v2964
    %3232 = vmatpush1.msra.mxu0 %v2963
    %3233 = vmatprep.subr.mxu0 %v2966
    %3234 = vmatpush1.msra.mxu0 %v2965
    %3235 = vmatprep.subr.mxu0 %v2968
    %3236 = vmatpush1.msra.mxu0 %v2967
    %3237 = vmatprep.subr.mxu0 %v2970
    %3238 = vmatpush1.msra.mxu0 %v2969
    %3239 = vmatprep.subr.mxu0 %v2972
    %3240 = vmatpush1.msra.mxu0 %v2971
    %3241 = vmatprep.subr.mxu0 %v2974
    %3242 = vmatpush1.msra.mxu0 %v2973
    %3243 = vmatprep.subr.mxu0 %v2976
    %3244 = vmatpush1.msra.mxu0 %v2975
    %3245 = vmatprep.subr.mxu0 %v2978
    %3246 = vmatpush1.msra.mxu0 %v2977
    %3247 = vmatprep.subr.mxu0 %v2980
    %3248 = vmatpush1.msra.mxu0 %v2979
    %3249 = vmatprep.subr.mxu0 %v2982
    %3250 = vmatpush1.msra.mxu0 %v2981
    %3251 = vmatprep.subr.mxu0 %v2984
    %3252 = vmatpush1.msra.mxu0 %v2983
    %3253 = vmatprep.subr.mxu0 %v2986
    %3254 = vmatpush1.msra.mxu0 %v2985
    %3255 = vmatprep.subr.mxu0 %v2988
    %3256 = vmatpush1.msra.mxu0 %v2987
    %3257 = vmatprep.subr.mxu0 %v2990
    %3258 = vmatpush1.msra.mxu0 %v2989
    %3259 = vmatprep.subr.mxu0 %v2992
    %3260 = vmatpush1.msra.mxu0 %v2991
    %3261 = vmatprep.subr.mxu0 %v2994
    %3262 = vmatpush1.msra.mxu0 %v2993
    %3263 = vmatprep.subr.mxu0 %v2996
    %3264 = vmatpush1.msra.mxu0 %v2995
    %3265 = vmatprep.subr.mxu0 %v2998
    %3266 = vmatpush1.msra.mxu0 %v2997
    %3267 = vmatprep.subr.mxu0 %v3000
    %3268 = vmatpush1.msra.mxu0 %v2999
    %3269 = vmatprep.subr.mxu0 %v3002
    %3270 = vmatpush1.msra.mxu0 %v3001
    %3271 = vmatprep.subr.mxu0 %v3004
    %3272 = vmatpush1.msra.mxu0 %v3003
    %3273 = vmatprep.subr.mxu0 %v3006
    %3274 = vmatpush1.msra.mxu0 %v3005
    %3275 = vmatprep.subr.mxu0 %v3008
    %3276 = vmatpush1.msra.mxu0 %v3007
    %3277 = vmatprep.subr.mxu0 %v3010
    %3278 = vmatpush1.msra.mxu0 %v3009
    %3279 = vmatprep.subr.mxu0 %v3012
    %3280 = vmatpush1.msra.mxu0 %v3011
    %3281 = vmatprep.subr.mxu0 %v3014
    %3282 = vmatpush1.msra.mxu0 %v3013
    %3283 = vmatprep.subr.mxu0 %v3016
    %3284 = vmatpush1.msra.mxu0 %v3015
    %3285 = vmatprep.subr.mxu0 %v3018
    %3286 = vmatpush1.msra.mxu0 %v3017
    %3287 = vmatprep.subr.mxu0 %v3020
    %3288 = vmatpush1.msra.mxu0 %v3019
    %3289 = vmatprep.subr.mxu0 %v3022
    %3290 = vmatpush1.msra.mxu0 %v3021
    %3291 = vmatprep.subr.mxu0 %v3024
    %3292 = vmatpush1.msra.mxu0 %v3023
    %3293 = vmatprep.mubr.f32.mxu0 %v2954
    %3294 = vmatmul.mubr.f32.gmra.mrb[0].mxu0 %v2953
    %v3295 = vpop.f32.mrb[0].mxu0
    %v3296 = vadd.f32 %v3222, %v3295
    %v3297 = vpop.f32.mrb[0].mxu0
    %v3298 = vadd.f32 %v3226, %v3297
    %3299 = vdwg.mxu0
    %3300 = vmatprep.subr.mxu0 %v3026
    %3301 = vmatpush1.msra.mxu0 %v3025
    %3302 = vmatprep.subr.mxu0 %v3028
    %3303 = vmatpush1.msra.mxu0 %v3027
    %3304 = vmatprep.subr.mxu0 %v3030
    %3305 = vmatpush1.msra.mxu0 %v3029
    %3306 = vmatprep.subr.mxu0 %v3032
    %3307 = vmatpush1.msra.mxu0 %v3031
    %3308 = vmatprep.subr.mxu0 %v3034
    %3309 = vmatpush1.msra.mxu0 %v3033
    %3310 = vmatprep.subr.mxu0 %v3036
    %3311 = vmatpush1.msra.mxu0 %v3035
    %3312 = vmatprep.subr.mxu0 %v3038
    %3313 = vmatpush1.msra.mxu0 %v3037
    %3314 = vmatprep.subr.mxu0 %v3040
    %3315 = vmatpush1.msra.mxu0 %v3039
    %3316 = vmatprep.subr.mxu0 %v3042
    %3317 = vmatpush1.msra.mxu0 %v3041
    %3318 = vmatprep.subr.mxu0 %v3044
    %3319 = vmatpush1.msra.mxu0 %v3043
    %3320 = vmatprep.subr.mxu0 %v3046
    %3321 = vmatpush1.msra.mxu0 %v3045
    %3322 = vmatprep.subr.mxu0 %v3048
    %3323 = vmatpush1.msra.mxu0 %v3047
    %3324 = vmatprep.subr.mxu0 %v3050
    %3325 = vmatpush1.msra.mxu0 %v3049
    %3326 = vmatprep.subr.mxu0 %v3052
    %3327 = vmatpush1.msra.mxu0 %v3051
    %3328 = vmatprep.subr.mxu0 %v3054
    %3329 = vmatpush1.msra.mxu0 %v3053
    %3330 = vmatprep.subr.mxu0 %v3056
    %3331 = vmatpush1.msra.mxu0 %v3055
    %3332 = vmatprep.subr.mxu0 %v3058
    %3333 = vmatpush1.msra.mxu0 %v3057
    %3334 = vmatprep.subr.mxu0 %v3060
    %3335 = vmatpush1.msra.mxu0 %v3059
    %3336 = vmatprep.subr.mxu0 %v3062
    %3337 = vmatpush1.msra.mxu0 %v3061
    %3338 = vmatprep.subr.mxu0 %v3064
    %3339 = vmatpush1.msra.mxu0 %v3063
    %3340 = vmatprep.subr.mxu0 %v3066
    %3341 = vmatpush1.msra.mxu0 %v3065
    %3342 = vmatprep.subr.mxu0 %v3068
    %3343 = vmatpush1.msra.mxu0 %v3067
    %3344 = vmatprep.subr.mxu0 %v3070
    %3345 = vmatpush1.msra.mxu0 %v3069
    %3346 = vmatprep.subr.mxu0 %v3072
    %3347 = vmatpush1.msra.mxu0 %v3071
    %3348 = vmatprep.subr.mxu0 %v3074
    %3349 = vmatpush1.msra.mxu0 %v3073
    %3350 = vmatprep.subr.mxu0 %v3076
    %3351 = vmatpush1.msra.mxu0 %v3075
    %3352 = vmatprep.subr.mxu0 %v3078
    %3353 = vmatpush1.msra.mxu0 %v3077
    %3354 = vmatprep.subr.mxu0 %v3080
    %3355 = vmatpush1.msra.mxu0 %v3079
    %3356 = vmatprep.subr.mxu0 %v3082
    %3357 = vmatpush1.msra.mxu0 %v3081
    %3358 = vmatprep.subr.mxu0 %v3084
    %3359 = vmatpush1.msra.mxu0 %v3083
    %3360 = vmatprep.subr.mxu0 %v3086
    %3361 = vmatpush1.msra.mxu0 %v3085
    %3362 = vmatprep.subr.mxu0 %v3088
    %3363 = vmatpush1.msra.mxu0 %v3087
    %3364 = vmatprep.mubr.f32.mxu0 %v2956
    %3365 = vmatmul.mubr.f32.gmra.mrb[0].mxu0 %v2955
    %v3366 = vpop.f32.mrb[0].mxu0
    %v3367 = vadd.f32 %v3296, %v3366
    %v3368 = vpop.f32.mrb[0].mxu0
    %v3369 = vadd.f32 %v3298, %v3368
    %3370 = vdwg.mxu0
    %3371 = vmatprep.subr.mxu0 %v3090
    %3372 = vmatpush1.msra.mxu0 %v3089
    %3373 = vmatprep.subr.mxu0 %v3092
    %3374 = vmatpush1.msra.mxu0 %v3091
    %3375 = vmatprep.subr.mxu0 %v3094
    %3376 = vmatpush1.msra.mxu0 %v3093
    %3377 = vmatprep.subr.mxu0 %v3096
    %3378 = vmatpush1.msra.mxu0 %v3095
    %3379 = vmatprep.subr.mxu0 %v3098
    %3380 = vmatpush1.msra.mxu0 %v3097
    %3381 = vmatprep.subr.mxu0 %v3100
    %3382 = vmatpush1.msra.mxu0 %v3099
    %3383 = vmatprep.subr.mxu0 %v3102
    %3384 = vmatpush1.msra.mxu0 %v3101
    %3385 = vmatprep.subr.mxu0 %v3104
    %3386 = vmatpush1.msra.mxu0 %v3103
    %3387 = vmatprep.subr.mxu0 %v3106
    %3388 = vmatpush1.msra.mxu0 %v3105
    %3389 = vmatprep.subr.mxu0 %v3108
    %3390 = vmatpush1.msra.mxu0 %v3107
    %3391 = vmatprep.subr.mxu0 %v3110
    %3392 = vmatpush1.msra.mxu0 %v3109
    %3393 = vmatprep.subr.mxu0 %v3112
    %3394 = vmatpush1.msra.mxu0 %v3111
    %3395 = vmatprep.subr.mxu0 %v3114
    %3396 = vmatpush1.msra.mxu0 %v3113
    %3397 = vmatprep.subr.mxu0 %v3116
    %3398 = vmatpush1.msra.mxu0 %v3115
    %3399 = vmatprep.subr.mxu0 %v3118
    %3400 = vmatpush1.msra.mxu0 %v3117
    %3401 = vmatprep.subr.mxu0 %v3120
    %3402 = vmatpush1.msra.mxu0 %v3119
    %3403 = vmatprep.subr.mxu0 %v3122
    %3404 = vmatpush1.msra.mxu0 %v3121
    %3405 = vmatprep.subr.mxu0 %v3124
    %3406 = vmatpush1.msra.mxu0 %v3123
    %3407 = vmatprep.subr.mxu0 %v3126
    %3408 = vmatpush1.msra.mxu0 %v3125
    %3409 = vmatprep.subr.mxu0 %v3128
    %3410 = vmatpush1.msra.mxu0 %v3127
    %3411 = vmatprep.subr.mxu0 %v3130
    %3412 = vmatpush1.msra.mxu0 %v3129
    %3413 = vmatprep.subr.mxu0 %v3132
    %3414 = vmatpush1.msra.mxu0 %v3131
    %3415 = vmatprep.subr.mxu0 %v3134
    %3416 = vmatpush1.msra.mxu0 %v3133
    %3417 = vmatprep.subr.mxu0 %v3136
    %3418 = vmatpush1.msra.mxu0 %v3135
    %3419 = vmatprep.subr.mxu0 %v3138
    %3420 = vmatpush1.msra.mxu0 %v3137
    %3421 = vmatprep.subr.mxu0 %v3140
    %3422 = vmatpush1.msra.mxu0 %v3139
    %3423 = vmatprep.subr.mxu0 %v3142
    %3424 = vmatpush1.msra.mxu0 %v3141
    %3425 = vmatprep.subr.mxu0 %v3144
    %3426 = vmatpush1.msra.mxu0 %v3143
    %3427 = vmatprep.subr.mxu0 %v3146
    %3428 = vmatpush1.msra.mxu0 %v3145
    %3429 = vmatprep.subr.mxu0 %v3148
    %3430 = vmatpush1.msra.mxu0 %v3147
    %3431 = vmatprep.subr.mxu0 %v3150
    %3432 = vmatpush1.msra.mxu0 %v3149
    %3433 = vmatprep.subr.mxu0 %v3152
    %3434 = vmatpush1.msra.mxu0 %v3151
    %3435 = vmatprep.mubr.f32.mxu0 %v2958
    %3436 = vmatmul.mubr.f32.gmra.mrb[0].mxu0 %v2957
    %v3437 = vpop.f32.mrb[0].mxu0
    %v3438 = vadd.f32 %v3367, %v3437
    %v3439 = vpop.f32.mrb[0].mxu0
    %v3440 = vadd.f32 %v3369, %v3439
    %3441 = vdwg.mxu0
    %3442 = vmatprep.subr.mxu0 %v3154
    %3443 = vmatpush1.msra.mxu0 %v3153
    %3444 = vmatprep.subr.mxu0 %v3156
    %3445 = vmatpush1.msra.mxu0 %v3155
    %3446 = vmatprep.subr.mxu0 %v3158
    %3447 = vmatpush1.msra.mxu0 %v3157
    %3448 = vmatprep.subr.mxu0 %v3160
    %3449 = vmatpush1.msra.mxu0 %v3159
    %3450 = vmatprep.subr.mxu0 %v3162
    %3451 = vmatpush1.msra.mxu0 %v3161
    %3452 = vmatprep.subr.mxu0 %v3164
    %3453 = vmatpush1.msra.mxu0 %v3163
    %3454 = vmatprep.subr.mxu0 %v3166
    %3455 = vmatpush1.msra.mxu0 %v3165
    %3456 = vmatprep.subr.mxu0 %v3168
    %3457 = vmatpush1.msra.mxu0 %v3167
    %3458 = vmatprep.subr.mxu0 %v3170
    %3459 = vmatpush1.msra.mxu0 %v3169
    %3460 = vmatprep.subr.mxu0 %v3172
    %3461 = vmatpush1.msra.mxu0 %v3171
    %3462 = vmatprep.subr.mxu0 %v3174
    %3463 = vmatpush1.msra.mxu0 %v3173
    %3464 = vmatprep.subr.mxu0 %v3176
    %3465 = vmatpush1.msra.mxu0 %v3175
    %3466 = vmatprep.subr.mxu0 %v3178
    %3467 = vmatpush1.msra.mxu0 %v3177
    %3468 = vmatprep.subr.mxu0 %v3180
    %3469 = vmatpush1.msra.mxu0 %v3179
    %3470 = vmatprep.subr.mxu0 %v3182
    %3471 = vmatpush1.msra.mxu0 %v3181
    %3472 = vmatprep.subr.mxu0 %v3184
    %3473 = vmatpush1.msra.mxu0 %v3183
    %3474 = vmatprep.subr.mxu0 %v3186
    %3475 = vmatpush1.msra.mxu0 %v3185
    %3476 = vmatprep.subr.mxu0 %v3188
    %3477 = vmatpush1.msra.mxu0 %v3187
    %3478 = vmatprep.subr.mxu0 %v3190
    %3479 = vmatpush1.msra.mxu0 %v3189
    %3480 = vmatprep.subr.mxu0 %v3192
    %3481 = vmatpush1.msra.mxu0 %v3191
    %3482 = vmatprep.subr.mxu0 %v3194
    %3483 = vmatpush1.msra.mxu0 %v3193
    %3484 = vmatprep.subr.mxu0 %v3196
    %3485 = vmatpush1.msra.mxu0 %v3195
    %3486 = vmatprep.subr.mxu0 %v3198
    %3487 = vmatpush1.msra.mxu0 %v3197
    %3488 = vmatprep.subr.mxu0 %v3200
    %3489 = vmatpush1.msra.mxu0 %v3199
    %3490 = vmatprep.subr.mxu0 %v3202
    %3491 = vmatpush1.msra.mxu0 %v3201
    %3492 = vmatprep.subr.mxu0 %v3204
    %3493 = vmatpush1.msra.mxu0 %v3203
    %3494 = vmatprep.subr.mxu0 %v3206
    %3495 = vmatpush1.msra.mxu0 %v3205
    %3496 = vmatprep.subr.mxu0 %v3208
    %3497 = vmatpush1.msra.mxu0 %v3207
    %3498 = vmatprep.subr.mxu0 %v3210
    %3499 = vmatpush1.msra.mxu0 %v3209
    %3500 = vmatprep.subr.mxu0 %v3212
    %3501 = vmatpush1.msra.mxu0 %v3211
    %3502 = vmatprep.subr.mxu0 %v3214
    %3503 = vmatpush1.msra.mxu0 %v3213
    %3504 = vmatprep.subr.mxu0 %v3216
    %3505 = vmatpush1.msra.mxu0 %v3215
    %3506 = vmatprep.mubr.f32.mxu0 %v2960
    %3507 = vmatmul.mubr.f32.gmra.mrb[0].mxu0 %v2959
    %v3508 = vpop.f32.mrb[0].mxu0
    %v3509 = vadd.f32 %v3438, %v3508
    %v3510 = vpop.f32.mrb[0].mxu0
    %v3511 = vadd.f32 %v3440, %v3510
    %3512 = vdwg.mxu0
    %v3513 = vtanh.pop %v3509
    %v3514 = vtanh.pop %v3511
    %3515 = vst [vmem:[%s9] sm:$0xff] %v3513
    %3516 = vst [vmem:[%s9 + $0x8] sm:$0xff] %v3514
    // Predicated region
    $region70: #{denoising_autoencoder.1} parent=1 // pred_check
      _
    $region71: #{denoising_autoencoder.1} parent=1 // pred_check_branch
      %3518 = sbr.rel (0) target = $region73
    $region72: #{denoising_autoencoder.1} parent=1 // pred_region
      _
    $region73: #{denoising_autoencoder.1} parent=1 // pred_fallthru
      _
    // Predicated region
    $region74: #{denoising_autoencoder.1} parent=1 // pred_check
      _
    $region75: #{denoising_autoencoder.1} parent=1 // pred_check_branch
      %3520 = sbr.rel (0) target = $region77
    $region76: #{denoising_autoencoder.1} parent=1 // pred_region
      _
    $region77: #{denoising_autoencoder.1} parent=1 // pred_fallthru
      _
    %3521 = vsyncpa [#allocation3], 1
    %3522 = vsyncpa [#allocation5], 1
    %3523 = vsyncpa [#allocation8], 1
    %3524 = vsyncpa [#allocation11], 1
    %3525 = vsyncpa [#allocation14], 1

</llo_original>
